<compile_context>
chip_gen: v7x
topology: tpu7x:2x2x1
jax: 0.10.0
libtpu: 0.0.40
codegen_flags: <defaults>
</compile_context>

<pallas_src>
import functools

import jax
import jax.numpy as jnp
from jax.experimental import pallas as pl
from jax.experimental.pallas import tpu as pltpu

EPS = 1e-6


# ---------------------------------------------------------------------------
# Kernel
# ---------------------------------------------------------------------------
def _layernorm_f32(x, a2, b2):
    """Exact torch LayerNorm semantics: mean, unbiased std (N-1),
    a2*(x-mean)/(std+eps)+b2 -- identical formula & op order to the reference."""
    d = x.shape[-1]
    mean = jnp.mean(x, axis=-1, keepdims=True)                       # (tm, 1)
    centered = x - mean
    var_unbiased = jnp.sum(centered * centered, axis=-1, keepdims=True) / (d - 1)
    std = jnp.sqrt(var_unbiased)
    return a2 * centered / (std + EPS) + b2                          # (tm, D)


def fused_encoder_kernel(x_ref, lna_ref, lnb_ref, w_ref, b_ref, o_ref):
    """All L encoder layers + final Encoder.norm on one (tm, d) row tile.

    x_ref:   (tm, d)      f32 activation tile
    lna_ref: (L+1, 1, d)  f32 LayerNorm gains  (entry L = Encoder.norm)
    lnb_ref: (L+1, 1, d)  f32 LayerNorm biases
    w_ref:   (L, d, d)    bf16 per-layer weights (resident in VMEM)
    b_ref:   (L, 1, d)    f32 per-layer linear biases
    """
    n_layers = w_ref.shape[0]
    x = x_ref[...]                                                   # (tm, D) f32
    # Static unroll over the 6 layers (equivalent to fori_loop(unroll=True)
    # for a tiny static trip count, with fully static Ref indexing).
    for l in range(n_layers):
        normed = _layernorm_f32(x, lna_ref[l], lnb_ref[l])
        y = jnp.dot(normed.astype(jnp.bfloat16), w_ref[l],
                    preferred_element_type=jnp.float32) + b_ref[l]   # (tm, D) f32
        x = x + y
    # Final Encoder.norm fused before the single store.
    o_ref[...] = _layernorm_f32(x, lna_ref[n_layers],
                                lnb_ref[n_layers]).astype(o_ref.dtype)


# ---------------------------------------------------------------------------
# Host-side param stacking (done once)
# ---------------------------------------------------------------------------
def stack_encoder_params(layer_params, norm_a2, norm_b2):
    d = norm_a2.shape[-1]
    lna = jnp.stack([p["a_2"] for p in layer_params] + [norm_a2]
                    ).reshape(-1, 1, d).astype(jnp.float32)          # (L+1, 1, d)
    lnb = jnp.stack([p["b_2"] for p in layer_params] + [norm_b2]
                    ).reshape(-1, 1, d).astype(jnp.float32)          # (L+1, 1, d)
    w = jnp.stack([p["w"] for p in layer_params]).astype(jnp.bfloat16)  # (L, d, d)
    b = jnp.stack([p["b"] for p in layer_params]
                  ).reshape(-1, 1, d).astype(jnp.float32)            # (L, 1, d)
    return lna, lnb, w, b


def _pick_tm(rows, tm):
    """Clamp the row tile so the 'parallel' grid axis has >= 2 steps
    (v7x has 2 TensorCores); keep it a multiple of 8 sublanes."""
    half = max(8, (((rows + 1) // 2 + 7) // 8) * 8)
    return max(8, min(tm, half))


# ---------------------------------------------------------------------------
# Wrapper
# ---------------------------------------------------------------------------
@functools.partial(jax.jit, static_argnames=("tm",))
def encoder_forward(x, lna, lnb, w, b, mask=None, *, tm=512):
    """x: (batch, seq, d_model) f32; stacked params from stack_encoder_params.
    `mask` is accepted for signature parity but unused (see TODO above)."""
    del mask
    batch, seq, d = x.shape
    assert d > 1, "unbiased std needs d_model > 1"
    assert d % 128 == 0, "d_model must be lane-dense (multiple of 128); pad if needed"
    n_layers = w.shape[0]

    rows = batch * seq
    tm_eff = _pick_tm(rows, tm)
    padded_rows = int(pl.cdiv(rows, tm_eff)) * tm_eff

    x2 = x.reshape(rows, d).astype(jnp.float32)
    if padded_rows != rows:
        # Padded rows are all-zero: centered == 0, so LN output stays finite;
        # they are sliced off at the end (rows are processed independently).
        x2 = jnp.pad(x2, ((0, padded_rows - rows), (0, 0)))

    # VMEM budget: double-buffered (tm, d) f32 in/out tiles + resident bf16
    # weight stack + LN/bias params, 2x headroom, capped at 48 MiB (leaves
    # headroom below v7x's 64-MiB physical VMEM).
    need = (4 * tm_eff * d * 4             # 2x double-buffered f32 row tiles
            + n_layers * d * d * 2         # bf16 weight stack
            + (3 * n_layers + 2) * d * 4)  # LN gains/biases + linear biases
    vmem_limit = int(min(48 * 1024 * 1024, max(2 * need, 16 * 1024 * 1024)))

    row_spec = pl.BlockSpec((tm_eff, d), lambda i: (i, 0))           # x / out tile
    lnp_spec = pl.BlockSpec((n_layers + 1, 1, d), lambda i: (0, 0, 0))  # resident
    w_spec = pl.BlockSpec((n_layers, d, d), lambda i: (0, 0, 0))        # resident
    b_spec = pl.BlockSpec((n_layers, 1, d), lambda i: (0, 0, 0))        # resident

    out = pl.pallas_call(
        fused_encoder_kernel,
        out_shape=jax.ShapeDtypeStruct((padded_rows, d), jnp.float32),
        grid_spec=pltpu.PrefetchScalarGridSpec(
            num_scalar_prefetch=0,
            grid=(padded_rows // tm_eff,),
            in_specs=[row_spec, lnp_spec, lnp_spec, w_spec, b_spec],
            out_specs=row_spec),
        compiler_params=pltpu.CompilerParams(
            dimension_semantics=("parallel",),     # megacore / v7x 2-TC shard
            vmem_limit_bytes=vmem_limit),
    )(x2, lna, lnb, w, b)

    return out[:rows].reshape(batch, seq, d).astype(x.dtype)


# ---------------------------------------------------------------------------
# Pure-JAX reference (identical numeric recipe: f32 LN with exact division,
# bf16 matmul operands, f32 accumulate)
# ---------------------------------------------------------------------------
def reference(x, layer_params, norm_a2, norm_b2):
    def ln(v, a2, b2):
        d = v.shape[-1]
        mean = jnp.mean(v, axis=-1, keepdims=True)
        centered = v - mean
        var = jnp.sum(centered * centered, axis=-1, keepdims=True) / (d - 1)
        std = jnp.sqrt(var)
        return a2 * centered / (std + EPS) + b2

    x = x.astype(jnp.float32)
    for p in layer_params:
        normed = ln(x, p["a_2"], p["b_2"])
        y = jnp.dot(normed.astype(jnp.bfloat16), p["w"].astype(jnp.bfloat16),
                    preferred_element_type=jnp.float32) + p["b"]
        x = x + y
    return ln(x, norm_a2, norm_b2)


if __name__ == "__main__":
    batch, seq, d_model, n_layers = 2, 128, 128, 6

    key = jax.random.PRNGKey(0)
    kx, key = jax.random.split(key)
    x = jax.random.normal(kx, (batch, seq, d_model), dtype=jnp.float32)

    # Per-layer params: LayerNorm init exactly as the module (ones / zeros),
    # deterministic small Linear weights for the stand-in sublayer.
    layer_params = []
    for _ in range(n_layers):
        kw, kb, key = jax.random.split(key, 3)
        layer_params.append(dict(
            a_2=jnp.ones((d_model,), jnp.float32),
            b_2=jnp.zeros((d_model,), jnp.float32),
            w=jax.random.normal(kw, (d_model, d_model), jnp.float32) * 0.05,
            b=jax.random.normal(kb, (d_model,), jnp.float32) * 0.05,
        ))
    norm_a2 = jnp.ones((d_model,), jnp.float32)
    norm_b2 = jnp.zeros((d_model,), jnp.float32)

    mask = jnp.ones((batch, 1, seq), jnp.float32)  # unused by stand-in layers

    # Stack / cast params once (outside the jitted call path).
    lna, lnb, w_stack, b_stack = stack_encoder_params(layer_params, norm_a2, norm_b2)

    out = encoder_forward(x, lna, lnb, w_stack, b_stack, mask)
    out = jax.block_until_ready(out)

    ref = reference(x, layer_params, norm_a2, norm_b2)
    assert out.shape == x.shape and out.dtype == x.dtype
    max_err = float(jnp.max(jnp.abs(out - ref)))
    assert max_err < 5e-3, f"mismatch vs reference: {max_err}"

    print("KERNEL_OK")
</pallas_src>

<mosaic_0001>
module attributes {stable_mosaic.version = 11 : i64} {
  func.func @fused_encoder_kernel(%arg0: i32, %arg1: memref<128x128xf32, #tpu.memory_space<vmem>>, %arg2: memref<7x1x128xf32, #tpu.memory_space<vmem>>, %arg3: memref<7x1x128xf32, #tpu.memory_space<vmem>>, %arg4: memref<6x128x128xbf16, #tpu.memory_space<vmem>>, %arg5: memref<6x1x128xf32, #tpu.memory_space<vmem>>, %arg6: memref<128x128xf32, #tpu.memory_space<vmem>>) attributes {dimension_semantics = [#tpu.dimension_semantics<parallel>], iteration_bounds = array<i64: 2>, scalar_prefetch = 0 : i64, scratch_operands = 0 : i64, tpu.core_type = #tpu.core_type<tc>, window_params = [{transform_indices = @transform_0, window_bounds = array<i64: 128, 128>}, {pipeline_mode = #tpu.pipeline_mode<synchronous>, transform_indices = @transform_1, window_bounds = array<i64: 7, 1, 128>}, {pipeline_mode = #tpu.pipeline_mode<synchronous>, transform_indices = @transform_2, window_bounds = array<i64: 7, 1, 128>}, {pipeline_mode = #tpu.pipeline_mode<synchronous>, transform_indices = @transform_3, window_bounds = array<i64: 6, 128, 128>}, {pipeline_mode = #tpu.pipeline_mode<synchronous>, transform_indices = @transform_4, window_bounds = array<i64: 6, 1, 128>}, {transform_indices = @transform_5, window_bounds = array<i64: 128, 128>}]} {
    %c0 = arith.constant 0 : index
    %c0_0 = arith.constant 0 : index
    %0 = vector.load %arg1[%c0, %c0_0] : memref<128x128xf32, #tpu.memory_space<vmem>>, vector<128x128xf32>
    %c0_1 = arith.constant 0 : index
    %c0_2 = arith.constant 0 : index
    %c0_3 = arith.constant 0 : index
    %1 = vector.load %arg2[%c0_1, %c0_2, %c0_3] : memref<7x1x128xf32, #tpu.memory_space<vmem>>, vector<1x1x128xf32>
    %2 = vector.shape_cast %1 : vector<1x1x128xf32> to vector<1x128xf32>
    %c0_4 = arith.constant 0 : index
    %c0_5 = arith.constant 0 : index
    %c0_6 = arith.constant 0 : index
    %3 = vector.load %arg3[%c0_4, %c0_5, %c0_6] : memref<7x1x128xf32, #tpu.memory_space<vmem>>, vector<1x1x128xf32>
    %4 = vector.shape_cast %3 : vector<1x1x128xf32> to vector<1x128xf32>
    %cst = arith.constant dense<0.000000e+00> : vector<128xf32>
    %5 = vector.multi_reduction <add>, %0, %cst [1] : vector<128x128xf32> to vector<128xf32>
    %6 = vector.shape_cast %5 : vector<128xf32> to vector<128x1xf32>
    %cst_7 = arith.constant 1.280000e+02 : f32
    %7 = vector.broadcast %cst_7 : f32 to vector<128x1xf32>
    %8 = arith.divf %6, %7 : vector<128x1xf32>
    %9 = vector.broadcast %8 : vector<128x1xf32> to vector<128x128xf32>
    %10 = arith.subf %0, %9 : vector<128x128xf32>
    %11 = arith.mulf %10, %10 : vector<128x128xf32>
    %cst_8 = arith.constant dense<0.000000e+00> : vector<128xf32>
    %12 = vector.multi_reduction <add>, %11, %cst_8 [1] : vector<128x128xf32> to vector<128xf32>
    %13 = vector.shape_cast %12 : vector<128xf32> to vector<128x1xf32>
    %cst_9 = arith.constant 1.270000e+02 : f32
    %14 = vector.broadcast %cst_9 : f32 to vector<128x1xf32>
    %15 = arith.divf %13, %14 : vector<128x1xf32>
    %16 = math.sqrt %15 : vector<128x1xf32>
    %17 = vector.broadcast %2 : vector<1x128xf32> to vector<128x128xf32>
    %18 = arith.mulf %17, %10 : vector<128x128xf32>
    %cst_10 = arith.constant 9.99999997E-7 : f32
    %19 = vector.broadcast %cst_10 : f32 to vector<128x1xf32>
    %20 = arith.addf %16, %19 : vector<128x1xf32>
    %21 = vector.broadcast %20 : vector<128x1xf32> to vector<128x128xf32>
    %22 = arith.divf %18, %21 : vector<128x128xf32>
    %23 = vector.broadcast %4 : vector<1x128xf32> to vector<128x128xf32>
    %24 = arith.addf %22, %23 : vector<128x128xf32>
    %25 = arith.truncf %24 : vector<128x128xf32> to vector<128x128xbf16>
    %c0_11 = arith.constant 0 : index
    %c0_12 = arith.constant 0 : index
    %c0_13 = arith.constant 0 : index
    %26 = vector.load %arg4[%c0_11, %c0_12, %c0_13] : memref<6x128x128xbf16, #tpu.memory_space<vmem>>, vector<1x128x128xbf16>
    %27 = vector.shape_cast %26 : vector<1x128x128xbf16> to vector<128x128xbf16>
    %cst_14 = arith.constant dense<0.000000e+00> : vector<128x128xf32>
    %28 = tpu.matmul %25, %27, %cst_14 {dimension_numbers = #tpu.dot_dimension_numbers<[1], [0], [0], [1], [0, 0, 1, 1], [], []>} : vector<128x128xbf16>, vector<128x128xbf16>, vector<128x128xf32> -> vector<128x128xf32>
    %c0_15 = arith.constant 0 : index
    %c0_16 = arith.constant 0 : index
    %c0_17 = arith.constant 0 : index
    %29 = vector.load %arg5[%c0_15, %c0_16, %c0_17] : memref<6x1x128xf32, #tpu.memory_space<vmem>>, vector<1x1x128xf32>
    %30 = vector.shape_cast %29 : vector<1x1x128xf32> to vector<1x128xf32>
    %31 = vector.broadcast %30 : vector<1x128xf32> to vector<128x128xf32>
    %32 = arith.addf %28, %31 : vector<128x128xf32>
    %33 = arith.addf %0, %32 : vector<128x128xf32>
    %c1 = arith.constant 1 : index
    %c0_18 = arith.constant 0 : index
    %c0_19 = arith.constant 0 : index
    %34 = vector.load %arg2[%c1, %c0_18, %c0_19] : memref<7x1x128xf32, #tpu.memory_space<vmem>>, vector<1x1x128xf32>
    %35 = vector.shape_cast %34 : vector<1x1x128xf32> to vector<1x128xf32>
    %c1_20 = arith.constant 1 : index
    %c0_21 = arith.constant 0 : index
    %c0_22 = arith.constant 0 : index
    %36 = vector.load %arg3[%c1_20, %c0_21, %c0_22] : memref<7x1x128xf32, #tpu.memory_space<vmem>>, vector<1x1x128xf32>
    %37 = vector.shape_cast %36 : vector<1x1x128xf32> to vector<1x128xf32>
    %cst_23 = arith.constant dense<0.000000e+00> : vector<128xf32>
    %38 = vector.multi_reduction <add>, %33, %cst_23 [1] : vector<128x128xf32> to vector<128xf32>
    %39 = vector.shape_cast %38 : vector<128xf32> to vector<128x1xf32>
    %cst_24 = arith.constant 1.280000e+02 : f32
    %40 = vector.broadcast %cst_24 : f32 to vector<128x1xf32>
    %41 = arith.divf %39, %40 : vector<128x1xf32>
    %42 = vector.broadcast %41 : vector<128x1xf32> to vector<128x128xf32>
    %43 = arith.subf %33, %42 : vector<128x128xf32>
    %44 = arith.mulf %43, %43 : vector<128x128xf32>
    %cst_25 = arith.constant dense<0.000000e+00> : vector<128xf32>
    %45 = vector.multi_reduction <add>, %44, %cst_25 [1] : vector<128x128xf32> to vector<128xf32>
    %46 = vector.shape_cast %45 : vector<128xf32> to vector<128x1xf32>
    %cst_26 = arith.constant 1.270000e+02 : f32
    %47 = vector.broadcast %cst_26 : f32 to vector<128x1xf32>
    %48 = arith.divf %46, %47 : vector<128x1xf32>
    %49 = math.sqrt %48 : vector<128x1xf32>
    %50 = vector.broadcast %35 : vector<1x128xf32> to vector<128x128xf32>
    %51 = arith.mulf %50, %43 : vector<128x128xf32>
    %cst_27 = arith.constant 9.99999997E-7 : f32
    %52 = vector.broadcast %cst_27 : f32 to vector<128x1xf32>
    %53 = arith.addf %49, %52 : vector<128x1xf32>
    %54 = vector.broadcast %53 : vector<128x1xf32> to vector<128x128xf32>
    %55 = arith.divf %51, %54 : vector<128x128xf32>
    %56 = vector.broadcast %37 : vector<1x128xf32> to vector<128x128xf32>
    %57 = arith.addf %55, %56 : vector<128x128xf32>
    %58 = arith.truncf %57 : vector<128x128xf32> to vector<128x128xbf16>
    %c1_28 = arith.constant 1 : index
    %c0_29 = arith.constant 0 : index
    %c0_30 = arith.constant 0 : index
    %59 = vector.load %arg4[%c1_28, %c0_29, %c0_30] : memref<6x128x128xbf16, #tpu.memory_space<vmem>>, vector<1x128x128xbf16>
    %60 = vector.shape_cast %59 : vector<1x128x128xbf16> to vector<128x128xbf16>
    %cst_31 = arith.constant dense<0.000000e+00> : vector<128x128xf32>
    %61 = tpu.matmul %58, %60, %cst_31 {dimension_numbers = #tpu.dot_dimension_numbers<[1], [0], [0], [1], [0, 0, 1, 1], [], []>} : vector<128x128xbf16>, vector<128x128xbf16>, vector<128x128xf32> -> vector<128x128xf32>
    %c1_32 = arith.constant 1 : index
    %c0_33 = arith.constant 0 : index
    %c0_34 = arith.constant 0 : index
    %62 = vector.load %arg5[%c1_32, %c0_33, %c0_34] : memref<6x1x128xf32, #tpu.memory_space<vmem>>, vector<1x1x128xf32>
    %63 = vector.shape_cast %62 : vector<1x1x128xf32> to vector<1x128xf32>
    %64 = vector.broadcast %63 : vector<1x128xf32> to vector<128x128xf32>
    %65 = arith.addf %61, %64 : vector<128x128xf32>
    %66 = arith.addf %33, %65 : vector<128x128xf32>
    %c2 = arith.constant 2 : index
    %c0_35 = arith.constant 0 : index
    %c0_36 = arith.constant 0 : index
    %67 = vector.load %arg2[%c2, %c0_35, %c0_36] : memref<7x1x128xf32, #tpu.memory_space<vmem>>, vector<1x1x128xf32>
    %68 = vector.shape_cast %67 : vector<1x1x128xf32> to vector<1x128xf32>
    %c2_37 = arith.constant 2 : index
    %c0_38 = arith.constant 0 : index
    %c0_39 = arith.constant 0 : index
    %69 = vector.load %arg3[%c2_37, %c0_38, %c0_39] : memref<7x1x128xf32, #tpu.memory_space<vmem>>, vector<1x1x128xf32>
    %70 = vector.shape_cast %69 : vector<1x1x128xf32> to vector<1x128xf32>
    %cst_40 = arith.constant dense<0.000000e+00> : vector<128xf32>
    %71 = vector.multi_reduction <add>, %66, %cst_40 [1] : vector<128x128xf32> to vector<128xf32>
    %72 = vector.shape_cast %71 : vector<128xf32> to vector<128x1xf32>
    %cst_41 = arith.constant 1.280000e+02 : f32
    %73 = vector.broadcast %cst_41 : f32 to vector<128x1xf32>
    %74 = arith.divf %72, %73 : vector<128x1xf32>
    %75 = vector.broadcast %74 : vector<128x1xf32> to vector<128x128xf32>
    %76 = arith.subf %66, %75 : vector<128x128xf32>
    %77 = arith.mulf %76, %76 : vector<128x128xf32>
    %cst_42 = arith.constant dense<0.000000e+00> : vector<128xf32>
    %78 = vector.multi_reduction <add>, %77, %cst_42 [1] : vector<128x128xf32> to vector<128xf32>
    %79 = vector.shape_cast %78 : vector<128xf32> to vector<128x1xf32>
    %cst_43 = arith.constant 1.270000e+02 : f32
    %80 = vector.broadcast %cst_43 : f32 to vector<128x1xf32>
    %81 = arith.divf %79, %80 : vector<128x1xf32>
    %82 = math.sqrt %81 : vector<128x1xf32>
    %83 = vector.broadcast %68 : vector<1x128xf32> to vector<128x128xf32>
    %84 = arith.mulf %83, %76 : vector<128x128xf32>
    %cst_44 = arith.constant 9.99999997E-7 : f32
    %85 = vector.broadcast %cst_44 : f32 to vector<128x1xf32>
    %86 = arith.addf %82, %85 : vector<128x1xf32>
    %87 = vector.broadcast %86 : vector<128x1xf32> to vector<128x128xf32>
    %88 = arith.divf %84, %87 : vector<128x128xf32>
    %89 = vector.broadcast %70 : vector<1x128xf32> to vector<128x128xf32>
    %90 = arith.addf %88, %89 : vector<128x128xf32>
    %91 = arith.truncf %90 : vector<128x128xf32> to vector<128x128xbf16>
    %c2_45 = arith.constant 2 : index
    %c0_46 = arith.constant 0 : index
    %c0_47 = arith.constant 0 : index
    %92 = vector.load %arg4[%c2_45, %c0_46, %c0_47] : memref<6x128x128xbf16, #tpu.memory_space<vmem>>, vector<1x128x128xbf16>
    %93 = vector.shape_cast %92 : vector<1x128x128xbf16> to vector<128x128xbf16>
    %cst_48 = arith.constant dense<0.000000e+00> : vector<128x128xf32>
    %94 = tpu.matmul %91, %93, %cst_48 {dimension_numbers = #tpu.dot_dimension_numbers<[1], [0], [0], [1], [0, 0, 1, 1], [], []>} : vector<128x128xbf16>, vector<128x128xbf16>, vector<128x128xf32> -> vector<128x128xf32>
    %c2_49 = arith.constant 2 : index
    %c0_50 = arith.constant 0 : index
    %c0_51 = arith.constant 0 : index
    %95 = vector.load %arg5[%c2_49, %c0_50, %c0_51] : memref<6x1x128xf32, #tpu.memory_space<vmem>>, vector<1x1x128xf32>
    %96 = vector.shape_cast %95 : vector<1x1x128xf32> to vector<1x128xf32>
    %97 = vector.broadcast %96 : vector<1x128xf32> to vector<128x128xf32>
    %98 = arith.addf %94, %97 : vector<128x128xf32>
    %99 = arith.addf %66, %98 : vector<128x128xf32>
    %c3 = arith.constant 3 : index
    %c0_52 = arith.constant 0 : index
    %c0_53 = arith.constant 0 : index
    %100 = vector.load %arg2[%c3, %c0_52, %c0_53] : memref<7x1x128xf32, #tpu.memory_space<vmem>>, vector<1x1x128xf32>
    %101 = vector.shape_cast %100 : vector<1x1x128xf32> to vector<1x128xf32>
    %c3_54 = arith.constant 3 : index
    %c0_55 = arith.constant 0 : index
    %c0_56 = arith.constant 0 : index
    %102 = vector.load %arg3[%c3_54, %c0_55, %c0_56] : memref<7x1x128xf32, #tpu.memory_space<vmem>>, vector<1x1x128xf32>
    %103 = vector.shape_cast %102 : vector<1x1x128xf32> to vector<1x128xf32>
    %cst_57 = arith.constant dense<0.000000e+00> : vector<128xf32>
    %104 = vector.multi_reduction <add>, %99, %cst_57 [1] : vector<128x128xf32> to vector<128xf32>
    %105 = vector.shape_cast %104 : vector<128xf32> to vector<128x1xf32>
    %cst_58 = arith.constant 1.280000e+02 : f32
    %106 = vector.broadcast %cst_58 : f32 to vector<128x1xf32>
    %107 = arith.divf %105, %106 : vector<128x1xf32>
    %108 = vector.broadcast %107 : vector<128x1xf32> to vector<128x128xf32>
    %109 = arith.subf %99, %108 : vector<128x128xf32>
    %110 = arith.mulf %109, %109 : vector<128x128xf32>
    %cst_59 = arith.constant dense<0.000000e+00> : vector<128xf32>
    %111 = vector.multi_reduction <add>, %110, %cst_59 [1] : vector<128x128xf32> to vector<128xf32>
    %112 = vector.shape_cast %111 : vector<128xf32> to vector<128x1xf32>
    %cst_60 = arith.constant 1.270000e+02 : f32
    %113 = vector.broadcast %cst_60 : f32 to vector<128x1xf32>
    %114 = arith.divf %112, %113 : vector<128x1xf32>
    %115 = math.sqrt %114 : vector<128x1xf32>
    %116 = vector.broadcast %101 : vector<1x128xf32> to vector<128x128xf32>
    %117 = arith.mulf %116, %109 : vector<128x128xf32>
    %cst_61 = arith.constant 9.99999997E-7 : f32
    %118 = vector.broadcast %cst_61 : f32 to vector<128x1xf32>
    %119 = arith.addf %115, %118 : vector<128x1xf32>
    %120 = vector.broadcast %119 : vector<128x1xf32> to vector<128x128xf32>
    %121 = arith.divf %117, %120 : vector<128x128xf32>
    %122 = vector.broadcast %103 : vector<1x128xf32> to vector<128x128xf32>
    %123 = arith.addf %121, %122 : vector<128x128xf32>
    %124 = arith.truncf %123 : vector<128x128xf32> to vector<128x128xbf16>
    %c3_62 = arith.constant 3 : index
    %c0_63 = arith.constant 0 : index
    %c0_64 = arith.constant 0 : index
    %125 = vector.load %arg4[%c3_62, %c0_63, %c0_64] : memref<6x128x128xbf16, #tpu.memory_space<vmem>>, vector<1x128x128xbf16>
    %126 = vector.shape_cast %125 : vector<1x128x128xbf16> to vector<128x128xbf16>
    %cst_65 = arith.constant dense<0.000000e+00> : vector<128x128xf32>
    %127 = tpu.matmul %124, %126, %cst_65 {dimension_numbers = #tpu.dot_dimension_numbers<[1], [0], [0], [1], [0, 0, 1, 1], [], []>} : vector<128x128xbf16>, vector<128x128xbf16>, vector<128x128xf32> -> vector<128x128xf32>
    %c3_66 = arith.constant 3 : index
    %c0_67 = arith.constant 0 : index
    %c0_68 = arith.constant 0 : index
    %128 = vector.load %arg5[%c3_66, %c0_67, %c0_68] : memref<6x1x128xf32, #tpu.memory_space<vmem>>, vector<1x1x128xf32>
    %129 = vector.shape_cast %128 : vector<1x1x128xf32> to vector<1x128xf32>
    %130 = vector.broadcast %129 : vector<1x128xf32> to vector<128x128xf32>
    %131 = arith.addf %127, %130 : vector<128x128xf32>
    %132 = arith.addf %99, %131 : vector<128x128xf32>
    %c4 = arith.constant 4 : index
    %c0_69 = arith.constant 0 : index
    %c0_70 = arith.constant 0 : index
    %133 = vector.load %arg2[%c4, %c0_69, %c0_70] : memref<7x1x128xf32, #tpu.memory_space<vmem>>, vector<1x1x128xf32>
    %134 = vector.shape_cast %133 : vector<1x1x128xf32> to vector<1x128xf32>
    %c4_71 = arith.constant 4 : index
    %c0_72 = arith.constant 0 : index
    %c0_73 = arith.constant 0 : index
    %135 = vector.load %arg3[%c4_71, %c0_72, %c0_73] : memref<7x1x128xf32, #tpu.memory_space<vmem>>, vector<1x1x128xf32>
    %136 = vector.shape_cast %135 : vector<1x1x128xf32> to vector<1x128xf32>
    %cst_74 = arith.constant dense<0.000000e+00> : vector<128xf32>
    %137 = vector.multi_reduction <add>, %132, %cst_74 [1] : vector<128x128xf32> to vector<128xf32>
    %138 = vector.shape_cast %137 : vector<128xf32> to vector<128x1xf32>
    %cst_75 = arith.constant 1.280000e+02 : f32
    %139 = vector.broadcast %cst_75 : f32 to vector<128x1xf32>
    %140 = arith.divf %138, %139 : vector<128x1xf32>
    %141 = vector.broadcast %140 : vector<128x1xf32> to vector<128x128xf32>
    %142 = arith.subf %132, %141 : vector<128x128xf32>
    %143 = arith.mulf %142, %142 : vector<128x128xf32>
    %cst_76 = arith.constant dense<0.000000e+00> : vector<128xf32>
    %144 = vector.multi_reduction <add>, %143, %cst_76 [1] : vector<128x128xf32> to vector<128xf32>
    %145 = vector.shape_cast %144 : vector<128xf32> to vector<128x1xf32>
    %cst_77 = arith.constant 1.270000e+02 : f32
    %146 = vector.broadcast %cst_77 : f32 to vector<128x1xf32>
    %147 = arith.divf %145, %146 : vector<128x1xf32>
    %148 = math.sqrt %147 : vector<128x1xf32>
    %149 = vector.broadcast %134 : vector<1x128xf32> to vector<128x128xf32>
    %150 = arith.mulf %149, %142 : vector<128x128xf32>
    %cst_78 = arith.constant 9.99999997E-7 : f32
    %151 = vector.broadcast %cst_78 : f32 to vector<128x1xf32>
    %152 = arith.addf %148, %151 : vector<128x1xf32>
    %153 = vector.broadcast %152 : vector<128x1xf32> to vector<128x128xf32>
    %154 = arith.divf %150, %153 : vector<128x128xf32>
    %155 = vector.broadcast %136 : vector<1x128xf32> to vector<128x128xf32>
    %156 = arith.addf %154, %155 : vector<128x128xf32>
    %157 = arith.truncf %156 : vector<128x128xf32> to vector<128x128xbf16>
    %c4_79 = arith.constant 4 : index
    %c0_80 = arith.constant 0 : index
    %c0_81 = arith.constant 0 : index
    %158 = vector.load %arg4[%c4_79, %c0_80, %c0_81] : memref<6x128x128xbf16, #tpu.memory_space<vmem>>, vector<1x128x128xbf16>
    %159 = vector.shape_cast %158 : vector<1x128x128xbf16> to vector<128x128xbf16>
    %cst_82 = arith.constant dense<0.000000e+00> : vector<128x128xf32>
    %160 = tpu.matmul %157, %159, %cst_82 {dimension_numbers = #tpu.dot_dimension_numbers<[1], [0], [0], [1], [0, 0, 1, 1], [], []>} : vector<128x128xbf16>, vector<128x128xbf16>, vector<128x128xf32> -> vector<128x128xf32>
    %c4_83 = arith.constant 4 : index
    %c0_84 = arith.constant 0 : index
    %c0_85 = arith.constant 0 : index
    %161 = vector.load %arg5[%c4_83, %c0_84, %c0_85] : memref<6x1x128xf32, #tpu.memory_space<vmem>>, vector<1x1x128xf32>
    %162 = vector.shape_cast %161 : vector<1x1x128xf32> to vector<1x128xf32>
    %163 = vector.broadcast %162 : vector<1x128xf32> to vector<128x128xf32>
    %164 = arith.addf %160, %163 : vector<128x128xf32>
    %165 = arith.addf %132, %164 : vector<128x128xf32>
    %c5 = arith.constant 5 : index
    %c0_86 = arith.constant 0 : index
    %c0_87 = arith.constant 0 : index
    %166 = vector.load %arg2[%c5, %c0_86, %c0_87] : memref<7x1x128xf32, #tpu.memory_space<vmem>>, vector<1x1x128xf32>
    %167 = vector.shape_cast %166 : vector<1x1x128xf32> to vector<1x128xf32>
    %c5_88 = arith.constant 5 : index
    %c0_89 = arith.constant 0 : index
    %c0_90 = arith.constant 0 : index
    %168 = vector.load %arg3[%c5_88, %c0_89, %c0_90] : memref<7x1x128xf32, #tpu.memory_space<vmem>>, vector<1x1x128xf32>
    %169 = vector.shape_cast %168 : vector<1x1x128xf32> to vector<1x128xf32>
    %cst_91 = arith.constant dense<0.000000e+00> : vector<128xf32>
    %170 = vector.multi_reduction <add>, %165, %cst_91 [1] : vector<128x128xf32> to vector<128xf32>
    %171 = vector.shape_cast %170 : vector<128xf32> to vector<128x1xf32>
    %cst_92 = arith.constant 1.280000e+02 : f32
    %172 = vector.broadcast %cst_92 : f32 to vector<128x1xf32>
    %173 = arith.divf %171, %172 : vector<128x1xf32>
    %174 = vector.broadcast %173 : vector<128x1xf32> to vector<128x128xf32>
    %175 = arith.subf %165, %174 : vector<128x128xf32>
    %176 = arith.mulf %175, %175 : vector<128x128xf32>
    %cst_93 = arith.constant dense<0.000000e+00> : vector<128xf32>
    %177 = vector.multi_reduction <add>, %176, %cst_93 [1] : vector<128x128xf32> to vector<128xf32>
    %178 = vector.shape_cast %177 : vector<128xf32> to vector<128x1xf32>
    %cst_94 = arith.constant 1.270000e+02 : f32
    %179 = vector.broadcast %cst_94 : f32 to vector<128x1xf32>
    %180 = arith.divf %178, %179 : vector<128x1xf32>
    %181 = math.sqrt %180 : vector<128x1xf32>
    %182 = vector.broadcast %167 : vector<1x128xf32> to vector<128x128xf32>
    %183 = arith.mulf %182, %175 : vector<128x128xf32>
    %cst_95 = arith.constant 9.99999997E-7 : f32
    %184 = vector.broadcast %cst_95 : f32 to vector<128x1xf32>
    %185 = arith.addf %181, %184 : vector<128x1xf32>
    %186 = vector.broadcast %185 : vector<128x1xf32> to vector<128x128xf32>
    %187 = arith.divf %183, %186 : vector<128x128xf32>
    %188 = vector.broadcast %169 : vector<1x128xf32> to vector<128x128xf32>
    %189 = arith.addf %187, %188 : vector<128x128xf32>
    %190 = arith.truncf %189 : vector<128x128xf32> to vector<128x128xbf16>
    %c5_96 = arith.constant 5 : index
    %c0_97 = arith.constant 0 : index
    %c0_98 = arith.constant 0 : index
    %191 = vector.load %arg4[%c5_96, %c0_97, %c0_98] : memref<6x128x128xbf16, #tpu.memory_space<vmem>>, vector<1x128x128xbf16>
    %192 = vector.shape_cast %191 : vector<1x128x128xbf16> to vector<128x128xbf16>
    %cst_99 = arith.constant dense<0.000000e+00> : vector<128x128xf32>
    %193 = tpu.matmul %190, %192, %cst_99 {dimension_numbers = #tpu.dot_dimension_numbers<[1], [0], [0], [1], [0, 0, 1, 1], [], []>} : vector<128x128xbf16>, vector<128x128xbf16>, vector<128x128xf32> -> vector<128x128xf32>
    %c5_100 = arith.constant 5 : index
    %c0_101 = arith.constant 0 : index
    %c0_102 = arith.constant 0 : index
    %194 = vector.load %arg5[%c5_100, %c0_101, %c0_102] : memref<6x1x128xf32, #tpu.memory_space<vmem>>, vector<1x1x128xf32>
    %195 = vector.shape_cast %194 : vector<1x1x128xf32> to vector<1x128xf32>
    %196 = vector.broadcast %195 : vector<1x128xf32> to vector<128x128xf32>
    %197 = arith.addf %193, %196 : vector<128x128xf32>
    %198 = arith.addf %165, %197 : vector<128x128xf32>
    %c6 = arith.constant 6 : index
    %c0_103 = arith.constant 0 : index
    %c0_104 = arith.constant 0 : index
    %199 = vector.load %arg2[%c6, %c0_103, %c0_104] : memref<7x1x128xf32, #tpu.memory_space<vmem>>, vector<1x1x128xf32>
    %200 = vector.shape_cast %199 : vector<1x1x128xf32> to vector<1x128xf32>
    %c6_105 = arith.constant 6 : index
    %c0_106 = arith.constant 0 : index
    %c0_107 = arith.constant 0 : index
    %201 = vector.load %arg3[%c6_105, %c0_106, %c0_107] : memref<7x1x128xf32, #tpu.memory_space<vmem>>, vector<1x1x128xf32>
    %202 = vector.shape_cast %201 : vector<1x1x128xf32> to vector<1x128xf32>
    %cst_108 = arith.constant dense<0.000000e+00> : vector<128xf32>
    %203 = vector.multi_reduction <add>, %198, %cst_108 [1] : vector<128x128xf32> to vector<128xf32>
    %204 = vector.shape_cast %203 : vector<128xf32> to vector<128x1xf32>
    %cst_109 = arith.constant 1.280000e+02 : f32
    %205 = vector.broadcast %cst_109 : f32 to vector<128x1xf32>
    %206 = arith.divf %204, %205 : vector<128x1xf32>
    %207 = vector.broadcast %206 : vector<128x1xf32> to vector<128x128xf32>
    %208 = arith.subf %198, %207 : vector<128x128xf32>
    %209 = arith.mulf %208, %208 : vector<128x128xf32>
    %cst_110 = arith.constant dense<0.000000e+00> : vector<128xf32>
    %210 = vector.multi_reduction <add>, %209, %cst_110 [1] : vector<128x128xf32> to vector<128xf32>
    %211 = vector.shape_cast %210 : vector<128xf32> to vector<128x1xf32>
    %cst_111 = arith.constant 1.270000e+02 : f32
    %212 = vector.broadcast %cst_111 : f32 to vector<128x1xf32>
    %213 = arith.divf %211, %212 : vector<128x1xf32>
    %214 = math.sqrt %213 : vector<128x1xf32>
    %215 = vector.broadcast %200 : vector<1x128xf32> to vector<128x128xf32>
    %216 = arith.mulf %215, %208 : vector<128x128xf32>
    %cst_112 = arith.constant 9.99999997E-7 : f32
    %217 = vector.broadcast %cst_112 : f32 to vector<128x1xf32>
    %218 = arith.addf %214, %217 : vector<128x1xf32>
    %219 = vector.broadcast %218 : vector<128x1xf32> to vector<128x128xf32>
    %220 = arith.divf %216, %219 : vector<128x128xf32>
    %221 = vector.broadcast %202 : vector<1x128xf32> to vector<128x128xf32>
    %222 = arith.addf %220, %221 : vector<128x128xf32>
    %c0_113 = arith.constant 0 : index
    %c0_114 = arith.constant 0 : index
    %223 = vector.load %arg6[%c0_113, %c0_114] : memref<128x128xf32, #tpu.memory_space<vmem>>, vector<128x128xf32>
    tpu.vector_store %arg6[%c0_113, %c0_114], %222 {strides = array<i32>} : memref<128x128xf32, #tpu.memory_space<vmem>>, vector<128x128xf32>,
    return
  }
  func.func @transform_0(%arg0: i32) -> (i32, i32) {
    %c0_i32 = arith.constant 0 : i32
    %c0_i32_0 = arith.constant 0 : i32
    return %arg0, %c0_i32 : i32, i32
  }
  func.func @transform_1(%arg0: i32) -> (i32, i32, i32) {
    %c0_i32 = arith.constant 0 : i32
    %c0_i32_0 = arith.constant 0 : i32
    %c0_i32_1 = arith.constant 0 : i32
    %c0_i32_2 = arith.constant 0 : i32
    return %c0_i32, %c0_i32_0, %c0_i32_1 : i32, i32, i32
  }
  func.func @transform_2(%arg0: i32) -> (i32, i32, i32) {
    %c0_i32 = arith.constant 0 : i32
    %c0_i32_0 = arith.constant 0 : i32
    %c0_i32_1 = arith.constant 0 : i32
    %c0_i32_2 = arith.constant 0 : i32
    return %c0_i32, %c0_i32_0, %c0_i32_1 : i32, i32, i32
  }
  func.func @transform_3(%arg0: i32) -> (i32, i32, i32) {
    %c0_i32 = arith.constant 0 : i32
    %c0_i32_0 = arith.constant 0 : i32
    %c0_i32_1 = arith.constant 0 : i32
    %c0_i32_2 = arith.constant 0 : i32
    return %c0_i32, %c0_i32_0, %c0_i32_1 : i32, i32, i32
  }
  func.func @transform_4(%arg0: i32) -> (i32, i32, i32) {
    %c0_i32 = arith.constant 0 : i32
    %c0_i32_0 = arith.constant 0 : i32
    %c0_i32_1 = arith.constant 0 : i32
    %c0_i32_2 = arith.constant 0 : i32
    return %c0_i32, %c0_i32_0, %c0_i32_1 : i32, i32, i32
  }
  func.func @transform_5(%arg0: i32) -> (i32, i32) {
    %c0_i32 = arith.constant 0 : i32
    %c0_i32_0 = arith.constant 0 : i32
    return %arg0, %c0_i32 : i32, i32
  }
}

</mosaic_0001>

<llo_original>
// kernel: encoder_forward.1
$region0: #{encoder_forward.1}
  #allocation0 [shape = 'u32[]', space=smem, size = 0x4, offset = 0x4, fixed_abs, tag = 'smem constant byte address 0x4 - core index']
  #allocation1 [shape = 'u32[144,128]{1,0:T(1,128)}', space=vmem, size = 0x12000, scoped, tag = 'internal scratch']
  %s0 = inlined_call_operand.hbm [shape: f32[256,128], index: 0, kind: input, shape index: {}]
  %s1 = inlined_call_operand.vmem [shape: f32[7,1,128], index: 1, kind: input, shape index: {}]
  %s2 = inlined_call_operand.hbm [shape: f32[7,1,128], index: 2, kind: input, shape index: {}]
  %s3 = inlined_call_operand.hbm [shape: bf16[6,128,128], index: 3, kind: input, shape index: {}]
  %s4 = inlined_call_operand.vmem [shape: f32[6,1,128], index: 4, kind: input, shape index: {}]
  %s5 = inlined_call_operand.hbm [shape: f32[256,128], index: 5, kind: output, shape index: {}]
  %s6 = sld [smem:[#allocation0]]
  $region65: #{encoder_forward.1} parent=0
    _
  %s8 = ssub.s32 1, %s6
  %s9 = scalar_select 0, %s8, %s6
  $region1: #{encoder_forward.1} parent=0
    #allocation2 [shape = 'u8[131072]{0}', space=vmem, size = 0x20000, scoped, tag = 'input window, operand 0']
    #allocation3 [shape = 's32[2]{0}', space=sflag, size = 0x8, scoped, tag = 'scoped memory for encoder_forward.1']
    #allocation4 [shape = 's32[2]{0}', space=sflag, size = 0x8, scoped, tag = 'scoped memory for encoder_forward.1']
    #allocation5 [shape = 'u8[3584]{0}', space=vmem, size = 0x1000, scoped, tag = 'input window, operand 2, single buffered']
    #allocation6 [shape = 's32[1]{0}', space=sflag, size = 0x4, scoped, tag = 'scoped memory for encoder_forward.1']
    #allocation7 [shape = 'u8[196608]{0}', space=vmem, size = 0x30000, scoped, tag = 'input window, operand 3, single buffered']
    #allocation8 [shape = 'u8[131072]{0}', space=vmem, size = 0x20000, scoped, tag = 'output window, operand 0']
    %10 = vsyncpa [#allocation3], 0
    %s11 = scalar_lea.sflag [#allocation3], 1
    %12 = vsyncpa %s11, 0
    %13 = vsyncpa [#allocation6], 0
    %14 = vsyncpa [#allocation4], 0
    %s15 = scalar_lea.sflag [#allocation4], 1
    %16 = vsyncpa %s15, 0
    loop: start=0, step=1, limit=4
    $region2: #{encoder_forward.1} parent=1 // loop_pre_header
      _
    $region3: #{encoder_forward.1} parent=1 // loop_header
      %s18 = sphi 0, %s22
      %p19 = scmp.ge.s32.totalorder %s18, 4
      %s28 = sphi 0, %s30
      %s31 = sphi 0, %s28
      %s32 = sphi 0, %s31
      %s48 = sphi 0, %s32
      %s52 = sphi 0, %s52
      %s54 = sphi 0, %s52
      %s55 = sphi 0, %s54
      %s69 = sphi 0, %s55
      %s73 = sphi 0, %s73
      %s75 = sphi 0, %s73
      %s76 = sphi 0, %s75
      %s90 = sphi 0, %s76
      %s94 = sphi 0, %s94
      %s96 = sphi 0, %s94
      %s97 = sphi 0, %s96
      %s111 = sphi 0, %s97
      %s115 = sphi 0, %s115
      %s117 = sphi 0, %s115
      %s118 = sphi 0, %s117
      %s132 = sphi 0, %s118
      %s138 = sphi 0, %s140
      %s141 = sphi 0, %s138
      %s142 = sphi 0, %s141
      %s158 = sphi 0, %s142
    $region4: #{encoder_forward.1} parent=1 // loop_header_branch
      %21 = sbr.rel (%p19) target = $region8
    $region5: #{encoder_forward.1} parent=1 // loop_body
      %s23 = ssub.s32 %s18, 1
      %s24 = ssub.s32 %s18, 2
      %s25 = sadd.s32 %s18, 1
      %s26 = ssub.s32 %s18, %s25
      %p27 = scmp.eq.s32.totalorder %s26, 0
      %s29 = sadd.s32 %s28, 1
      %s30 = scalar_select %p27, %s28, %s29
      %p33 = pneg %p27
      %p34 = scmp.eq.s32.totalorder %s18, 1
      %p35 = por %p33, %p34
      %p36 = scmp.ne.s32.totalorder %s28, %s31
      %p37 = scmp.eq.s32.totalorder %s18, 0
      %p38 = por %p36, %p37
      %p39 = scmp.ne.s32.totalorder %s28, %s31
      %p40 = scmp.eq.s32.totalorder %s23, 1
      %p41 = por %p39, %p40
      %p42 = scmp.ne.s32.totalorder %s31, %s32
      %p43 = scmp.eq.s32.totalorder %s23, 0
      %p44 = por %p42, %p43
      %p45 = scmp.ne.s32.totalorder %s31, %s32
      %p46 = scmp.eq.s32.totalorder %s24, 1
      %p47 = por %p45, %p46
      %p49 = scmp.ne.s32.totalorder %s32, %s48
      %p50 = scmp.eq.s32.totalorder %s24, 0
      %p51 = por %p49, %p50
      %s53 = sadd.s32 %s52, 1
      %p56 = scmp.eq.s32.totalorder %s18, 1
      %p57 = scmp.ne.s32.totalorder %s52, %s54
      %p58 = scmp.eq.s32.totalorder %s18, 0
      %p59 = por %p57, %p58
      %p60 = scmp.ne.s32.totalorder %s52, %s54
      %p61 = scmp.eq.s32.totalorder %s23, 1
      %p62 = por %p60, %p61
      %p63 = scmp.ne.s32.totalorder %s54, %s55
      %p64 = scmp.eq.s32.totalorder %s23, 0
      %p65 = por %p63, %p64
      %p66 = scmp.ne.s32.totalorder %s54, %s55
      %p67 = scmp.eq.s32.totalorder %s24, 1
      %p68 = por %p66, %p67
      %p70 = scmp.ne.s32.totalorder %s55, %s69
      %p71 = scmp.eq.s32.totalorder %s24, 0
      %p72 = por %p70, %p71
      %s74 = sadd.s32 %s73, 1
      %p77 = scmp.eq.s32.totalorder %s18, 1
      %p78 = scmp.ne.s32.totalorder %s73, %s75
      %p79 = scmp.eq.s32.totalorder %s18, 0
      %p80 = por %p78, %p79
      %p81 = scmp.ne.s32.totalorder %s73, %s75
      %p82 = scmp.eq.s32.totalorder %s23, 1
      %p83 = por %p81, %p82
      %p84 = scmp.ne.s32.totalorder %s75, %s76
      %p85 = scmp.eq.s32.totalorder %s23, 0
      %p86 = por %p84, %p85
      %p87 = scmp.ne.s32.totalorder %s75, %s76
      %p88 = scmp.eq.s32.totalorder %s24, 1
      %p89 = por %p87, %p88
      %p91 = scmp.ne.s32.totalorder %s76, %s90
      %p92 = scmp.eq.s32.totalorder %s24, 0
      %p93 = por %p91, %p92
      %s95 = sadd.s32 %s94, 1
      %p98 = scmp.eq.s32.totalorder %s18, 1
      %p99 = scmp.ne.s32.totalorder %s94, %s96
      %p100 = scmp.eq.s32.totalorder %s18, 0
      %p101 = por %p99, %p100
      %p102 = scmp.ne.s32.totalorder %s94, %s96
      %p103 = scmp.eq.s32.totalorder %s23, 1
      %p104 = por %p102, %p103
      %p105 = scmp.ne.s32.totalorder %s96, %s97
      %p106 = scmp.eq.s32.totalorder %s23, 0
      %p107 = por %p105, %p106
      %p108 = scmp.ne.s32.totalorder %s96, %s97
      %p109 = scmp.eq.s32.totalorder %s24, 1
      %p110 = por %p108, %p109
      %p112 = scmp.ne.s32.totalorder %s97, %s111
      %p113 = scmp.eq.s32.totalorder %s24, 0
      %p114 = por %p112, %p113
      %s116 = sadd.s32 %s115, 1
      %p119 = scmp.eq.s32.totalorder %s18, 1
      %p120 = scmp.ne.s32.totalorder %s115, %s117
      %p121 = scmp.eq.s32.totalorder %s18, 0
      %p122 = por %p120, %p121
      %p123 = scmp.ne.s32.totalorder %s115, %s117
      %p124 = scmp.eq.s32.totalorder %s23, 1
      %p125 = por %p123, %p124
      %p126 = scmp.ne.s32.totalorder %s117, %s118
      %p127 = scmp.eq.s32.totalorder %s23, 0
      %p128 = por %p126, %p127
      %p129 = scmp.ne.s32.totalorder %s117, %s118
      %p130 = scmp.eq.s32.totalorder %s24, 1
      %p131 = por %p129, %p130
      %p133 = scmp.ne.s32.totalorder %s118, %s132
      %p134 = scmp.eq.s32.totalorder %s24, 0
      %p135 = por %p133, %p134
      %s136 = ssub.s32 %s18, %s25
      %p137 = scmp.eq.s32.totalorder %s136, 0
      %s139 = sadd.s32 %s138, 1
      %s140 = scalar_select %p137, %s138, %s139
      %p143 = pneg %p137
      %p144 = scmp.eq.s32.totalorder %s18, 1
      %p145 = por %p143, %p144
      %p146 = scmp.ne.s32.totalorder %s138, %s141
      %p147 = scmp.eq.s32.totalorder %s18, 0
      %p148 = por %p146, %p147
      %p149 = scmp.ne.s32.totalorder %s138, %s141
      %p150 = scmp.eq.s32.totalorder %s23, 1
      %p151 = por %p149, %p150
      %p152 = scmp.ne.s32.totalorder %s141, %s142
      %p153 = scmp.eq.s32.totalorder %s23, 0
      %p154 = por %p152, %p153
      %p155 = scmp.ne.s32.totalorder %s141, %s142
      %p156 = scmp.eq.s32.totalorder %s24, 1
      %p157 = por %p155, %p156
      %p159 = scmp.ne.s32.totalorder %s142, %s158
      %p160 = scmp.eq.s32.totalorder %s24, 0
      %p161 = por %p159, %p160
      %p162 = scmp.le.s32.totalorder 1, %s18
      %p163 = scmp.lt.s32.totalorder %s18, 3
      %p164 = pnand %p162, %p163
      %p165 = pneg %p164
      // Predicated region
      $region9: #{encoder_forward.1} parent=5 // pred_check
        _
      $region10: #{encoder_forward.1} parent=5 // pred_check_branch
        %167 = sbr.rel (%p164) target = $region12
      $region11: #{encoder_forward.1} parent=5 // pred_region
        %s168 = ssub.s32 %s18, 1
        // Predicated region
        $region13: #{encoder_forward.1} parent=11 // pred_check
          %p169 = pneg %p65
        $region14: #{encoder_forward.1} parent=11 // pred_check_branch
          %171 = sbr.rel (%p169) target = $region16
        $region15: #{encoder_forward.1} parent=11 // pred_region
          _
        $region16: #{encoder_forward.1} parent=11 // pred_fallthru
          _
        // Predicated region
        $region17: #{encoder_forward.1} parent=11 // pred_check
          %p172 = pneg %p86
        $region18: #{encoder_forward.1} parent=11 // pred_check_branch
          %174 = sbr.rel (%p172) target = $region20
        $region19: #{encoder_forward.1} parent=11 // pred_region
          %s176 = ssub.s32 112, 112
          %177 = vsyncadd [#allocation6], %s176
          %s178 = sshll.u32 [#allocation5], 4
          %s179 = int_to_ptr.vmem [resolvable:$true] %s178
          %184 = dma.hbm_to_vmem [thread:$0]  %s2, 112, %s179, [#allocation6], 16, 16, 1
        $region20: #{encoder_forward.1} parent=11 // pred_fallthru
          _
        // Predicated region
        $region21: #{encoder_forward.1} parent=11 // pred_check
          %p185 = pneg %p107
        $region22: #{encoder_forward.1} parent=11 // pred_check_branch
          %187 = sbr.rel (%p185) target = $region24
        $region23: #{encoder_forward.1} parent=11 // pred_region
          %s189 = ssub.s32 6144, 6144
          %190 = vsyncadd [#allocation6], %s189
          %s191 = sshll.u32 [#allocation7], 4
          %s192 = int_to_ptr.vmem [resolvable:$true] %s191
          %197 = dma.hbm_to_vmem [thread:$0]  %s3, 6144, %s192, [#allocation6], 64, 64, 4
        $region24: #{encoder_forward.1} parent=11 // pred_fallthru
          _
        // Predicated region
        $region25: #{encoder_forward.1} parent=11 // pred_check
          %p198 = pneg %p128
        $region26: #{encoder_forward.1} parent=11 // pred_check_branch
          %200 = sbr.rel (%p198) target = $region28
        $region27: #{encoder_forward.1} parent=11 // pred_region
          _
        $region28: #{encoder_forward.1} parent=11 // pred_fallthru
          _
      $region12: #{encoder_forward.1} parent=5 // pred_fallthru
        _
      %p201 = scmp.lt.s32.totalorder %s18, 2
      // Predicated region
      $region29: #{encoder_forward.1} parent=5 // pred_check
        %p202 = pneg %p201
      $region30: #{encoder_forward.1} parent=5 // pred_check_branch
        %204 = sbr.rel (%p202) target = $region32
      $region31: #{encoder_forward.1} parent=5 // pred_region
        // Predicated region
        $region33: #{encoder_forward.1} parent=31 // pred_check
          %p205 = pneg %p38
        $region34: #{encoder_forward.1} parent=31 // pred_check_branch
          %207 = sbr.rel (%p205) target = $region36
        $region35: #{encoder_forward.1} parent=31 // pred_region
          %s208 = sand.u32 %s28, 1
          %s209 = scalar_lea.sflag [#allocation3], %s208
          %s210 = sand.u32 %s28, 1
          %s211 = smul.addr %s210, 128
          %s212 = scalar_lea.vmem [#allocation2], %s211
          %s213 = smul.u32 16, %s18
          %s215 = ssub.s32 2048, 2048
          %216 = vsyncadd %s209, %s215
          %s217 = smul.addr %s213, 128
          %s218 = scalar_lea.hbm %s0, %s217
          %s219 = sshll.u32 %s212, 4
          %s220 = int_to_ptr.vmem [resolvable:$true] %s219
          %225 = dma.hbm_to_vmem [thread:$0]  %s218, 2048, %s220, %s209, 128, 128, 8
        $region36: #{encoder_forward.1} parent=31 // pred_fallthru
          _
      $region32: #{encoder_forward.1} parent=5 // pred_fallthru
        _
      %p226 = scmp.le.s32.totalorder 1, %s18
      %p227 = scmp.lt.s32.totalorder %s18, 3
      %p228 = pnand %p226, %p227
      %p229 = pneg %p228
      // Predicated region
      $region37: #{encoder_forward.1} parent=5 // pred_check
        _
      $region38: #{encoder_forward.1} parent=5 // pred_check_branch
        %231 = sbr.rel (%p228) target = $region40
      $region39: #{encoder_forward.1} parent=5 // pred_region
        %s232 = ssub.s32 %s18, 1
        %s233 = sand.u32 %s31, 1
        %s234 = scalar_lea.sflag [#allocation3], %s233
        %s235 = sand.u32 %s31, 1
        %s236 = smul.addr %s235, 128
        %s237 = scalar_lea.vmem [#allocation2], %s236
        // Predicated region
        $region41: #{encoder_forward.1} parent=39 // pred_check
          %p238 = pneg %p44
        $region42: #{encoder_forward.1} parent=39 // pred_check_branch
          %240 = sbr.rel (%p238) target = $region44
        $region43: #{encoder_forward.1} parent=39 // pred_region
          %241 = dma.done %s234, 2048
        $region44: #{encoder_forward.1} parent=39 // pred_fallthru
          _
        // Predicated region
        $region45: #{encoder_forward.1} parent=39 // pred_check
          %p242 = pneg %p86
        $region46: #{encoder_forward.1} parent=39 // pred_check_branch
          %244 = sbr.rel (%p242) target = $region48
        $region47: #{encoder_forward.1} parent=39 // pred_region
          %245 = dma.done [#allocation6], 112
        $region48: #{encoder_forward.1} parent=39 // pred_fallthru
          _
        // Predicated region
        $region49: #{encoder_forward.1} parent=39 // pred_check
          %p246 = pneg %p107
        $region50: #{encoder_forward.1} parent=39 // pred_check_branch
          %248 = sbr.rel (%p246) target = $region52
        $region51: #{encoder_forward.1} parent=39 // pred_region
          %249 = dma.done [#allocation6], 6144
        $region52: #{encoder_forward.1} parent=39 // pred_fallthru
          _
        %s250 = sand.u32 %s31, 1
        %s251 = scalar_lea.sflag [#allocation3], %s250
        %s252 = sand.u32 %s31, 1
        %s253 = smul.addr %s252, 128
        %s254 = scalar_lea.vmem [#allocation2], %s253
        %p255 = pneg %p44
        %p256 = pneg %p41
        %p257 = pneg %p65
        %p258 = pneg %p62
        %p259 = pneg %p86
        %p260 = pneg %p83
        %p261 = pneg %p107
        %p262 = pneg %p104
        %p263 = pneg %p128
        %p264 = pneg %p125
        %p265 = pneg %p154
        %p266 = pneg %p151
        %s267 = sand.u32 %s141, 1
        %s268 = scalar_lea.sflag [#allocation4], %s267
        %s269 = sand.u32 %s141, 1
        %s270 = smul.addr %s269, 128
        %s271 = scalar_lea.vmem [#allocation8], %s270
        %s272 = smul.u32 16, %s23
        %s273 = smul.u32 16, %s23
        %v275 = vld [vmem:[%s237] sm:$0xff]
        %v276 = vld [vmem:[%s237 + $0x8] sm:$0xff]
        %v277 = vld [vmem:[%s237 + $0x10] sm:$0xff]
        %v278 = vld [vmem:[%s237 + $0x18] sm:$0xff]
        %v279 = vld [vmem:[%s237 + $0x20] sm:$0xff]
        %v280 = vld [vmem:[%s237 + $0x28] sm:$0xff]
        %v281 = vld [vmem:[%s237 + $0x30] sm:$0xff]
        %v282 = vld [vmem:[%s237 + $0x38] sm:$0xff]
        %v283 = vld [vmem:[%s237 + $0x40] sm:$0xff]
        %v284 = vld [vmem:[%s237 + $0x48] sm:$0xff]
        %v285 = vld [vmem:[%s237 + $0x50] sm:$0xff]
        %v286 = vld [vmem:[%s237 + $0x58] sm:$0xff]
        %v287 = vld [vmem:[%s237 + $0x60] sm:$0xff]
        %v288 = vld [vmem:[%s237 + $0x68] sm:$0xff]
        %v289 = vld [vmem:[%s237 + $0x70] sm:$0xff]
        %v290 = vld [vmem:[%s237 + $0x78] sm:$0xff]
        %v291 = vld [vmem:[%s1] sm:$0x1]
        %v292 = vld [vmem:[#allocation5] sm:$0x1]
        %293 = vadd.xlane.f32.xlu0 %v275
        %v294 = vpop.xlane.xlu0 %293
        %295 = vadd.xlane.f32.xlu0 %v276
        %v296 = vpop.xlane.xlu0 %295
        %297 = vadd.xlane.f32.xlu0 %v277
        %v298 = vpop.xlane.xlu0 %297
        %299 = vadd.xlane.f32.xlu0 %v278
        %v300 = vpop.xlane.xlu0 %299
        %301 = vadd.xlane.f32.xlu0 %v279
        %v302 = vpop.xlane.xlu0 %301
        %303 = vadd.xlane.f32.xlu0 %v280
        %v304 = vpop.xlane.xlu0 %303
        %305 = vadd.xlane.f32.xlu0 %v281
        %v306 = vpop.xlane.xlu0 %305
        %307 = vadd.xlane.f32.xlu0 %v282
        %v308 = vpop.xlane.xlu0 %307
        %309 = vadd.xlane.f32.xlu0 %v283
        %v310 = vpop.xlane.xlu0 %309
        %311 = vadd.xlane.f32.xlu0 %v284
        %v312 = vpop.xlane.xlu0 %311
        %313 = vadd.xlane.f32.xlu0 %v285
        %v314 = vpop.xlane.xlu0 %313
        %315 = vadd.xlane.f32.xlu0 %v286
        %v316 = vpop.xlane.xlu0 %315
        %317 = vadd.xlane.f32.xlu0 %v287
        %v318 = vpop.xlane.xlu0 %317
        %319 = vadd.xlane.f32.xlu0 %v288
        %v320 = vpop.xlane.xlu0 %319
        %321 = vadd.xlane.f32.xlu0 %v289
        %v322 = vpop.xlane.xlu0 %321
        %323 = vadd.xlane.f32.xlu0 %v290
        %v324 = vpop.xlane.xlu0 %323
        %v325 = vrcp.pop 128.0
        %v326 = vmul.f32 %v294, %v325
        %v327 = vmul.f32 %v296, %v325
        %v328 = vmul.f32 %v298, %v325
        %v329 = vmul.f32 %v300, %v325
        %v330 = vmul.f32 %v302, %v325
        %v331 = vmul.f32 %v304, %v325
        %v332 = vmul.f32 %v306, %v325
        %v333 = vmul.f32 %v308, %v325
        %v334 = vmul.f32 %v310, %v325
        %v335 = vmul.f32 %v312, %v325
        %v336 = vmul.f32 %v314, %v325
        %v337 = vmul.f32 %v316, %v325
        %v338 = vmul.f32 %v318, %v325
        %v339 = vmul.f32 %v320, %v325
        %v340 = vmul.f32 %v322, %v325
        %v341 = vmul.f32 %v324, %v325
        %v342 = vsub.f32 %v275, %v326
        %v343 = vsub.f32 %v276, %v327
        %v344 = vsub.f32 %v277, %v328
        %v345 = vsub.f32 %v278, %v329
        %v346 = vsub.f32 %v279, %v330
        %v347 = vsub.f32 %v280, %v331
        %v348 = vsub.f32 %v281, %v332
        %v349 = vsub.f32 %v282, %v333
        %v350 = vsub.f32 %v283, %v334
        %v351 = vsub.f32 %v284, %v335
        %v352 = vsub.f32 %v285, %v336
        %v353 = vsub.f32 %v286, %v337
        %v354 = vsub.f32 %v287, %v338
        %v355 = vsub.f32 %v288, %v339
        %v356 = vsub.f32 %v289, %v340
        %v357 = vsub.f32 %v290, %v341
        %v358 = vmul.f32 %v342, %v342
        %v359 = vmul.f32 %v343, %v343
        %v360 = vmul.f32 %v344, %v344
        %v361 = vmul.f32 %v345, %v345
        %v362 = vmul.f32 %v346, %v346
        %v363 = vmul.f32 %v347, %v347
        %v364 = vmul.f32 %v348, %v348
        %v365 = vmul.f32 %v349, %v349
        %v366 = vmul.f32 %v350, %v350
        %v367 = vmul.f32 %v351, %v351
        %v368 = vmul.f32 %v352, %v352
        %v369 = vmul.f32 %v353, %v353
        %v370 = vmul.f32 %v354, %v354
        %v371 = vmul.f32 %v355, %v355
        %v372 = vmul.f32 %v356, %v356
        %v373 = vmul.f32 %v357, %v357
        %374 = vadd.xlane.f32.xlu0 %v358
        %v375 = vpop.xlane.xlu0 %374
        %376 = vadd.xlane.f32.xlu0 %v359
        %v377 = vpop.xlane.xlu0 %376
        %378 = vadd.xlane.f32.xlu0 %v360
        %v379 = vpop.xlane.xlu0 %378
        %380 = vadd.xlane.f32.xlu0 %v361
        %v381 = vpop.xlane.xlu0 %380
        %382 = vadd.xlane.f32.xlu0 %v362
        %v383 = vpop.xlane.xlu0 %382
        %384 = vadd.xlane.f32.xlu0 %v363
        %v385 = vpop.xlane.xlu0 %384
        %386 = vadd.xlane.f32.xlu0 %v364
        %v387 = vpop.xlane.xlu0 %386
        %388 = vadd.xlane.f32.xlu0 %v365
        %v389 = vpop.xlane.xlu0 %388
        %390 = vadd.xlane.f32.xlu0 %v366
        %v391 = vpop.xlane.xlu0 %390
        %392 = vadd.xlane.f32.xlu0 %v367
        %v393 = vpop.xlane.xlu0 %392
        %394 = vadd.xlane.f32.xlu0 %v368
        %v395 = vpop.xlane.xlu0 %394
        %396 = vadd.xlane.f32.xlu0 %v369
        %v397 = vpop.xlane.xlu0 %396
        %398 = vadd.xlane.f32.xlu0 %v370
        %v399 = vpop.xlane.xlu0 %398
        %400 = vadd.xlane.f32.xlu0 %v371
        %v401 = vpop.xlane.xlu0 %400
        %402 = vadd.xlane.f32.xlu0 %v372
        %v403 = vpop.xlane.xlu0 %402
        %404 = vadd.xlane.f32.xlu0 %v373
        %v405 = vpop.xlane.xlu0 %404
        %v406 = vrcp.pop 127.0
        %v407 = vmul.f32 %v375, %v406
        %v408 = vmul.f32 %v377, %v406
        %v409 = vmul.f32 %v379, %v406
        %v410 = vmul.f32 %v381, %v406
        %v411 = vmul.f32 %v383, %v406
        %v412 = vmul.f32 %v385, %v406
        %v413 = vmul.f32 %v387, %v406
        %v414 = vmul.f32 %v389, %v406
        %v415 = vmul.f32 %v391, %v406
        %v416 = vmul.f32 %v393, %v406
        %v417 = vmul.f32 %v395, %v406
        %v418 = vmul.f32 %v397, %v406
        %v419 = vmul.f32 %v399, %v406
        %v420 = vmul.f32 %v401, %v406
        %v421 = vmul.f32 %v403, %v406
        %v422 = vmul.f32 %v405, %v406
        %v423 = vrsqrt.pop %v407
        %v424 = vmul.f32 %v407, %v423
        %vm425 = vcmp.eq.f32.partialorder %v407, inf
        %v426 = vsel %vm425, %v407, %v424
        %vm427 = vcmp.eq.f32.partialorder %v407, 0.0
        %v428 = vand.u32 %v407, 2147483648
        %v429 = vsel %vm427, %v428, %v426
        %v430 = vrsqrt.pop %v408
        %v431 = vmul.f32 %v408, %v430
        %vm432 = vcmp.eq.f32.partialorder %v408, inf
        %v433 = vsel %vm432, %v408, %v431
        %vm434 = vcmp.eq.f32.partialorder %v408, 0.0
        %v435 = vand.u32 %v408, 2147483648
        %v436 = vsel %vm434, %v435, %v433
        %v437 = vrsqrt.pop %v409
        %v438 = vmul.f32 %v409, %v437
        %vm439 = vcmp.eq.f32.partialorder %v409, inf
        %v440 = vsel %vm439, %v409, %v438
        %vm441 = vcmp.eq.f32.partialorder %v409, 0.0
        %v442 = vand.u32 %v409, 2147483648
        %v443 = vsel %vm441, %v442, %v440
        %v444 = vrsqrt.pop %v410
        %v445 = vmul.f32 %v410, %v444
        %vm446 = vcmp.eq.f32.partialorder %v410, inf
        %v447 = vsel %vm446, %v410, %v445
        %vm448 = vcmp.eq.f32.partialorder %v410, 0.0
        %v449 = vand.u32 %v410, 2147483648
        %v450 = vsel %vm448, %v449, %v447
        %v451 = vrsqrt.pop %v411
        %v452 = vmul.f32 %v411, %v451
        %vm453 = vcmp.eq.f32.partialorder %v411, inf
        %v454 = vsel %vm453, %v411, %v452
        %vm455 = vcmp.eq.f32.partialorder %v411, 0.0
        %v456 = vand.u32 %v411, 2147483648
        %v457 = vsel %vm455, %v456, %v454
        %v458 = vrsqrt.pop %v412
        %v459 = vmul.f32 %v412, %v458
        %vm460 = vcmp.eq.f32.partialorder %v412, inf
        %v461 = vsel %vm460, %v412, %v459
        %vm462 = vcmp.eq.f32.partialorder %v412, 0.0
        %v463 = vand.u32 %v412, 2147483648
        %v464 = vsel %vm462, %v463, %v461
        %v465 = vrsqrt.pop %v413
        %v466 = vmul.f32 %v413, %v465
        %vm467 = vcmp.eq.f32.partialorder %v413, inf
        %v468 = vsel %vm467, %v413, %v466
        %vm469 = vcmp.eq.f32.partialorder %v413, 0.0
        %v470 = vand.u32 %v413, 2147483648
        %v471 = vsel %vm469, %v470, %v468
        %v472 = vrsqrt.pop %v414
        %v473 = vmul.f32 %v414, %v472
        %vm474 = vcmp.eq.f32.partialorder %v414, inf
        %v475 = vsel %vm474, %v414, %v473
        %vm476 = vcmp.eq.f32.partialorder %v414, 0.0
        %v477 = vand.u32 %v414, 2147483648
        %v478 = vsel %vm476, %v477, %v475
        %v479 = vrsqrt.pop %v415
        %v480 = vmul.f32 %v415, %v479
        %vm481 = vcmp.eq.f32.partialorder %v415, inf
        %v482 = vsel %vm481, %v415, %v480
        %vm483 = vcmp.eq.f32.partialorder %v415, 0.0
        %v484 = vand.u32 %v415, 2147483648
        %v485 = vsel %vm483, %v484, %v482
        %v486 = vrsqrt.pop %v416
        %v487 = vmul.f32 %v416, %v486
        %vm488 = vcmp.eq.f32.partialorder %v416, inf
        %v489 = vsel %vm488, %v416, %v487
        %vm490 = vcmp.eq.f32.partialorder %v416, 0.0
        %v491 = vand.u32 %v416, 2147483648
        %v492 = vsel %vm490, %v491, %v489
        %v493 = vrsqrt.pop %v417
        %v494 = vmul.f32 %v417, %v493
        %vm495 = vcmp.eq.f32.partialorder %v417, inf
        %v496 = vsel %vm495, %v417, %v494
        %vm497 = vcmp.eq.f32.partialorder %v417, 0.0
        %v498 = vand.u32 %v417, 2147483648
        %v499 = vsel %vm497, %v498, %v496
        %v500 = vrsqrt.pop %v418
        %v501 = vmul.f32 %v418, %v500
        %vm502 = vcmp.eq.f32.partialorder %v418, inf
        %v503 = vsel %vm502, %v418, %v501
        %vm504 = vcmp.eq.f32.partialorder %v418, 0.0
        %v505 = vand.u32 %v418, 2147483648
        %v506 = vsel %vm504, %v505, %v503
        %v507 = vrsqrt.pop %v419
        %v508 = vmul.f32 %v419, %v507
        %vm509 = vcmp.eq.f32.partialorder %v419, inf
        %v510 = vsel %vm509, %v419, %v508
        %vm511 = vcmp.eq.f32.partialorder %v419, 0.0
        %v512 = vand.u32 %v419, 2147483648
        %v513 = vsel %vm511, %v512, %v510
        %v514 = vrsqrt.pop %v420
        %v515 = vmul.f32 %v420, %v514
        %vm516 = vcmp.eq.f32.partialorder %v420, inf
        %v517 = vsel %vm516, %v420, %v515
        %vm518 = vcmp.eq.f32.partialorder %v420, 0.0
        %v519 = vand.u32 %v420, 2147483648
        %v520 = vsel %vm518, %v519, %v517
        %v521 = vrsqrt.pop %v421
        %v522 = vmul.f32 %v421, %v521
        %vm523 = vcmp.eq.f32.partialorder %v421, inf
        %v524 = vsel %vm523, %v421, %v522
        %vm525 = vcmp.eq.f32.partialorder %v421, 0.0
        %v526 = vand.u32 %v421, 2147483648
        %v527 = vsel %vm525, %v526, %v524
        %v528 = vrsqrt.pop %v422
        %v529 = vmul.f32 %v422, %v528
        %vm530 = vcmp.eq.f32.partialorder %v422, inf
        %v531 = vsel %vm530, %v422, %v529
        %vm532 = vcmp.eq.f32.partialorder %v422, 0.0
        %v533 = vand.u32 %v422, 2147483648
        %v534 = vsel %vm532, %v533, %v531
        %v536 = vlaneseq
        %v537 = vshrl.u32 %v536, 7
        %v538 = vsub.s32 0, %v537
        %v539 = vrot.slane %v291, %v538
        %v541 = vmul.f32 %v539, %v342
        %v542 = vmul.f32 %v539, %v343
        %v543 = vmul.f32 %v539, %v344
        %v544 = vmul.f32 %v539, %v345
        %v545 = vmul.f32 %v539, %v346
        %v546 = vmul.f32 %v539, %v347
        %v547 = vmul.f32 %v539, %v348
        %v548 = vmul.f32 %v539, %v349
        %v549 = vmul.f32 %v539, %v350
        %v550 = vmul.f32 %v539, %v351
        %v551 = vmul.f32 %v539, %v352
        %v552 = vmul.f32 %v539, %v353
        %v553 = vmul.f32 %v539, %v354
        %v554 = vmul.f32 %v539, %v355
        %v555 = vmul.f32 %v539, %v356
        %v556 = vmul.f32 %v539, %v357
        %v557 = vadd.f32 %v429, 1e-06
        %v558 = vadd.f32 %v436, 1e-06
        %v559 = vadd.f32 %v443, 1e-06
        %v560 = vadd.f32 %v450, 1e-06
        %v561 = vadd.f32 %v457, 1e-06
        %v562 = vadd.f32 %v464, 1e-06
        %v563 = vadd.f32 %v471, 1e-06
        %v564 = vadd.f32 %v478, 1e-06
        %v565 = vadd.f32 %v485, 1e-06
        %v566 = vadd.f32 %v492, 1e-06
        %v567 = vadd.f32 %v499, 1e-06
        %v568 = vadd.f32 %v506, 1e-06
        %v569 = vadd.f32 %v513, 1e-06
        %v570 = vadd.f32 %v520, 1e-06
        %v571 = vadd.f32 %v527, 1e-06
        %v572 = vadd.f32 %v534, 1e-06
        %v573 = vrcp.pop %v557
        %v574 = vmul.f32 %v541, %v573
        %v575 = vrcp.pop %v558
        %v576 = vmul.f32 %v542, %v575
        %v577 = vrcp.pop %v559
        %v578 = vmul.f32 %v543, %v577
        %v579 = vrcp.pop %v560
        %v580 = vmul.f32 %v544, %v579
        %v581 = vrcp.pop %v561
        %v582 = vmul.f32 %v545, %v581
        %v583 = vrcp.pop %v562
        %v584 = vmul.f32 %v546, %v583
        %v585 = vrcp.pop %v563
        %v586 = vmul.f32 %v547, %v585
        %v587 = vrcp.pop %v564
        %v588 = vmul.f32 %v548, %v587
        %v589 = vrcp.pop %v565
        %v590 = vmul.f32 %v549, %v589
        %v591 = vrcp.pop %v566
        %v592 = vmul.f32 %v550, %v591
        %v593 = vrcp.pop %v567
        %v594 = vmul.f32 %v551, %v593
        %v595 = vrcp.pop %v568
        %v596 = vmul.f32 %v552, %v595
        %v597 = vrcp.pop %v569
        %v598 = vmul.f32 %v553, %v597
        %v599 = vrcp.pop %v570
        %v600 = vmul.f32 %v554, %v599
        %v601 = vrcp.pop %v571
        %v602 = vmul.f32 %v555, %v601
        %v603 = vrcp.pop %v572
        %v604 = vmul.f32 %v556, %v603
        %v606 = vlaneseq
        %v607 = vshrl.u32 %v606, 7
        %v608 = vsub.s32 0, %v607
        %v609 = vrot.slane %v292, %v608
        %v611 = vadd.f32 %v574, %v609
        %v612 = vadd.f32 %v576, %v609
        %v613 = vadd.f32 %v578, %v609
        %v614 = vadd.f32 %v580, %v609
        %v615 = vadd.f32 %v582, %v609
        %v616 = vadd.f32 %v584, %v609
        %v617 = vadd.f32 %v586, %v609
        %v618 = vadd.f32 %v588, %v609
        %v619 = vadd.f32 %v590, %v609
        %v620 = vadd.f32 %v592, %v609
        %v621 = vadd.f32 %v594, %v609
        %v622 = vadd.f32 %v596, %v609
        %v623 = vadd.f32 %v598, %v609
        %v624 = vadd.f32 %v600, %v609
        %v625 = vadd.f32 %v602, %v609
        %v626 = vadd.f32 %v604, %v609
        %v627 = vpack.c.bf16 %v612, %v611
        %v628 = vpack.c.bf16 %v614, %v613
        %v629 = vpack.c.bf16 %v616, %v615
        %v630 = vpack.c.bf16 %v618, %v617
        %v631 = vpack.c.bf16 %v620, %v619
        %v632 = vpack.c.bf16 %v622, %v621
        %v633 = vpack.c.bf16 %v624, %v623
        %v634 = vpack.c.bf16 %v626, %v625
        %v635 = vld [vmem:[#allocation7] sm:$0xf]
        %v636 = vld [vmem:[#allocation7 + $0x4] sm:$0xf]
        %v637 = vld [vmem:[#allocation7 + $0x8] sm:$0xf]
        %v638 = vld [vmem:[#allocation7 + $0xc] sm:$0xf]
        %v639 = vld [vmem:[#allocation7 + $0x10] sm:$0xf]
        %v640 = vld [vmem:[#allocation7 + $0x14] sm:$0xf]
        %v641 = vld [vmem:[#allocation7 + $0x18] sm:$0xf]
        %v642 = vld [vmem:[#allocation7 + $0x1c] sm:$0xf]
        %v643 = vld [vmem:[#allocation7 + $0x20] sm:$0xf]
        %v644 = vld [vmem:[#allocation7 + $0x24] sm:$0xf]
        %v645 = vld [vmem:[#allocation7 + $0x28] sm:$0xf]
        %v646 = vld [vmem:[#allocation7 + $0x2c] sm:$0xf]
        %v647 = vld [vmem:[#allocation7 + $0x30] sm:$0xf]
        %v648 = vld [vmem:[#allocation7 + $0x34] sm:$0xf]
        %v649 = vld [vmem:[#allocation7 + $0x38] sm:$0xf]
        %v650 = vld [vmem:[#allocation7 + $0x3c] sm:$0xf]
        %v651 = vld [vmem:[%s4] sm:$0x1]
        %v653 = vlaneseq
        %v654 = vshrl.u32 %v653, 7
        %v655 = vsub.s32 0, %v654
        %v656 = vrot.slane %v651, %v655
        %v674 = vunpack.c.l.b16 %v635
        %v675 = vunpack.c.l.b16 %v636
        %v676 = vunpack.c.l.b16 %v637
        %v677 = vunpack.c.l.b16 %v638
        %v678 = vunpack.c.l.b16 %v639
        %v679 = vunpack.c.l.b16 %v640
        %v680 = vunpack.c.l.b16 %v641
        %v681 = vunpack.c.l.b16 %v642
        %v682 = vunpack.c.l.b16 %v643
        %v683 = vunpack.c.l.b16 %v644
        %v684 = vunpack.c.l.b16 %v645
        %v685 = vunpack.c.l.b16 %v646
        %v686 = vunpack.c.l.b16 %v647
        %v687 = vunpack.c.l.b16 %v648
        %v688 = vunpack.c.l.b16 %v649
        %v689 = vunpack.c.l.b16 %v650
        %v690 = vpack.c.b16 %v675, %v674
        %v691 = vpack.c.b16 %v677, %v676
        %v692 = vpack.c.b16 %v679, %v678
        %v693 = vpack.c.b16 %v681, %v680
        %v694 = vpack.c.b16 %v683, %v682
        %v695 = vpack.c.b16 %v685, %v684
        %v696 = vpack.c.b16 %v687, %v686
        %v697 = vpack.c.b16 %v689, %v688
        %706 = vmatprep.subr.bf16.mxu0 0
        %707 = vmatpush1.bf16.msra.mxu0 %v690
        %708 = vmatprep.subr.bf16.mxu0 0
        %709 = vmatpush1.bf16.msra.mxu0 %v691
        %710 = vmatprep.subr.bf16.mxu0 0
        %711 = vmatpush1.bf16.msra.mxu0 %v692
        %712 = vmatprep.subr.bf16.mxu0 0
        %713 = vmatpush1.bf16.msra.mxu0 %v693
        %714 = vmatprep.subr.bf16.mxu0 0
        %715 = vmatpush1.bf16.msra.mxu0 %v694
        %716 = vmatprep.subr.bf16.mxu0 0
        %717 = vmatpush1.bf16.msra.mxu0 %v695
        %718 = vmatprep.subr.bf16.mxu0 0
        %719 = vmatpush1.bf16.msra.mxu0 %v696
        %720 = vmatprep.subr.bf16.mxu0 0
        %721 = vmatpush1.bf16.msra.mxu0 %v697
        %722 = vmatprep.subr.bf16.mxu0 0
        %723 = vmatpush1.bf16.msra.mxu0 0
        %724 = vmatprep.subr.bf16.mxu0 0
        %725 = vmatpush1.bf16.msra.mxu0 0
        %726 = vmatprep.subr.bf16.mxu0 0
        %727 = vmatpush1.bf16.msra.mxu0 0
        %728 = vmatprep.subr.bf16.mxu0 0
        %729 = vmatpush1.bf16.msra.mxu0 0
        %730 = vmatprep.subr.bf16.mxu0 0
        %731 = vmatpush1.bf16.msra.mxu0 0
        %732 = vmatprep.subr.bf16.mxu0 0
        %733 = vmatpush1.bf16.msra.mxu0 0
        %734 = vmatprep.subr.bf16.mxu0 0
        %735 = vmatpush1.bf16.msra.mxu0 0
        %736 = vmatprep.subr.bf16.mxu0 0
        %737 = vmatpush1.bf16.msra.mxu0 0
        %738 = vmatprep.mubr.bf16.mxu0 0
        %739 = vmatmul.mubr.bf16.gmra.mrb[0].mxu0 %v627
        %v740 = vpop.f32.mrb[0].mxu0
        %v741 = vadd.f32 %v656, %v740
        %v742 = vpop.f32.mrb[0].mxu0
        %v743 = vpop.f32.mrb[0].mxu0
        %v744 = vadd.f32 %v656, %v743
        %v745 = vpop.f32.mrb[0].mxu0
        %746 = vmatprep.mubr.bf16.mxu0 0
        %747 = vmatmul.mubr.bf16.gmra.mrb[0].mxu0 %v628
        %v748 = vpop.f32.mrb[0].mxu0
        %v749 = vadd.f32 %v656, %v748
        %v750 = vpop.f32.mrb[0].mxu0
        %v751 = vpop.f32.mrb[0].mxu0
        %v752 = vadd.f32 %v656, %v751
        %v753 = vpop.f32.mrb[0].mxu0
        %754 = vmatprep.mubr.bf16.mxu0 0
        %755 = vmatmul.mubr.bf16.gmra.mrb[0].mxu0 %v629
        %v756 = vpop.f32.mrb[0].mxu0
        %v757 = vadd.f32 %v656, %v756
        %v758 = vpop.f32.mrb[0].mxu0
        %v759 = vpop.f32.mrb[0].mxu0
        %v760 = vadd.f32 %v656, %v759
        %v761 = vpop.f32.mrb[0].mxu0
        %762 = vmatprep.mubr.bf16.mxu0 0
        %763 = vmatmul.mubr.bf16.gmra.mrb[0].mxu0 %v630
        %v764 = vpop.f32.mrb[0].mxu0
        %v765 = vadd.f32 %v656, %v764
        %v766 = vpop.f32.mrb[0].mxu0
        %v767 = vpop.f32.mrb[0].mxu0
        %v768 = vadd.f32 %v656, %v767
        %v769 = vpop.f32.mrb[0].mxu0
        %770 = vmatprep.mubr.bf16.mxu0 0
        %771 = vmatmul.mubr.bf16.gmra.mrb[0].mxu0 %v631
        %v772 = vpop.f32.mrb[0].mxu0
        %v773 = vadd.f32 %v656, %v772
        %v774 = vpop.f32.mrb[0].mxu0
        %v775 = vpop.f32.mrb[0].mxu0
        %v776 = vadd.f32 %v656, %v775
        %v777 = vpop.f32.mrb[0].mxu0
        %778 = vmatprep.mubr.bf16.mxu0 0
        %779 = vmatmul.mubr.bf16.gmra.mrb[0].mxu0 %v632
        %v780 = vpop.f32.mrb[0].mxu0
        %v781 = vadd.f32 %v656, %v780
        %v782 = vpop.f32.mrb[0].mxu0
        %v783 = vpop.f32.mrb[0].mxu0
        %v784 = vadd.f32 %v656, %v783
        %v785 = vpop.f32.mrb[0].mxu0
        %786 = vmatprep.mubr.bf16.mxu0 0
        %787 = vmatmul.mubr.bf16.gmra.mrb[0].mxu0 %v633
        %v788 = vpop.f32.mrb[0].mxu0
        %v789 = vadd.f32 %v656, %v788
        %v790 = vpop.f32.mrb[0].mxu0
        %v791 = vpop.f32.mrb[0].mxu0
        %v792 = vadd.f32 %v656, %v791
        %v793 = vpop.f32.mrb[0].mxu0
        %794 = vmatprep.mubr.bf16.mxu0 0
        %795 = vmatmul.mubr.bf16.gmra.mrb[0].mxu0 %v634
        %v796 = vpop.f32.mrb[0].mxu0
        %v797 = vadd.f32 %v656, %v796
        %v798 = vpop.f32.mrb[0].mxu0
        %v799 = vpop.f32.mrb[0].mxu0
        %v800 = vadd.f32 %v656, %v799
        %v801 = vpop.f32.mrb[0].mxu0
        %802 = vdwg.mxu0
        %v803 = vadd.f32 %v275, %v741
        %v804 = vadd.f32 %v276, %v744
        %v805 = vadd.f32 %v277, %v749
        %v806 = vadd.f32 %v278, %v752
        %v807 = vadd.f32 %v279, %v757
        %v808 = vadd.f32 %v280, %v760
        %v809 = vadd.f32 %v281, %v765
        %v810 = vadd.f32 %v282, %v768
        %v811 = vadd.f32 %v283, %v773
        %v812 = vadd.f32 %v284, %v776
        %v813 = vadd.f32 %v285, %v781
        %v814 = vadd.f32 %v286, %v784
        %v815 = vadd.f32 %v287, %v789
        %v816 = vadd.f32 %v288, %v792
        %v817 = vadd.f32 %v289, %v797
        %v818 = vadd.f32 %v290, %v800
        %s819 = scalar_lea.vmem %s1, 1
        %v820 = vld [vmem:[%s819] sm:$0x1]
        %s821 = scalar_lea.vmem [#allocation5], 1
        %v822 = vld [vmem:[%s821] sm:$0x1]
        %823 = vadd.xlane.f32.xlu0 %v803
        %v824 = vpop.xlane.xlu0 %823
        %825 = vadd.xlane.f32.xlu0 %v804
        %v826 = vpop.xlane.xlu0 %825
        %827 = vadd.xlane.f32.xlu0 %v805
        %v828 = vpop.xlane.xlu0 %827
        %829 = vadd.xlane.f32.xlu0 %v806
        %v830 = vpop.xlane.xlu0 %829
        %831 = vadd.xlane.f32.xlu0 %v807
        %v832 = vpop.xlane.xlu0 %831
        %833 = vadd.xlane.f32.xlu0 %v808
        %v834 = vpop.xlane.xlu0 %833
        %835 = vadd.xlane.f32.xlu0 %v809
        %v836 = vpop.xlane.xlu0 %835
        %837 = vadd.xlane.f32.xlu0 %v810
        %v838 = vpop.xlane.xlu0 %837
        %839 = vadd.xlane.f32.xlu0 %v811
        %v840 = vpop.xlane.xlu0 %839
        %841 = vadd.xlane.f32.xlu0 %v812
        %v842 = vpop.xlane.xlu0 %841
        %843 = vadd.xlane.f32.xlu0 %v813
        %v844 = vpop.xlane.xlu0 %843
        %845 = vadd.xlane.f32.xlu0 %v814
        %v846 = vpop.xlane.xlu0 %845
        %847 = vadd.xlane.f32.xlu0 %v815
        %v848 = vpop.xlane.xlu0 %847
        %849 = vadd.xlane.f32.xlu0 %v816
        %v850 = vpop.xlane.xlu0 %849
        %851 = vadd.xlane.f32.xlu0 %v817
        %v852 = vpop.xlane.xlu0 %851
        %853 = vadd.xlane.f32.xlu0 %v818
        %v854 = vpop.xlane.xlu0 %853
        %v855 = vmul.f32 %v824, %v325
        %v856 = vmul.f32 %v826, %v325
        %v857 = vmul.f32 %v828, %v325
        %v858 = vmul.f32 %v830, %v325
        %v859 = vmul.f32 %v832, %v325
        %v860 = vmul.f32 %v834, %v325
        %v861 = vmul.f32 %v836, %v325
        %v862 = vmul.f32 %v838, %v325
        %v863 = vmul.f32 %v840, %v325
        %v864 = vmul.f32 %v842, %v325
        %v865 = vmul.f32 %v844, %v325
        %v866 = vmul.f32 %v846, %v325
        %v867 = vmul.f32 %v848, %v325
        %v868 = vmul.f32 %v850, %v325
        %v869 = vmul.f32 %v852, %v325
        %v870 = vmul.f32 %v854, %v325
        %v871 = vsub.f32 %v803, %v855
        %v872 = vsub.f32 %v804, %v856
        %v873 = vsub.f32 %v805, %v857
        %v874 = vsub.f32 %v806, %v858
        %v875 = vsub.f32 %v807, %v859
        %v876 = vsub.f32 %v808, %v860
        %v877 = vsub.f32 %v809, %v861
        %v878 = vsub.f32 %v810, %v862
        %v879 = vsub.f32 %v811, %v863
        %v880 = vsub.f32 %v812, %v864
        %v881 = vsub.f32 %v813, %v865
        %v882 = vsub.f32 %v814, %v866
        %v883 = vsub.f32 %v815, %v867
        %v884 = vsub.f32 %v816, %v868
        %v885 = vsub.f32 %v817, %v869
        %v886 = vsub.f32 %v818, %v870
        %v887 = vmul.f32 %v871, %v871
        %v888 = vmul.f32 %v872, %v872
        %v889 = vmul.f32 %v873, %v873
        %v890 = vmul.f32 %v874, %v874
        %v891 = vmul.f32 %v875, %v875
        %v892 = vmul.f32 %v876, %v876
        %v893 = vmul.f32 %v877, %v877
        %v894 = vmul.f32 %v878, %v878
        %v895 = vmul.f32 %v879, %v879
        %v896 = vmul.f32 %v880, %v880
        %v897 = vmul.f32 %v881, %v881
        %v898 = vmul.f32 %v882, %v882
        %v899 = vmul.f32 %v883, %v883
        %v900 = vmul.f32 %v884, %v884
        %v901 = vmul.f32 %v885, %v885
        %v902 = vmul.f32 %v886, %v886
        %903 = vadd.xlane.f32.xlu0 %v887
        %v904 = vpop.xlane.xlu0 %903
        %905 = vadd.xlane.f32.xlu0 %v888
        %v906 = vpop.xlane.xlu0 %905
        %907 = vadd.xlane.f32.xlu0 %v889
        %v908 = vpop.xlane.xlu0 %907
        %909 = vadd.xlane.f32.xlu0 %v890
        %v910 = vpop.xlane.xlu0 %909
        %911 = vadd.xlane.f32.xlu0 %v891
        %v912 = vpop.xlane.xlu0 %911
        %913 = vadd.xlane.f32.xlu0 %v892
        %v914 = vpop.xlane.xlu0 %913
        %915 = vadd.xlane.f32.xlu0 %v893
        %v916 = vpop.xlane.xlu0 %915
        %917 = vadd.xlane.f32.xlu0 %v894
        %v918 = vpop.xlane.xlu0 %917
        %919 = vadd.xlane.f32.xlu0 %v895
        %v920 = vpop.xlane.xlu0 %919
        %921 = vadd.xlane.f32.xlu0 %v896
        %v922 = vpop.xlane.xlu0 %921
        %923 = vadd.xlane.f32.xlu0 %v897
        %v924 = vpop.xlane.xlu0 %923
        %925 = vadd.xlane.f32.xlu0 %v898
        %v926 = vpop.xlane.xlu0 %925
        %927 = vadd.xlane.f32.xlu0 %v899
        %v928 = vpop.xlane.xlu0 %927
        %929 = vadd.xlane.f32.xlu0 %v900
        %v930 = vpop.xlane.xlu0 %929
        %931 = vadd.xlane.f32.xlu0 %v901
        %v932 = vpop.xlane.xlu0 %931
        %933 = vadd.xlane.f32.xlu0 %v902
        %v934 = vpop.xlane.xlu0 %933
        %v935 = vmul.f32 %v904, %v406
        %v936 = vmul.f32 %v906, %v406
        %v937 = vmul.f32 %v908, %v406
        %v938 = vmul.f32 %v910, %v406
        %v939 = vmul.f32 %v912, %v406
        %v940 = vmul.f32 %v914, %v406
        %v941 = vmul.f32 %v916, %v406
        %v942 = vmul.f32 %v918, %v406
        %v943 = vmul.f32 %v920, %v406
        %v944 = vmul.f32 %v922, %v406
        %v945 = vmul.f32 %v924, %v406
        %v946 = vmul.f32 %v926, %v406
        %v947 = vmul.f32 %v928, %v406
        %v948 = vmul.f32 %v930, %v406
        %v949 = vmul.f32 %v932, %v406
        %v950 = vmul.f32 %v934, %v406
        %v951 = vrsqrt.pop %v935
        %v952 = vmul.f32 %v935, %v951
        %vm953 = vcmp.eq.f32.partialorder %v935, inf
        %v954 = vsel %vm953, %v935, %v952
        %vm955 = vcmp.eq.f32.partialorder %v935, 0.0
        %v956 = vand.u32 %v935, 2147483648
        %v957 = vsel %vm955, %v956, %v954
        %v958 = vrsqrt.pop %v936
        %v959 = vmul.f32 %v936, %v958
        %vm960 = vcmp.eq.f32.partialorder %v936, inf
        %v961 = vsel %vm960, %v936, %v959
        %vm962 = vcmp.eq.f32.partialorder %v936, 0.0
        %v963 = vand.u32 %v936, 2147483648
        %v964 = vsel %vm962, %v963, %v961
        %v965 = vrsqrt.pop %v937
        %v966 = vmul.f32 %v937, %v965
        %vm967 = vcmp.eq.f32.partialorder %v937, inf
        %v968 = vsel %vm967, %v937, %v966
        %vm969 = vcmp.eq.f32.partialorder %v937, 0.0
        %v970 = vand.u32 %v937, 2147483648
        %v971 = vsel %vm969, %v970, %v968
        %v972 = vrsqrt.pop %v938
        %v973 = vmul.f32 %v938, %v972
        %vm974 = vcmp.eq.f32.partialorder %v938, inf
        %v975 = vsel %vm974, %v938, %v973
        %vm976 = vcmp.eq.f32.partialorder %v938, 0.0
        %v977 = vand.u32 %v938, 2147483648
        %v978 = vsel %vm976, %v977, %v975
        %v979 = vrsqrt.pop %v939
        %v980 = vmul.f32 %v939, %v979
        %vm981 = vcmp.eq.f32.partialorder %v939, inf
        %v982 = vsel %vm981, %v939, %v980
        %vm983 = vcmp.eq.f32.partialorder %v939, 0.0
        %v984 = vand.u32 %v939, 2147483648
        %v985 = vsel %vm983, %v984, %v982
        %v986 = vrsqrt.pop %v940
        %v987 = vmul.f32 %v940, %v986
        %vm988 = vcmp.eq.f32.partialorder %v940, inf
        %v989 = vsel %vm988, %v940, %v987
        %vm990 = vcmp.eq.f32.partialorder %v940, 0.0
        %v991 = vand.u32 %v940, 2147483648
        %v992 = vsel %vm990, %v991, %v989
        %v993 = vrsqrt.pop %v941
        %v994 = vmul.f32 %v941, %v993
        %vm995 = vcmp.eq.f32.partialorder %v941, inf
        %v996 = vsel %vm995, %v941, %v994
        %vm997 = vcmp.eq.f32.partialorder %v941, 0.0
        %v998 = vand.u32 %v941, 2147483648
        %v999 = vsel %vm997, %v998, %v996
        %v1000 = vrsqrt.pop %v942
        %v1001 = vmul.f32 %v942, %v1000
        %vm1002 = vcmp.eq.f32.partialorder %v942, inf
        %v1003 = vsel %vm1002, %v942, %v1001
        %vm1004 = vcmp.eq.f32.partialorder %v942, 0.0
        %v1005 = vand.u32 %v942, 2147483648
        %v1006 = vsel %vm1004, %v1005, %v1003
        %v1007 = vrsqrt.pop %v943
        %v1008 = vmul.f32 %v943, %v1007
        %vm1009 = vcmp.eq.f32.partialorder %v943, inf
        %v1010 = vsel %vm1009, %v943, %v1008
        %vm1011 = vcmp.eq.f32.partialorder %v943, 0.0
        %v1012 = vand.u32 %v943, 2147483648
        %v1013 = vsel %vm1011, %v1012, %v1010
        %v1014 = vrsqrt.pop %v944
        %v1015 = vmul.f32 %v944, %v1014
        %vm1016 = vcmp.eq.f32.partialorder %v944, inf
        %v1017 = vsel %vm1016, %v944, %v1015
        %vm1018 = vcmp.eq.f32.partialorder %v944, 0.0
        %v1019 = vand.u32 %v944, 2147483648
        %v1020 = vsel %vm1018, %v1019, %v1017
        %v1021 = vrsqrt.pop %v945
        %v1022 = vmul.f32 %v945, %v1021
        %vm1023 = vcmp.eq.f32.partialorder %v945, inf
        %v1024 = vsel %vm1023, %v945, %v1022
        %vm1025 = vcmp.eq.f32.partialorder %v945, 0.0
        %v1026 = vand.u32 %v945, 2147483648
        %v1027 = vsel %vm1025, %v1026, %v1024
        %v1028 = vrsqrt.pop %v946
        %v1029 = vmul.f32 %v946, %v1028
        %vm1030 = vcmp.eq.f32.partialorder %v946, inf
        %v1031 = vsel %vm1030, %v946, %v1029
        %vm1032 = vcmp.eq.f32.partialorder %v946, 0.0
        %v1033 = vand.u32 %v946, 2147483648
        %v1034 = vsel %vm1032, %v1033, %v1031
        %v1035 = vrsqrt.pop %v947
        %v1036 = vmul.f32 %v947, %v1035
        %vm1037 = vcmp.eq.f32.partialorder %v947, inf
        %v1038 = vsel %vm1037, %v947, %v1036
        %vm1039 = vcmp.eq.f32.partialorder %v947, 0.0
        %v1040 = vand.u32 %v947, 2147483648
        %v1041 = vsel %vm1039, %v1040, %v1038
        %v1042 = vrsqrt.pop %v948
        %v1043 = vmul.f32 %v948, %v1042
        %vm1044 = vcmp.eq.f32.partialorder %v948, inf
        %v1045 = vsel %vm1044, %v948, %v1043
        %vm1046 = vcmp.eq.f32.partialorder %v948, 0.0
        %v1047 = vand.u32 %v948, 2147483648
        %v1048 = vsel %vm1046, %v1047, %v1045
        %v1049 = vrsqrt.pop %v949
        %v1050 = vmul.f32 %v949, %v1049
        %vm1051 = vcmp.eq.f32.partialorder %v949, inf
        %v1052 = vsel %vm1051, %v949, %v1050
        %vm1053 = vcmp.eq.f32.partialorder %v949, 0.0
        %v1054 = vand.u32 %v949, 2147483648
        %v1055 = vsel %vm1053, %v1054, %v1052
        %v1056 = vrsqrt.pop %v950
        %v1057 = vmul.f32 %v950, %v1056
        %vm1058 = vcmp.eq.f32.partialorder %v950, inf
        %v1059 = vsel %vm1058, %v950, %v1057
        %vm1060 = vcmp.eq.f32.partialorder %v950, 0.0
        %v1061 = vand.u32 %v950, 2147483648
        %v1062 = vsel %vm1060, %v1061, %v1059
        %v1064 = vlaneseq
        %v1065 = vshrl.u32 %v1064, 7
        %v1066 = vsub.s32 0, %v1065
        %v1067 = vrot.slane %v820, %v1066
        %v1069 = vmul.f32 %v1067, %v871
        %v1070 = vmul.f32 %v1067, %v872
        %v1071 = vmul.f32 %v1067, %v873
        %v1072 = vmul.f32 %v1067, %v874
        %v1073 = vmul.f32 %v1067, %v875
        %v1074 = vmul.f32 %v1067, %v876
        %v1075 = vmul.f32 %v1067, %v877
        %v1076 = vmul.f32 %v1067, %v878
        %v1077 = vmul.f32 %v1067, %v879
        %v1078 = vmul.f32 %v1067, %v880
        %v1079 = vmul.f32 %v1067, %v881
        %v1080 = vmul.f32 %v1067, %v882
        %v1081 = vmul.f32 %v1067, %v883
        %v1082 = vmul.f32 %v1067, %v884
        %v1083 = vmul.f32 %v1067, %v885
        %v1084 = vmul.f32 %v1067, %v886
        %v1085 = vadd.f32 %v957, 1e-06
        %v1086 = vadd.f32 %v964, 1e-06
        %v1087 = vadd.f32 %v971, 1e-06
        %v1088 = vadd.f32 %v978, 1e-06
        %v1089 = vadd.f32 %v985, 1e-06
        %v1090 = vadd.f32 %v992, 1e-06
        %v1091 = vadd.f32 %v999, 1e-06
        %v1092 = vadd.f32 %v1006, 1e-06
        %v1093 = vadd.f32 %v1013, 1e-06
        %v1094 = vadd.f32 %v1020, 1e-06
        %v1095 = vadd.f32 %v1027, 1e-06
        %v1096 = vadd.f32 %v1034, 1e-06
        %v1097 = vadd.f32 %v1041, 1e-06
        %v1098 = vadd.f32 %v1048, 1e-06
        %v1099 = vadd.f32 %v1055, 1e-06
        %v1100 = vadd.f32 %v1062, 1e-06
        %v1101 = vrcp.pop %v1085
        %v1102 = vmul.f32 %v1069, %v1101
        %v1103 = vrcp.pop %v1086
        %v1104 = vmul.f32 %v1070, %v1103
        %v1105 = vrcp.pop %v1087
        %v1106 = vmul.f32 %v1071, %v1105
        %v1107 = vrcp.pop %v1088
        %v1108 = vmul.f32 %v1072, %v1107
        %v1109 = vrcp.pop %v1089
        %v1110 = vmul.f32 %v1073, %v1109
        %v1111 = vrcp.pop %v1090
        %v1112 = vmul.f32 %v1074, %v1111
        %v1113 = vrcp.pop %v1091
        %v1114 = vmul.f32 %v1075, %v1113
        %v1115 = vrcp.pop %v1092
        %v1116 = vmul.f32 %v1076, %v1115
        %v1117 = vrcp.pop %v1093
        %v1118 = vmul.f32 %v1077, %v1117
        %v1119 = vrcp.pop %v1094
        %v1120 = vmul.f32 %v1078, %v1119
        %v1121 = vrcp.pop %v1095
        %v1122 = vmul.f32 %v1079, %v1121
        %v1123 = vrcp.pop %v1096
        %v1124 = vmul.f32 %v1080, %v1123
        %v1125 = vrcp.pop %v1097
        %v1126 = vmul.f32 %v1081, %v1125
        %v1127 = vrcp.pop %v1098
        %v1128 = vmul.f32 %v1082, %v1127
        %v1129 = vrcp.pop %v1099
        %v1130 = vmul.f32 %v1083, %v1129
        %v1131 = vrcp.pop %v1100
        %v1132 = vmul.f32 %v1084, %v1131
        %v1134 = vlaneseq
        %v1135 = vshrl.u32 %v1134, 7
        %v1136 = vsub.s32 0, %v1135
        %v1137 = vrot.slane %v822, %v1136
        %v1139 = vadd.f32 %v1102, %v1137
        %v1140 = vadd.f32 %v1104, %v1137
        %v1141 = vadd.f32 %v1106, %v1137
        %v1142 = vadd.f32 %v1108, %v1137
        %v1143 = vadd.f32 %v1110, %v1137
        %v1144 = vadd.f32 %v1112, %v1137
        %v1145 = vadd.f32 %v1114, %v1137
        %v1146 = vadd.f32 %v1116, %v1137
        %v1147 = vadd.f32 %v1118, %v1137
        %v1148 = vadd.f32 %v1120, %v1137
        %v1149 = vadd.f32 %v1122, %v1137
        %v1150 = vadd.f32 %v1124, %v1137
        %v1151 = vadd.f32 %v1126, %v1137
        %v1152 = vadd.f32 %v1128, %v1137
        %v1153 = vadd.f32 %v1130, %v1137
        %v1154 = vadd.f32 %v1132, %v1137
        %v1155 = vpack.c.bf16 %v1140, %v1139
        %v1156 = vpack.c.bf16 %v1142, %v1141
        %v1157 = vpack.c.bf16 %v1144, %v1143
        %v1158 = vpack.c.bf16 %v1146, %v1145
        %v1159 = vpack.c.bf16 %v1148, %v1147
        %v1160 = vpack.c.bf16 %v1150, %v1149
        %v1161 = vpack.c.bf16 %v1152, %v1151
        %v1162 = vpack.c.bf16 %v1154, %v1153
        %s1163 = scalar_lea.vmem [#allocation7], 64
        %v1164 = vld [vmem:[%s1163] sm:$0xf]
        %v1165 = vld [vmem:[%s1163 + $0x4] sm:$0xf]
        %v1166 = vld [vmem:[%s1163 + $0x8] sm:$0xf]
        %v1167 = vld [vmem:[%s1163 + $0xc] sm:$0xf]
        %v1168 = vld [vmem:[%s1163 + $0x10] sm:$0xf]
        %v1169 = vld [vmem:[%s1163 + $0x14] sm:$0xf]
        %v1170 = vld [vmem:[%s1163 + $0x18] sm:$0xf]
        %v1171 = vld [vmem:[%s1163 + $0x1c] sm:$0xf]
        %v1172 = vld [vmem:[%s1163 + $0x20] sm:$0xf]
        %v1173 = vld [vmem:[%s1163 + $0x24] sm:$0xf]
        %v1174 = vld [vmem:[%s1163 + $0x28] sm:$0xf]
        %v1175 = vld [vmem:[%s1163 + $0x2c] sm:$0xf]
        %v1176 = vld [vmem:[%s1163 + $0x30] sm:$0xf]
        %v1177 = vld [vmem:[%s1163 + $0x34] sm:$0xf]
        %v1178 = vld [vmem:[%s1163 + $0x38] sm:$0xf]
        %v1179 = vld [vmem:[%s1163 + $0x3c] sm:$0xf]
        %s1180 = scalar_lea.vmem %s4, 1
        %v1181 = vld [vmem:[%s1180] sm:$0x1]
        %v1183 = vlaneseq
        %v1184 = vshrl.u32 %v1183, 7
        %v1185 = vsub.s32 0, %v1184
        %v1186 = vrot.slane %v1181, %v1185
        %v1204 = vunpack.c.l.b16 %v1164
        %v1205 = vunpack.c.l.b16 %v1165
        %v1206 = vunpack.c.l.b16 %v1166
        %v1207 = vunpack.c.l.b16 %v1167
        %v1208 = vunpack.c.l.b16 %v1168
        %v1209 = vunpack.c.l.b16 %v1169
        %v1210 = vunpack.c.l.b16 %v1170
        %v1211 = vunpack.c.l.b16 %v1171
        %v1212 = vunpack.c.l.b16 %v1172
        %v1213 = vunpack.c.l.b16 %v1173
        %v1214 = vunpack.c.l.b16 %v1174
        %v1215 = vunpack.c.l.b16 %v1175
        %v1216 = vunpack.c.l.b16 %v1176
        %v1217 = vunpack.c.l.b16 %v1177
        %v1218 = vunpack.c.l.b16 %v1178
        %v1219 = vunpack.c.l.b16 %v1179
        %v1220 = vpack.c.b16 %v1205, %v1204
        %v1221 = vpack.c.b16 %v1207, %v1206
        %v1222 = vpack.c.b16 %v1209, %v1208
        %v1223 = vpack.c.b16 %v1211, %v1210
        %v1224 = vpack.c.b16 %v1213, %v1212
        %v1225 = vpack.c.b16 %v1215, %v1214
        %v1226 = vpack.c.b16 %v1217, %v1216
        %v1227 = vpack.c.b16 %v1219, %v1218
        %1236 = vmatprep.subr.bf16.mxu0 0
        %1237 = vmatpush1.bf16.msra.mxu0 %v1220
        %1238 = vmatprep.subr.bf16.mxu0 0
        %1239 = vmatpush1.bf16.msra.mxu0 %v1221
        %1240 = vmatprep.subr.bf16.mxu0 0
        %1241 = vmatpush1.bf16.msra.mxu0 %v1222
        %1242 = vmatprep.subr.bf16.mxu0 0
        %1243 = vmatpush1.bf16.msra.mxu0 %v1223
        %1244 = vmatprep.subr.bf16.mxu0 0
        %1245 = vmatpush1.bf16.msra.mxu0 %v1224
        %1246 = vmatprep.subr.bf16.mxu0 0
        %1247 = vmatpush1.bf16.msra.mxu0 %v1225
        %1248 = vmatprep.subr.bf16.mxu0 0
        %1249 = vmatpush1.bf16.msra.mxu0 %v1226
        %1250 = vmatprep.subr.bf16.mxu0 0
        %1251 = vmatpush1.bf16.msra.mxu0 %v1227
        %1252 = vmatprep.subr.bf16.mxu0 0
        %1253 = vmatpush1.bf16.msra.mxu0 0
        %1254 = vmatprep.subr.bf16.mxu0 0
        %1255 = vmatpush1.bf16.msra.mxu0 0
        %1256 = vmatprep.subr.bf16.mxu0 0
        %1257 = vmatpush1.bf16.msra.mxu0 0
        %1258 = vmatprep.subr.bf16.mxu0 0
        %1259 = vmatpush1.bf16.msra.mxu0 0
        %1260 = vmatprep.subr.bf16.mxu0 0
        %1261 = vmatpush1.bf16.msra.mxu0 0
        %1262 = vmatprep.subr.bf16.mxu0 0
        %1263 = vmatpush1.bf16.msra.mxu0 0
        %1264 = vmatprep.subr.bf16.mxu0 0
        %1265 = vmatpush1.bf16.msra.mxu0 0
        %1266 = vmatprep.subr.bf16.mxu0 0
        %1267 = vmatpush1.bf16.msra.mxu0 0
        %1268 = vmatprep.mubr.bf16.mxu0 0
        %1269 = vmatmul.mubr.bf16.gmra.mrb[0].mxu0 %v1155
        %v1270 = vpop.f32.mrb[0].mxu0
        %v1271 = vadd.f32 %v1186, %v1270
        %v1272 = vpop.f32.mrb[0].mxu0
        %v1273 = vpop.f32.mrb[0].mxu0
        %v1274 = vadd.f32 %v1186, %v1273
        %v1275 = vpop.f32.mrb[0].mxu0
        %1276 = vmatprep.mubr.bf16.mxu0 0
        %1277 = vmatmul.mubr.bf16.gmra.mrb[0].mxu0 %v1156
        %v1278 = vpop.f32.mrb[0].mxu0
        %v1279 = vadd.f32 %v1186, %v1278
        %v1280 = vpop.f32.mrb[0].mxu0
        %v1281 = vpop.f32.mrb[0].mxu0
        %v1282 = vadd.f32 %v1186, %v1281
        %v1283 = vpop.f32.mrb[0].mxu0
        %1284 = vmatprep.mubr.bf16.mxu0 0
        %1285 = vmatmul.mubr.bf16.gmra.mrb[0].mxu0 %v1157
        %v1286 = vpop.f32.mrb[0].mxu0
        %v1287 = vadd.f32 %v1186, %v1286
        %v1288 = vpop.f32.mrb[0].mxu0
        %v1289 = vpop.f32.mrb[0].mxu0
        %v1290 = vadd.f32 %v1186, %v1289
        %v1291 = vpop.f32.mrb[0].mxu0
        %1292 = vmatprep.mubr.bf16.mxu0 0
        %1293 = vmatmul.mubr.bf16.gmra.mrb[0].mxu0 %v1158
        %v1294 = vpop.f32.mrb[0].mxu0
        %v1295 = vadd.f32 %v1186, %v1294
        %v1296 = vpop.f32.mrb[0].mxu0
        %v1297 = vpop.f32.mrb[0].mxu0
        %v1298 = vadd.f32 %v1186, %v1297
        %v1299 = vpop.f32.mrb[0].mxu0
        %1300 = vmatprep.mubr.bf16.mxu0 0
        %1301 = vmatmul.mubr.bf16.gmra.mrb[0].mxu0 %v1159
        %v1302 = vpop.f32.mrb[0].mxu0
        %v1303 = vadd.f32 %v1186, %v1302
        %v1304 = vpop.f32.mrb[0].mxu0
        %v1305 = vpop.f32.mrb[0].mxu0
        %v1306 = vadd.f32 %v1186, %v1305
        %v1307 = vpop.f32.mrb[0].mxu0
        %1308 = vmatprep.mubr.bf16.mxu0 0
        %1309 = vmatmul.mubr.bf16.gmra.mrb[0].mxu0 %v1160
        %v1310 = vpop.f32.mrb[0].mxu0
        %v1311 = vadd.f32 %v1186, %v1310
        %v1312 = vpop.f32.mrb[0].mxu0
        %v1313 = vpop.f32.mrb[0].mxu0
        %v1314 = vadd.f32 %v1186, %v1313
        %v1315 = vpop.f32.mrb[0].mxu0
        %1316 = vmatprep.mubr.bf16.mxu0 0
        %1317 = vmatmul.mubr.bf16.gmra.mrb[0].mxu0 %v1161
        %v1318 = vpop.f32.mrb[0].mxu0
        %v1319 = vadd.f32 %v1186, %v1318
        %v1320 = vpop.f32.mrb[0].mxu0
        %v1321 = vpop.f32.mrb[0].mxu0
        %v1322 = vadd.f32 %v1186, %v1321
        %v1323 = vpop.f32.mrb[0].mxu0
        %1324 = vmatprep.mubr.bf16.mxu0 0
        %1325 = vmatmul.mubr.bf16.gmra.mrb[0].mxu0 %v1162
        %v1326 = vpop.f32.mrb[0].mxu0
        %v1327 = vadd.f32 %v1186, %v1326
        %v1328 = vpop.f32.mrb[0].mxu0
        %v1329 = vpop.f32.mrb[0].mxu0
        %v1330 = vadd.f32 %v1186, %v1329
        %v1331 = vpop.f32.mrb[0].mxu0
        %1332 = vdwg.mxu0
        %v1333 = vadd.f32 %v803, %v1271
        %v1334 = vadd.f32 %v804, %v1274
        %v1335 = vadd.f32 %v805, %v1279
        %v1336 = vadd.f32 %v806, %v1282
        %v1337 = vadd.f32 %v807, %v1287
        %v1338 = vadd.f32 %v808, %v1290
        %v1339 = vadd.f32 %v809, %v1295
        %v1340 = vadd.f32 %v810, %v1298
        %v1341 = vadd.f32 %v811, %v1303
        %v1342 = vadd.f32 %v812, %v1306
        %v1343 = vadd.f32 %v813, %v1311
        %v1344 = vadd.f32 %v814, %v1314
        %v1345 = vadd.f32 %v815, %v1319
        %v1346 = vadd.f32 %v816, %v1322
        %v1347 = vadd.f32 %v817, %v1327
        %v1348 = vadd.f32 %v818, %v1330
        %s1349 = scalar_lea.vmem %s1, 2
        %v1350 = vld [vmem:[%s1349] sm:$0x1]
        %s1351 = scalar_lea.vmem [#allocation5], 2
        %v1352 = vld [vmem:[%s1351] sm:$0x1]
        %1353 = vadd.xlane.f32.xlu0 %v1333
        %v1354 = vpop.xlane.xlu0 %1353
        %1355 = vadd.xlane.f32.xlu0 %v1334
        %v1356 = vpop.xlane.xlu0 %1355
        %1357 = vadd.xlane.f32.xlu0 %v1335
        %v1358 = vpop.xlane.xlu0 %1357
        %1359 = vadd.xlane.f32.xlu0 %v1336
        %v1360 = vpop.xlane.xlu0 %1359
        %1361 = vadd.xlane.f32.xlu0 %v1337
        %v1362 = vpop.xlane.xlu0 %1361
        %1363 = vadd.xlane.f32.xlu0 %v1338
        %v1364 = vpop.xlane.xlu0 %1363
        %1365 = vadd.xlane.f32.xlu0 %v1339
        %v1366 = vpop.xlane.xlu0 %1365
        %1367 = vadd.xlane.f32.xlu0 %v1340
        %v1368 = vpop.xlane.xlu0 %1367
        %1369 = vadd.xlane.f32.xlu0 %v1341
        %v1370 = vpop.xlane.xlu0 %1369
        %1371 = vadd.xlane.f32.xlu0 %v1342
        %v1372 = vpop.xlane.xlu0 %1371
        %1373 = vadd.xlane.f32.xlu0 %v1343
        %v1374 = vpop.xlane.xlu0 %1373
        %1375 = vadd.xlane.f32.xlu0 %v1344
        %v1376 = vpop.xlane.xlu0 %1375
        %1377 = vadd.xlane.f32.xlu0 %v1345
        %v1378 = vpop.xlane.xlu0 %1377
        %1379 = vadd.xlane.f32.xlu0 %v1346
        %v1380 = vpop.xlane.xlu0 %1379
        %1381 = vadd.xlane.f32.xlu0 %v1347
        %v1382 = vpop.xlane.xlu0 %1381
        %1383 = vadd.xlane.f32.xlu0 %v1348
        %v1384 = vpop.xlane.xlu0 %1383
        %v1385 = vmul.f32 %v1354, %v325
        %v1386 = vmul.f32 %v1356, %v325
        %v1387 = vmul.f32 %v1358, %v325
        %v1388 = vmul.f32 %v1360, %v325
        %v1389 = vmul.f32 %v1362, %v325
        %v1390 = vmul.f32 %v1364, %v325
        %v1391 = vmul.f32 %v1366, %v325
        %v1392 = vmul.f32 %v1368, %v325
        %v1393 = vmul.f32 %v1370, %v325
        %v1394 = vmul.f32 %v1372, %v325
        %v1395 = vmul.f32 %v1374, %v325
        %v1396 = vmul.f32 %v1376, %v325
        %v1397 = vmul.f32 %v1378, %v325
        %v1398 = vmul.f32 %v1380, %v325
        %v1399 = vmul.f32 %v1382, %v325
        %v1400 = vmul.f32 %v1384, %v325
        %v1401 = vsub.f32 %v1333, %v1385
        %v1402 = vsub.f32 %v1334, %v1386
        %v1403 = vsub.f32 %v1335, %v1387
        %v1404 = vsub.f32 %v1336, %v1388
        %v1405 = vsub.f32 %v1337, %v1389
        %v1406 = vsub.f32 %v1338, %v1390
        %v1407 = vsub.f32 %v1339, %v1391
        %v1408 = vsub.f32 %v1340, %v1392
        %v1409 = vsub.f32 %v1341, %v1393
        %v1410 = vsub.f32 %v1342, %v1394
        %v1411 = vsub.f32 %v1343, %v1395
        %v1412 = vsub.f32 %v1344, %v1396
        %v1413 = vsub.f32 %v1345, %v1397
        %v1414 = vsub.f32 %v1346, %v1398
        %v1415 = vsub.f32 %v1347, %v1399
        %v1416 = vsub.f32 %v1348, %v1400
        %v1417 = vmul.f32 %v1401, %v1401
        %v1418 = vmul.f32 %v1402, %v1402
        %v1419 = vmul.f32 %v1403, %v1403
        %v1420 = vmul.f32 %v1404, %v1404
        %v1421 = vmul.f32 %v1405, %v1405
        %v1422 = vmul.f32 %v1406, %v1406
        %v1423 = vmul.f32 %v1407, %v1407
        %v1424 = vmul.f32 %v1408, %v1408
        %v1425 = vmul.f32 %v1409, %v1409
        %v1426 = vmul.f32 %v1410, %v1410
        %v1427 = vmul.f32 %v1411, %v1411
        %v1428 = vmul.f32 %v1412, %v1412
        %v1429 = vmul.f32 %v1413, %v1413
        %v1430 = vmul.f32 %v1414, %v1414
        %v1431 = vmul.f32 %v1415, %v1415
        %v1432 = vmul.f32 %v1416, %v1416
        %1433 = vadd.xlane.f32.xlu0 %v1417
        %v1434 = vpop.xlane.xlu0 %1433
        %1435 = vadd.xlane.f32.xlu0 %v1418
        %v1436 = vpop.xlane.xlu0 %1435
        %1437 = vadd.xlane.f32.xlu0 %v1419
        %v1438 = vpop.xlane.xlu0 %1437
        %1439 = vadd.xlane.f32.xlu0 %v1420
        %v1440 = vpop.xlane.xlu0 %1439
        %1441 = vadd.xlane.f32.xlu0 %v1421
        %v1442 = vpop.xlane.xlu0 %1441
        %1443 = vadd.xlane.f32.xlu0 %v1422
        %v1444 = vpop.xlane.xlu0 %1443
        %1445 = vadd.xlane.f32.xlu0 %v1423
        %v1446 = vpop.xlane.xlu0 %1445
        %1447 = vadd.xlane.f32.xlu0 %v1424
        %v1448 = vpop.xlane.xlu0 %1447
        %1449 = vadd.xlane.f32.xlu0 %v1425
        %v1450 = vpop.xlane.xlu0 %1449
        %1451 = vadd.xlane.f32.xlu0 %v1426
        %v1452 = vpop.xlane.xlu0 %1451
        %1453 = vadd.xlane.f32.xlu0 %v1427
        %v1454 = vpop.xlane.xlu0 %1453
        %1455 = vadd.xlane.f32.xlu0 %v1428
        %v1456 = vpop.xlane.xlu0 %1455
        %1457 = vadd.xlane.f32.xlu0 %v1429
        %v1458 = vpop.xlane.xlu0 %1457
        %1459 = vadd.xlane.f32.xlu0 %v1430
        %v1460 = vpop.xlane.xlu0 %1459
        %1461 = vadd.xlane.f32.xlu0 %v1431
        %v1462 = vpop.xlane.xlu0 %1461
        %1463 = vadd.xlane.f32.xlu0 %v1432
        %v1464 = vpop.xlane.xlu0 %1463
        %v1465 = vmul.f32 %v1434, %v406
        %v1466 = vmul.f32 %v1436, %v406
        %v1467 = vmul.f32 %v1438, %v406
        %v1468 = vmul.f32 %v1440, %v406
        %v1469 = vmul.f32 %v1442, %v406
        %v1470 = vmul.f32 %v1444, %v406
        %v1471 = vmul.f32 %v1446, %v406
        %v1472 = vmul.f32 %v1448, %v406
        %v1473 = vmul.f32 %v1450, %v406
        %v1474 = vmul.f32 %v1452, %v406
        %v1475 = vmul.f32 %v1454, %v406
        %v1476 = vmul.f32 %v1456, %v406
        %v1477 = vmul.f32 %v1458, %v406
        %v1478 = vmul.f32 %v1460, %v406
        %v1479 = vmul.f32 %v1462, %v406
        %v1480 = vmul.f32 %v1464, %v406
        %v1481 = vrsqrt.pop %v1465
        %v1482 = vmul.f32 %v1465, %v1481
        %vm1483 = vcmp.eq.f32.partialorder %v1465, inf
        %v1484 = vsel %vm1483, %v1465, %v1482
        %vm1485 = vcmp.eq.f32.partialorder %v1465, 0.0
        %v1486 = vand.u32 %v1465, 2147483648
        %v1487 = vsel %vm1485, %v1486, %v1484
        %v1488 = vrsqrt.pop %v1466
        %v1489 = vmul.f32 %v1466, %v1488
        %vm1490 = vcmp.eq.f32.partialorder %v1466, inf
        %v1491 = vsel %vm1490, %v1466, %v1489
        %vm1492 = vcmp.eq.f32.partialorder %v1466, 0.0
        %v1493 = vand.u32 %v1466, 2147483648
        %v1494 = vsel %vm1492, %v1493, %v1491
        %v1495 = vrsqrt.pop %v1467
        %v1496 = vmul.f32 %v1467, %v1495
        %vm1497 = vcmp.eq.f32.partialorder %v1467, inf
        %v1498 = vsel %vm1497, %v1467, %v1496
        %vm1499 = vcmp.eq.f32.partialorder %v1467, 0.0
        %v1500 = vand.u32 %v1467, 2147483648
        %v1501 = vsel %vm1499, %v1500, %v1498
        %v1502 = vrsqrt.pop %v1468
        %v1503 = vmul.f32 %v1468, %v1502
        %vm1504 = vcmp.eq.f32.partialorder %v1468, inf
        %v1505 = vsel %vm1504, %v1468, %v1503
        %vm1506 = vcmp.eq.f32.partialorder %v1468, 0.0
        %v1507 = vand.u32 %v1468, 2147483648
        %v1508 = vsel %vm1506, %v1507, %v1505
        %v1509 = vrsqrt.pop %v1469
        %v1510 = vmul.f32 %v1469, %v1509
        %vm1511 = vcmp.eq.f32.partialorder %v1469, inf
        %v1512 = vsel %vm1511, %v1469, %v1510
        %vm1513 = vcmp.eq.f32.partialorder %v1469, 0.0
        %v1514 = vand.u32 %v1469, 2147483648
        %v1515 = vsel %vm1513, %v1514, %v1512
        %v1516 = vrsqrt.pop %v1470
        %v1517 = vmul.f32 %v1470, %v1516
        %vm1518 = vcmp.eq.f32.partialorder %v1470, inf
        %v1519 = vsel %vm1518, %v1470, %v1517
        %vm1520 = vcmp.eq.f32.partialorder %v1470, 0.0
        %v1521 = vand.u32 %v1470, 2147483648
        %v1522 = vsel %vm1520, %v1521, %v1519
        %v1523 = vrsqrt.pop %v1471
        %v1524 = vmul.f32 %v1471, %v1523
        %vm1525 = vcmp.eq.f32.partialorder %v1471, inf
        %v1526 = vsel %vm1525, %v1471, %v1524
        %vm1527 = vcmp.eq.f32.partialorder %v1471, 0.0
        %v1528 = vand.u32 %v1471, 2147483648
        %v1529 = vsel %vm1527, %v1528, %v1526
        %v1530 = vrsqrt.pop %v1472
        %v1531 = vmul.f32 %v1472, %v1530
        %vm1532 = vcmp.eq.f32.partialorder %v1472, inf
        %v1533 = vsel %vm1532, %v1472, %v1531
        %vm1534 = vcmp.eq.f32.partialorder %v1472, 0.0
        %v1535 = vand.u32 %v1472, 2147483648
        %v1536 = vsel %vm1534, %v1535, %v1533
        %v1537 = vrsqrt.pop %v1473
        %v1538 = vmul.f32 %v1473, %v1537
        %vm1539 = vcmp.eq.f32.partialorder %v1473, inf
        %v1540 = vsel %vm1539, %v1473, %v1538
        %vm1541 = vcmp.eq.f32.partialorder %v1473, 0.0
        %v1542 = vand.u32 %v1473, 2147483648
        %v1543 = vsel %vm1541, %v1542, %v1540
        %v1544 = vrsqrt.pop %v1474
        %v1545 = vmul.f32 %v1474, %v1544
        %vm1546 = vcmp.eq.f32.partialorder %v1474, inf
        %v1547 = vsel %vm1546, %v1474, %v1545
        %vm1548 = vcmp.eq.f32.partialorder %v1474, 0.0
        %v1549 = vand.u32 %v1474, 2147483648
        %v1550 = vsel %vm1548, %v1549, %v1547
        %v1551 = vrsqrt.pop %v1475
        %v1552 = vmul.f32 %v1475, %v1551
        %vm1553 = vcmp.eq.f32.partialorder %v1475, inf
        %v1554 = vsel %vm1553, %v1475, %v1552
        %vm1555 = vcmp.eq.f32.partialorder %v1475, 0.0
        %v1556 = vand.u32 %v1475, 2147483648
        %v1557 = vsel %vm1555, %v1556, %v1554
        %v1558 = vrsqrt.pop %v1476
        %v1559 = vmul.f32 %v1476, %v1558
        %vm1560 = vcmp.eq.f32.partialorder %v1476, inf
        %v1561 = vsel %vm1560, %v1476, %v1559
        %vm1562 = vcmp.eq.f32.partialorder %v1476, 0.0
        %v1563 = vand.u32 %v1476, 2147483648
        %v1564 = vsel %vm1562, %v1563, %v1561
        %v1565 = vrsqrt.pop %v1477
        %v1566 = vmul.f32 %v1477, %v1565
        %vm1567 = vcmp.eq.f32.partialorder %v1477, inf
        %v1568 = vsel %vm1567, %v1477, %v1566
        %vm1569 = vcmp.eq.f32.partialorder %v1477, 0.0
        %v1570 = vand.u32 %v1477, 2147483648
        %v1571 = vsel %vm1569, %v1570, %v1568
        %v1572 = vrsqrt.pop %v1478
        %v1573 = vmul.f32 %v1478, %v1572
        %vm1574 = vcmp.eq.f32.partialorder %v1478, inf
        %v1575 = vsel %vm1574, %v1478, %v1573
        %vm1576 = vcmp.eq.f32.partialorder %v1478, 0.0
        %v1577 = vand.u32 %v1478, 2147483648
        %v1578 = vsel %vm1576, %v1577, %v1575
        %v1579 = vrsqrt.pop %v1479
        %v1580 = vmul.f32 %v1479, %v1579
        %vm1581 = vcmp.eq.f32.partialorder %v1479, inf
        %v1582 = vsel %vm1581, %v1479, %v1580
        %vm1583 = vcmp.eq.f32.partialorder %v1479, 0.0
        %v1584 = vand.u32 %v1479, 2147483648
        %v1585 = vsel %vm1583, %v1584, %v1582
        %v1586 = vrsqrt.pop %v1480
        %v1587 = vmul.f32 %v1480, %v1586
        %vm1588 = vcmp.eq.f32.partialorder %v1480, inf
        %v1589 = vsel %vm1588, %v1480, %v1587
        %vm1590 = vcmp.eq.f32.partialorder %v1480, 0.0
        %v1591 = vand.u32 %v1480, 2147483648
        %v1592 = vsel %vm1590, %v1591, %v1589
        %v1594 = vlaneseq
        %v1595 = vshrl.u32 %v1594, 7
        %v1596 = vsub.s32 0, %v1595
        %v1597 = vrot.slane %v1350, %v1596
        %v1599 = vmul.f32 %v1597, %v1401
        %v1600 = vmul.f32 %v1597, %v1402
        %v1601 = vmul.f32 %v1597, %v1403
        %v1602 = vmul.f32 %v1597, %v1404
        %v1603 = vmul.f32 %v1597, %v1405
        %v1604 = vmul.f32 %v1597, %v1406
        %v1605 = vmul.f32 %v1597, %v1407
        %v1606 = vmul.f32 %v1597, %v1408
        %v1607 = vmul.f32 %v1597, %v1409
        %v1608 = vmul.f32 %v1597, %v1410
        %v1609 = vmul.f32 %v1597, %v1411
        %v1610 = vmul.f32 %v1597, %v1412
        %v1611 = vmul.f32 %v1597, %v1413
        %v1612 = vmul.f32 %v1597, %v1414
        %v1613 = vmul.f32 %v1597, %v1415
        %v1614 = vmul.f32 %v1597, %v1416
        %v1615 = vadd.f32 %v1487, 1e-06
        %v1616 = vadd.f32 %v1494, 1e-06
        %v1617 = vadd.f32 %v1501, 1e-06
        %v1618 = vadd.f32 %v1508, 1e-06
        %v1619 = vadd.f32 %v1515, 1e-06
        %v1620 = vadd.f32 %v1522, 1e-06
        %v1621 = vadd.f32 %v1529, 1e-06
        %v1622 = vadd.f32 %v1536, 1e-06
        %v1623 = vadd.f32 %v1543, 1e-06
        %v1624 = vadd.f32 %v1550, 1e-06
        %v1625 = vadd.f32 %v1557, 1e-06
        %v1626 = vadd.f32 %v1564, 1e-06
        %v1627 = vadd.f32 %v1571, 1e-06
        %v1628 = vadd.f32 %v1578, 1e-06
        %v1629 = vadd.f32 %v1585, 1e-06
        %v1630 = vadd.f32 %v1592, 1e-06
        %v1631 = vrcp.pop %v1615
        %v1632 = vmul.f32 %v1599, %v1631
        %v1633 = vrcp.pop %v1616
        %v1634 = vmul.f32 %v1600, %v1633
        %v1635 = vrcp.pop %v1617
        %v1636 = vmul.f32 %v1601, %v1635
        %v1637 = vrcp.pop %v1618
        %v1638 = vmul.f32 %v1602, %v1637
        %v1639 = vrcp.pop %v1619
        %v1640 = vmul.f32 %v1603, %v1639
        %v1641 = vrcp.pop %v1620
        %v1642 = vmul.f32 %v1604, %v1641
        %v1643 = vrcp.pop %v1621
        %v1644 = vmul.f32 %v1605, %v1643
        %v1645 = vrcp.pop %v1622
        %v1646 = vmul.f32 %v1606, %v1645
        %v1647 = vrcp.pop %v1623
        %v1648 = vmul.f32 %v1607, %v1647
        %v1649 = vrcp.pop %v1624
        %v1650 = vmul.f32 %v1608, %v1649
        %v1651 = vrcp.pop %v1625
        %v1652 = vmul.f32 %v1609, %v1651
        %v1653 = vrcp.pop %v1626
        %v1654 = vmul.f32 %v1610, %v1653
        %v1655 = vrcp.pop %v1627
        %v1656 = vmul.f32 %v1611, %v1655
        %v1657 = vrcp.pop %v1628
        %v1658 = vmul.f32 %v1612, %v1657
        %v1659 = vrcp.pop %v1629
        %v1660 = vmul.f32 %v1613, %v1659
        %v1661 = vrcp.pop %v1630
        %v1662 = vmul.f32 %v1614, %v1661
        %v1664 = vlaneseq
        %v1665 = vshrl.u32 %v1664, 7
        %v1666 = vsub.s32 0, %v1665
        %v1667 = vrot.slane %v1352, %v1666
        %v1669 = vadd.f32 %v1632, %v1667
        %v1670 = vadd.f32 %v1634, %v1667
        %v1671 = vadd.f32 %v1636, %v1667
        %v1672 = vadd.f32 %v1638, %v1667
        %v1673 = vadd.f32 %v1640, %v1667
        %v1674 = vadd.f32 %v1642, %v1667
        %v1675 = vadd.f32 %v1644, %v1667
        %v1676 = vadd.f32 %v1646, %v1667
        %v1677 = vadd.f32 %v1648, %v1667
        %v1678 = vadd.f32 %v1650, %v1667
        %v1679 = vadd.f32 %v1652, %v1667
        %v1680 = vadd.f32 %v1654, %v1667
        %v1681 = vadd.f32 %v1656, %v1667
        %v1682 = vadd.f32 %v1658, %v1667
        %v1683 = vadd.f32 %v1660, %v1667
        %v1684 = vadd.f32 %v1662, %v1667
        %v1685 = vpack.c.bf16 %v1670, %v1669
        %v1686 = vpack.c.bf16 %v1672, %v1671
        %v1687 = vpack.c.bf16 %v1674, %v1673
        %v1688 = vpack.c.bf16 %v1676, %v1675
        %v1689 = vpack.c.bf16 %v1678, %v1677
        %v1690 = vpack.c.bf16 %v1680, %v1679
        %v1691 = vpack.c.bf16 %v1682, %v1681
        %v1692 = vpack.c.bf16 %v1684, %v1683
        %s1693 = scalar_lea.vmem [#allocation7], 128
        %v1694 = vld [vmem:[%s1693] sm:$0xf]
        %v1695 = vld [vmem:[%s1693 + $0x4] sm:$0xf]
        %v1696 = vld [vmem:[%s1693 + $0x8] sm:$0xf]
        %v1697 = vld [vmem:[%s1693 + $0xc] sm:$0xf]
        %v1698 = vld [vmem:[%s1693 + $0x10] sm:$0xf]
        %v1699 = vld [vmem:[%s1693 + $0x14] sm:$0xf]
        %v1700 = vld [vmem:[%s1693 + $0x18] sm:$0xf]
        %v1701 = vld [vmem:[%s1693 + $0x1c] sm:$0xf]
        %v1702 = vld [vmem:[%s1693 + $0x20] sm:$0xf]
        %v1703 = vld [vmem:[%s1693 + $0x24] sm:$0xf]
        %v1704 = vld [vmem:[%s1693 + $0x28] sm:$0xf]
        %v1705 = vld [vmem:[%s1693 + $0x2c] sm:$0xf]
        %v1706 = vld [vmem:[%s1693 + $0x30] sm:$0xf]
        %v1707 = vld [vmem:[%s1693 + $0x34] sm:$0xf]
        %v1708 = vld [vmem:[%s1693 + $0x38] sm:$0xf]
        %v1709 = vld [vmem:[%s1693 + $0x3c] sm:$0xf]
        %s1710 = scalar_lea.vmem %s4, 2
        %v1711 = vld [vmem:[%s1710] sm:$0x1]
        %v1713 = vlaneseq
        %v1714 = vshrl.u32 %v1713, 7
        %v1715 = vsub.s32 0, %v1714
        %v1716 = vrot.slane %v1711, %v1715
        %v1734 = vunpack.c.l.b16 %v1694
        %v1735 = vunpack.c.l.b16 %v1695
        %v1736 = vunpack.c.l.b16 %v1696
        %v1737 = vunpack.c.l.b16 %v1697
        %v1738 = vunpack.c.l.b16 %v1698
        %v1739 = vunpack.c.l.b16 %v1699
        %v1740 = vunpack.c.l.b16 %v1700
        %v1741 = vunpack.c.l.b16 %v1701
        %v1742 = vunpack.c.l.b16 %v1702
        %v1743 = vunpack.c.l.b16 %v1703
        %v1744 = vunpack.c.l.b16 %v1704
        %v1745 = vunpack.c.l.b16 %v1705
        %v1746 = vunpack.c.l.b16 %v1706
        %v1747 = vunpack.c.l.b16 %v1707
        %v1748 = vunpack.c.l.b16 %v1708
        %v1749 = vunpack.c.l.b16 %v1709
        %v1750 = vpack.c.b16 %v1735, %v1734
        %v1751 = vpack.c.b16 %v1737, %v1736
        %v1752 = vpack.c.b16 %v1739, %v1738
        %v1753 = vpack.c.b16 %v1741, %v1740
        %v1754 = vpack.c.b16 %v1743, %v1742
        %v1755 = vpack.c.b16 %v1745, %v1744
        %v1756 = vpack.c.b16 %v1747, %v1746
        %v1757 = vpack.c.b16 %v1749, %v1748
        %1766 = vmatprep.subr.bf16.mxu0 0
        %1767 = vmatpush1.bf16.msra.mxu0 %v1750
        %1768 = vmatprep.subr.bf16.mxu0 0
        %1769 = vmatpush1.bf16.msra.mxu0 %v1751
        %1770 = vmatprep.subr.bf16.mxu0 0
        %1771 = vmatpush1.bf16.msra.mxu0 %v1752
        %1772 = vmatprep.subr.bf16.mxu0 0
        %1773 = vmatpush1.bf16.msra.mxu0 %v1753
        %1774 = vmatprep.subr.bf16.mxu0 0
        %1775 = vmatpush1.bf16.msra.mxu0 %v1754
        %1776 = vmatprep.subr.bf16.mxu0 0
        %1777 = vmatpush1.bf16.msra.mxu0 %v1755
        %1778 = vmatprep.subr.bf16.mxu0 0
        %1779 = vmatpush1.bf16.msra.mxu0 %v1756
        %1780 = vmatprep.subr.bf16.mxu0 0
        %1781 = vmatpush1.bf16.msra.mxu0 %v1757
        %1782 = vmatprep.subr.bf16.mxu0 0
        %1783 = vmatpush1.bf16.msra.mxu0 0
        %1784 = vmatprep.subr.bf16.mxu0 0
        %1785 = vmatpush1.bf16.msra.mxu0 0
        %1786 = vmatprep.subr.bf16.mxu0 0
        %1787 = vmatpush1.bf16.msra.mxu0 0
        %1788 = vmatprep.subr.bf16.mxu0 0
        %1789 = vmatpush1.bf16.msra.mxu0 0
        %1790 = vmatprep.subr.bf16.mxu0 0
        %1791 = vmatpush1.bf16.msra.mxu0 0
        %1792 = vmatprep.subr.bf16.mxu0 0
        %1793 = vmatpush1.bf16.msra.mxu0 0
        %1794 = vmatprep.subr.bf16.mxu0 0
        %1795 = vmatpush1.bf16.msra.mxu0 0
        %1796 = vmatprep.subr.bf16.mxu0 0
        %1797 = vmatpush1.bf16.msra.mxu0 0
        %1798 = vmatprep.mubr.bf16.mxu0 0
        %1799 = vmatmul.mubr.bf16.gmra.mrb[0].mxu0 %v1685
        %v1800 = vpop.f32.mrb[0].mxu0
        %v1801 = vadd.f32 %v1716, %v1800
        %v1802 = vpop.f32.mrb[0].mxu0
        %v1803 = vpop.f32.mrb[0].mxu0
        %v1804 = vadd.f32 %v1716, %v1803
        %v1805 = vpop.f32.mrb[0].mxu0
        %1806 = vmatprep.mubr.bf16.mxu0 0
        %1807 = vmatmul.mubr.bf16.gmra.mrb[0].mxu0 %v1686
        %v1808 = vpop.f32.mrb[0].mxu0
        %v1809 = vadd.f32 %v1716, %v1808
        %v1810 = vpop.f32.mrb[0].mxu0
        %v1811 = vpop.f32.mrb[0].mxu0
        %v1812 = vadd.f32 %v1716, %v1811
        %v1813 = vpop.f32.mrb[0].mxu0
        %1814 = vmatprep.mubr.bf16.mxu0 0
        %1815 = vmatmul.mubr.bf16.gmra.mrb[0].mxu0 %v1687
        %v1816 = vpop.f32.mrb[0].mxu0
        %v1817 = vadd.f32 %v1716, %v1816
        %v1818 = vpop.f32.mrb[0].mxu0
        %v1819 = vpop.f32.mrb[0].mxu0
        %v1820 = vadd.f32 %v1716, %v1819
        %v1821 = vpop.f32.mrb[0].mxu0
        %1822 = vmatprep.mubr.bf16.mxu0 0
        %1823 = vmatmul.mubr.bf16.gmra.mrb[0].mxu0 %v1688
        %v1824 = vpop.f32.mrb[0].mxu0
        %v1825 = vadd.f32 %v1716, %v1824
        %v1826 = vpop.f32.mrb[0].mxu0
        %v1827 = vpop.f32.mrb[0].mxu0
        %v1828 = vadd.f32 %v1716, %v1827
        %v1829 = vpop.f32.mrb[0].mxu0
        %1830 = vmatprep.mubr.bf16.mxu0 0
        %1831 = vmatmul.mubr.bf16.gmra.mrb[0].mxu0 %v1689
        %v1832 = vpop.f32.mrb[0].mxu0
        %v1833 = vadd.f32 %v1716, %v1832
        %v1834 = vpop.f32.mrb[0].mxu0
        %v1835 = vpop.f32.mrb[0].mxu0
        %v1836 = vadd.f32 %v1716, %v1835
        %v1837 = vpop.f32.mrb[0].mxu0
        %1838 = vmatprep.mubr.bf16.mxu0 0
        %1839 = vmatmul.mubr.bf16.gmra.mrb[0].mxu0 %v1690
        %v1840 = vpop.f32.mrb[0].mxu0
        %v1841 = vadd.f32 %v1716, %v1840
        %v1842 = vpop.f32.mrb[0].mxu0
        %v1843 = vpop.f32.mrb[0].mxu0
        %v1844 = vadd.f32 %v1716, %v1843
        %v1845 = vpop.f32.mrb[0].mxu0
        %1846 = vmatprep.mubr.bf16.mxu0 0
        %1847 = vmatmul.mubr.bf16.gmra.mrb[0].mxu0 %v1691
        %v1848 = vpop.f32.mrb[0].mxu0
        %v1849 = vadd.f32 %v1716, %v1848
        %v1850 = vpop.f32.mrb[0].mxu0
        %v1851 = vpop.f32.mrb[0].mxu0
        %v1852 = vadd.f32 %v1716, %v1851
        %v1853 = vpop.f32.mrb[0].mxu0
        %1854 = vmatprep.mubr.bf16.mxu0 0
        %1855 = vmatmul.mubr.bf16.gmra.mrb[0].mxu0 %v1692
        %v1856 = vpop.f32.mrb[0].mxu0
        %v1857 = vadd.f32 %v1716, %v1856
        %v1858 = vpop.f32.mrb[0].mxu0
        %v1859 = vpop.f32.mrb[0].mxu0
        %v1860 = vadd.f32 %v1716, %v1859
        %v1861 = vpop.f32.mrb[0].mxu0
        %1862 = vdwg.mxu0
        %v1863 = vadd.f32 %v1333, %v1801
        %v1864 = vadd.f32 %v1334, %v1804
        %v1865 = vadd.f32 %v1335, %v1809
        %v1866 = vadd.f32 %v1336, %v1812
        %v1867 = vadd.f32 %v1337, %v1817
        %v1868 = vadd.f32 %v1338, %v1820
        %v1869 = vadd.f32 %v1339, %v1825
        %v1870 = vadd.f32 %v1340, %v1828
        %v1871 = vadd.f32 %v1341, %v1833
        %v1872 = vadd.f32 %v1342, %v1836
        %v1873 = vadd.f32 %v1343, %v1841
        %v1874 = vadd.f32 %v1344, %v1844
        %v1875 = vadd.f32 %v1345, %v1849
        %v1876 = vadd.f32 %v1346, %v1852
        %v1877 = vadd.f32 %v1347, %v1857
        %v1878 = vadd.f32 %v1348, %v1860
        %s1879 = scalar_lea.vmem %s1, 3
        %v1880 = vld [vmem:[%s1879] sm:$0x1]
        %s1881 = scalar_lea.vmem [#allocation5], 3
        %v1882 = vld [vmem:[%s1881] sm:$0x1]
        %1883 = vadd.xlane.f32.xlu0 %v1863
        %v1884 = vpop.xlane.xlu0 %1883
        %1885 = vadd.xlane.f32.xlu0 %v1864
        %v1886 = vpop.xlane.xlu0 %1885
        %1887 = vadd.xlane.f32.xlu0 %v1865
        %v1888 = vpop.xlane.xlu0 %1887
        %1889 = vadd.xlane.f32.xlu0 %v1866
        %v1890 = vpop.xlane.xlu0 %1889
        %1891 = vadd.xlane.f32.xlu0 %v1867
        %v1892 = vpop.xlane.xlu0 %1891
        %1893 = vadd.xlane.f32.xlu0 %v1868
        %v1894 = vpop.xlane.xlu0 %1893
        %1895 = vadd.xlane.f32.xlu0 %v1869
        %v1896 = vpop.xlane.xlu0 %1895
        %1897 = vadd.xlane.f32.xlu0 %v1870
        %v1898 = vpop.xlane.xlu0 %1897
        %1899 = vadd.xlane.f32.xlu0 %v1871
        %v1900 = vpop.xlane.xlu0 %1899
        %1901 = vadd.xlane.f32.xlu0 %v1872
        %v1902 = vpop.xlane.xlu0 %1901
        %1903 = vadd.xlane.f32.xlu0 %v1873
        %v1904 = vpop.xlane.xlu0 %1903
        %1905 = vadd.xlane.f32.xlu0 %v1874
        %v1906 = vpop.xlane.xlu0 %1905
        %1907 = vadd.xlane.f32.xlu0 %v1875
        %v1908 = vpop.xlane.xlu0 %1907
        %1909 = vadd.xlane.f32.xlu0 %v1876
        %v1910 = vpop.xlane.xlu0 %1909
        %1911 = vadd.xlane.f32.xlu0 %v1877
        %v1912 = vpop.xlane.xlu0 %1911
        %1913 = vadd.xlane.f32.xlu0 %v1878
        %v1914 = vpop.xlane.xlu0 %1913
        %v1915 = vmul.f32 %v1884, %v325
        %v1916 = vmul.f32 %v1886, %v325
        %v1917 = vmul.f32 %v1888, %v325
        %v1918 = vmul.f32 %v1890, %v325
        %v1919 = vmul.f32 %v1892, %v325
        %v1920 = vmul.f32 %v1894, %v325
        %v1921 = vmul.f32 %v1896, %v325
        %v1922 = vmul.f32 %v1898, %v325
        %v1923 = vmul.f32 %v1900, %v325
        %v1924 = vmul.f32 %v1902, %v325
        %v1925 = vmul.f32 %v1904, %v325
        %v1926 = vmul.f32 %v1906, %v325
        %v1927 = vmul.f32 %v1908, %v325
        %v1928 = vmul.f32 %v1910, %v325
        %v1929 = vmul.f32 %v1912, %v325
        %v1930 = vmul.f32 %v1914, %v325
        %v1931 = vsub.f32 %v1863, %v1915
        %v1932 = vsub.f32 %v1864, %v1916
        %v1933 = vsub.f32 %v1865, %v1917
        %v1934 = vsub.f32 %v1866, %v1918
        %v1935 = vsub.f32 %v1867, %v1919
        %v1936 = vsub.f32 %v1868, %v1920
        %v1937 = vsub.f32 %v1869, %v1921
        %v1938 = vsub.f32 %v1870, %v1922
        %v1939 = vsub.f32 %v1871, %v1923
        %v1940 = vsub.f32 %v1872, %v1924
        %v1941 = vsub.f32 %v1873, %v1925
        %v1942 = vsub.f32 %v1874, %v1926
        %v1943 = vsub.f32 %v1875, %v1927
        %v1944 = vsub.f32 %v1876, %v1928
        %v1945 = vsub.f32 %v1877, %v1929
        %v1946 = vsub.f32 %v1878, %v1930
        %v1947 = vmul.f32 %v1931, %v1931
        %v1948 = vmul.f32 %v1932, %v1932
        %v1949 = vmul.f32 %v1933, %v1933
        %v1950 = vmul.f32 %v1934, %v1934
        %v1951 = vmul.f32 %v1935, %v1935
        %v1952 = vmul.f32 %v1936, %v1936
        %v1953 = vmul.f32 %v1937, %v1937
        %v1954 = vmul.f32 %v1938, %v1938
        %v1955 = vmul.f32 %v1939, %v1939
        %v1956 = vmul.f32 %v1940, %v1940
        %v1957 = vmul.f32 %v1941, %v1941
        %v1958 = vmul.f32 %v1942, %v1942
        %v1959 = vmul.f32 %v1943, %v1943
        %v1960 = vmul.f32 %v1944, %v1944
        %v1961 = vmul.f32 %v1945, %v1945
        %v1962 = vmul.f32 %v1946, %v1946
        %1963 = vadd.xlane.f32.xlu0 %v1947
        %v1964 = vpop.xlane.xlu0 %1963
        %1965 = vadd.xlane.f32.xlu0 %v1948
        %v1966 = vpop.xlane.xlu0 %1965
        %1967 = vadd.xlane.f32.xlu0 %v1949
        %v1968 = vpop.xlane.xlu0 %1967
        %1969 = vadd.xlane.f32.xlu0 %v1950
        %v1970 = vpop.xlane.xlu0 %1969
        %1971 = vadd.xlane.f32.xlu0 %v1951
        %v1972 = vpop.xlane.xlu0 %1971
        %1973 = vadd.xlane.f32.xlu0 %v1952
        %v1974 = vpop.xlane.xlu0 %1973
        %1975 = vadd.xlane.f32.xlu0 %v1953
        %v1976 = vpop.xlane.xlu0 %1975
        %1977 = vadd.xlane.f32.xlu0 %v1954
        %v1978 = vpop.xlane.xlu0 %1977
        %1979 = vadd.xlane.f32.xlu0 %v1955
        %v1980 = vpop.xlane.xlu0 %1979
        %1981 = vadd.xlane.f32.xlu0 %v1956
        %v1982 = vpop.xlane.xlu0 %1981
        %1983 = vadd.xlane.f32.xlu0 %v1957
        %v1984 = vpop.xlane.xlu0 %1983
        %1985 = vadd.xlane.f32.xlu0 %v1958
        %v1986 = vpop.xlane.xlu0 %1985
        %1987 = vadd.xlane.f32.xlu0 %v1959
        %v1988 = vpop.xlane.xlu0 %1987
        %1989 = vadd.xlane.f32.xlu0 %v1960
        %v1990 = vpop.xlane.xlu0 %1989
        %1991 = vadd.xlane.f32.xlu0 %v1961
        %v1992 = vpop.xlane.xlu0 %1991
        %1993 = vadd.xlane.f32.xlu0 %v1962
        %v1994 = vpop.xlane.xlu0 %1993
        %v1995 = vmul.f32 %v1964, %v406
        %v1996 = vmul.f32 %v1966, %v406
        %v1997 = vmul.f32 %v1968, %v406
        %v1998 = vmul.f32 %v1970, %v406
        %v1999 = vmul.f32 %v1972, %v406
        %v2000 = vmul.f32 %v1974, %v406
        %v2001 = vmul.f32 %v1976, %v406
        %v2002 = vmul.f32 %v1978, %v406
        %v2003 = vmul.f32 %v1980, %v406
        %v2004 = vmul.f32 %v1982, %v406
        %v2005 = vmul.f32 %v1984, %v406
        %v2006 = vmul.f32 %v1986, %v406
        %v2007 = vmul.f32 %v1988, %v406
        %v2008 = vmul.f32 %v1990, %v406
        %v2009 = vmul.f32 %v1992, %v406
        %v2010 = vmul.f32 %v1994, %v406
        %v2011 = vrsqrt.pop %v1995
        %v2012 = vmul.f32 %v1995, %v2011
        %vm2013 = vcmp.eq.f32.partialorder %v1995, inf
        %v2014 = vsel %vm2013, %v1995, %v2012
        %vm2015 = vcmp.eq.f32.partialorder %v1995, 0.0
        %v2016 = vand.u32 %v1995, 2147483648
        %v2017 = vsel %vm2015, %v2016, %v2014
        %v2018 = vrsqrt.pop %v1996
        %v2019 = vmul.f32 %v1996, %v2018
        %vm2020 = vcmp.eq.f32.partialorder %v1996, inf
        %v2021 = vsel %vm2020, %v1996, %v2019
        %vm2022 = vcmp.eq.f32.partialorder %v1996, 0.0
        %v2023 = vand.u32 %v1996, 2147483648
        %v2024 = vsel %vm2022, %v2023, %v2021
        %v2025 = vrsqrt.pop %v1997
        %v2026 = vmul.f32 %v1997, %v2025
        %vm2027 = vcmp.eq.f32.partialorder %v1997, inf
        %v2028 = vsel %vm2027, %v1997, %v2026
        %vm2029 = vcmp.eq.f32.partialorder %v1997, 0.0
        %v2030 = vand.u32 %v1997, 2147483648
        %v2031 = vsel %vm2029, %v2030, %v2028
        %v2032 = vrsqrt.pop %v1998
        %v2033 = vmul.f32 %v1998, %v2032
        %vm2034 = vcmp.eq.f32.partialorder %v1998, inf
        %v2035 = vsel %vm2034, %v1998, %v2033
        %vm2036 = vcmp.eq.f32.partialorder %v1998, 0.0
        %v2037 = vand.u32 %v1998, 2147483648
        %v2038 = vsel %vm2036, %v2037, %v2035
        %v2039 = vrsqrt.pop %v1999
        %v2040 = vmul.f32 %v1999, %v2039
        %vm2041 = vcmp.eq.f32.partialorder %v1999, inf
        %v2042 = vsel %vm2041, %v1999, %v2040
        %vm2043 = vcmp.eq.f32.partialorder %v1999, 0.0
        %v2044 = vand.u32 %v1999, 2147483648
        %v2045 = vsel %vm2043, %v2044, %v2042
        %v2046 = vrsqrt.pop %v2000
        %v2047 = vmul.f32 %v2000, %v2046
        %vm2048 = vcmp.eq.f32.partialorder %v2000, inf
        %v2049 = vsel %vm2048, %v2000, %v2047
        %vm2050 = vcmp.eq.f32.partialorder %v2000, 0.0
        %v2051 = vand.u32 %v2000, 2147483648
        %v2052 = vsel %vm2050, %v2051, %v2049
        %v2053 = vrsqrt.pop %v2001
        %v2054 = vmul.f32 %v2001, %v2053
        %vm2055 = vcmp.eq.f32.partialorder %v2001, inf
        %v2056 = vsel %vm2055, %v2001, %v2054
        %vm2057 = vcmp.eq.f32.partialorder %v2001, 0.0
        %v2058 = vand.u32 %v2001, 2147483648
        %v2059 = vsel %vm2057, %v2058, %v2056
        %v2060 = vrsqrt.pop %v2002
        %v2061 = vmul.f32 %v2002, %v2060
        %vm2062 = vcmp.eq.f32.partialorder %v2002, inf
        %v2063 = vsel %vm2062, %v2002, %v2061
        %vm2064 = vcmp.eq.f32.partialorder %v2002, 0.0
        %v2065 = vand.u32 %v2002, 2147483648
        %v2066 = vsel %vm2064, %v2065, %v2063
        %v2067 = vrsqrt.pop %v2003
        %v2068 = vmul.f32 %v2003, %v2067
        %vm2069 = vcmp.eq.f32.partialorder %v2003, inf
        %v2070 = vsel %vm2069, %v2003, %v2068
        %vm2071 = vcmp.eq.f32.partialorder %v2003, 0.0
        %v2072 = vand.u32 %v2003, 2147483648
        %v2073 = vsel %vm2071, %v2072, %v2070
        %v2074 = vrsqrt.pop %v2004
        %v2075 = vmul.f32 %v2004, %v2074
        %vm2076 = vcmp.eq.f32.partialorder %v2004, inf
        %v2077 = vsel %vm2076, %v2004, %v2075
        %vm2078 = vcmp.eq.f32.partialorder %v2004, 0.0
        %v2079 = vand.u32 %v2004, 2147483648
        %v2080 = vsel %vm2078, %v2079, %v2077
        %v2081 = vrsqrt.pop %v2005
        %v2082 = vmul.f32 %v2005, %v2081
        %vm2083 = vcmp.eq.f32.partialorder %v2005, inf
        %v2084 = vsel %vm2083, %v2005, %v2082
        %vm2085 = vcmp.eq.f32.partialorder %v2005, 0.0
        %v2086 = vand.u32 %v2005, 2147483648
        %v2087 = vsel %vm2085, %v2086, %v2084
        %v2088 = vrsqrt.pop %v2006
        %v2089 = vmul.f32 %v2006, %v2088
        %vm2090 = vcmp.eq.f32.partialorder %v2006, inf
        %v2091 = vsel %vm2090, %v2006, %v2089
        %vm2092 = vcmp.eq.f32.partialorder %v2006, 0.0
        %v2093 = vand.u32 %v2006, 2147483648
        %v2094 = vsel %vm2092, %v2093, %v2091
        %v2095 = vrsqrt.pop %v2007
        %v2096 = vmul.f32 %v2007, %v2095
        %vm2097 = vcmp.eq.f32.partialorder %v2007, inf
        %v2098 = vsel %vm2097, %v2007, %v2096
        %vm2099 = vcmp.eq.f32.partialorder %v2007, 0.0
        %v2100 = vand.u32 %v2007, 2147483648
        %v2101 = vsel %vm2099, %v2100, %v2098
        %v2102 = vrsqrt.pop %v2008
        %v2103 = vmul.f32 %v2008, %v2102
        %vm2104 = vcmp.eq.f32.partialorder %v2008, inf
        %v2105 = vsel %vm2104, %v2008, %v2103
        %vm2106 = vcmp.eq.f32.partialorder %v2008, 0.0
        %v2107 = vand.u32 %v2008, 2147483648
        %v2108 = vsel %vm2106, %v2107, %v2105
        %v2109 = vrsqrt.pop %v2009
        %v2110 = vmul.f32 %v2009, %v2109
        %vm2111 = vcmp.eq.f32.partialorder %v2009, inf
        %v2112 = vsel %vm2111, %v2009, %v2110
        %vm2113 = vcmp.eq.f32.partialorder %v2009, 0.0
        %v2114 = vand.u32 %v2009, 2147483648
        %v2115 = vsel %vm2113, %v2114, %v2112
        %v2116 = vrsqrt.pop %v2010
        %v2117 = vmul.f32 %v2010, %v2116
        %vm2118 = vcmp.eq.f32.partialorder %v2010, inf
        %v2119 = vsel %vm2118, %v2010, %v2117
        %vm2120 = vcmp.eq.f32.partialorder %v2010, 0.0
        %v2121 = vand.u32 %v2010, 2147483648
        %v2122 = vsel %vm2120, %v2121, %v2119
        %v2124 = vlaneseq
        %v2125 = vshrl.u32 %v2124, 7
        %v2126 = vsub.s32 0, %v2125
        %v2127 = vrot.slane %v1880, %v2126
        %v2129 = vmul.f32 %v2127, %v1931
        %v2130 = vmul.f32 %v2127, %v1932
        %v2131 = vmul.f32 %v2127, %v1933
        %v2132 = vmul.f32 %v2127, %v1934
        %v2133 = vmul.f32 %v2127, %v1935
        %v2134 = vmul.f32 %v2127, %v1936
        %v2135 = vmul.f32 %v2127, %v1937
        %v2136 = vmul.f32 %v2127, %v1938
        %v2137 = vmul.f32 %v2127, %v1939
        %v2138 = vmul.f32 %v2127, %v1940
        %v2139 = vmul.f32 %v2127, %v1941
        %v2140 = vmul.f32 %v2127, %v1942
        %v2141 = vmul.f32 %v2127, %v1943
        %v2142 = vmul.f32 %v2127, %v1944
        %v2143 = vmul.f32 %v2127, %v1945
        %v2144 = vmul.f32 %v2127, %v1946
        %v2145 = vadd.f32 %v2017, 1e-06
        %v2146 = vadd.f32 %v2024, 1e-06
        %v2147 = vadd.f32 %v2031, 1e-06
        %v2148 = vadd.f32 %v2038, 1e-06
        %v2149 = vadd.f32 %v2045, 1e-06
        %v2150 = vadd.f32 %v2052, 1e-06
        %v2151 = vadd.f32 %v2059, 1e-06
        %v2152 = vadd.f32 %v2066, 1e-06
        %v2153 = vadd.f32 %v2073, 1e-06
        %v2154 = vadd.f32 %v2080, 1e-06
        %v2155 = vadd.f32 %v2087, 1e-06
        %v2156 = vadd.f32 %v2094, 1e-06
        %v2157 = vadd.f32 %v2101, 1e-06
        %v2158 = vadd.f32 %v2108, 1e-06
        %v2159 = vadd.f32 %v2115, 1e-06
        %v2160 = vadd.f32 %v2122, 1e-06
        %v2161 = vrcp.pop %v2145
        %v2162 = vmul.f32 %v2129, %v2161
        %v2163 = vrcp.pop %v2146
        %v2164 = vmul.f32 %v2130, %v2163
        %v2165 = vrcp.pop %v2147
        %v2166 = vmul.f32 %v2131, %v2165
        %v2167 = vrcp.pop %v2148
        %v2168 = vmul.f32 %v2132, %v2167
        %v2169 = vrcp.pop %v2149
        %v2170 = vmul.f32 %v2133, %v2169
        %v2171 = vrcp.pop %v2150
        %v2172 = vmul.f32 %v2134, %v2171
        %v2173 = vrcp.pop %v2151
        %v2174 = vmul.f32 %v2135, %v2173
        %v2175 = vrcp.pop %v2152
        %v2176 = vmul.f32 %v2136, %v2175
        %v2177 = vrcp.pop %v2153
        %v2178 = vmul.f32 %v2137, %v2177
        %v2179 = vrcp.pop %v2154
        %v2180 = vmul.f32 %v2138, %v2179
        %v2181 = vrcp.pop %v2155
        %v2182 = vmul.f32 %v2139, %v2181
        %v2183 = vrcp.pop %v2156
        %v2184 = vmul.f32 %v2140, %v2183
        %v2185 = vrcp.pop %v2157
        %v2186 = vmul.f32 %v2141, %v2185
        %v2187 = vrcp.pop %v2158
        %v2188 = vmul.f32 %v2142, %v2187
        %v2189 = vrcp.pop %v2159
        %v2190 = vmul.f32 %v2143, %v2189
        %v2191 = vrcp.pop %v2160
        %v2192 = vmul.f32 %v2144, %v2191
        %v2194 = vlaneseq
        %v2195 = vshrl.u32 %v2194, 7
        %v2196 = vsub.s32 0, %v2195
        %v2197 = vrot.slane %v1882, %v2196
        %v2199 = vadd.f32 %v2162, %v2197
        %v2200 = vadd.f32 %v2164, %v2197
        %v2201 = vadd.f32 %v2166, %v2197
        %v2202 = vadd.f32 %v2168, %v2197
        %v2203 = vadd.f32 %v2170, %v2197
        %v2204 = vadd.f32 %v2172, %v2197
        %v2205 = vadd.f32 %v2174, %v2197
        %v2206 = vadd.f32 %v2176, %v2197
        %v2207 = vadd.f32 %v2178, %v2197
        %v2208 = vadd.f32 %v2180, %v2197
        %v2209 = vadd.f32 %v2182, %v2197
        %v2210 = vadd.f32 %v2184, %v2197
        %v2211 = vadd.f32 %v2186, %v2197
        %v2212 = vadd.f32 %v2188, %v2197
        %v2213 = vadd.f32 %v2190, %v2197
        %v2214 = vadd.f32 %v2192, %v2197
        %v2215 = vpack.c.bf16 %v2200, %v2199
        %v2216 = vpack.c.bf16 %v2202, %v2201
        %v2217 = vpack.c.bf16 %v2204, %v2203
        %v2218 = vpack.c.bf16 %v2206, %v2205
        %v2219 = vpack.c.bf16 %v2208, %v2207
        %v2220 = vpack.c.bf16 %v2210, %v2209
        %v2221 = vpack.c.bf16 %v2212, %v2211
        %v2222 = vpack.c.bf16 %v2214, %v2213
        %s2223 = scalar_lea.vmem [#allocation7], 192
        %v2224 = vld [vmem:[%s2223] sm:$0xf]
        %v2225 = vld [vmem:[%s2223 + $0x4] sm:$0xf]
        %v2226 = vld [vmem:[%s2223 + $0x8] sm:$0xf]
        %v2227 = vld [vmem:[%s2223 + $0xc] sm:$0xf]
        %v2228 = vld [vmem:[%s2223 + $0x10] sm:$0xf]
        %v2229 = vld [vmem:[%s2223 + $0x14] sm:$0xf]
        %v2230 = vld [vmem:[%s2223 + $0x18] sm:$0xf]
        %v2231 = vld [vmem:[%s2223 + $0x1c] sm:$0xf]
        %v2232 = vld [vmem:[%s2223 + $0x20] sm:$0xf]
        %v2233 = vld [vmem:[%s2223 + $0x24] sm:$0xf]
        %v2234 = vld [vmem:[%s2223 + $0x28] sm:$0xf]
        %v2235 = vld [vmem:[%s2223 + $0x2c] sm:$0xf]
        %v2236 = vld [vmem:[%s2223 + $0x30] sm:$0xf]
        %v2237 = vld [vmem:[%s2223 + $0x34] sm:$0xf]
        %v2238 = vld [vmem:[%s2223 + $0x38] sm:$0xf]
        %v2239 = vld [vmem:[%s2223 + $0x3c] sm:$0xf]
        %s2240 = scalar_lea.vmem %s4, 3
        %v2241 = vld [vmem:[%s2240] sm:$0x1]
        %v2243 = vlaneseq
        %v2244 = vshrl.u32 %v2243, 7
        %v2245 = vsub.s32 0, %v2244
        %v2246 = vrot.slane %v2241, %v2245
        %v2264 = vunpack.c.l.b16 %v2224
        %v2265 = vunpack.c.l.b16 %v2225
        %v2266 = vunpack.c.l.b16 %v2226
        %v2267 = vunpack.c.l.b16 %v2227
        %v2268 = vunpack.c.l.b16 %v2228
        %v2269 = vunpack.c.l.b16 %v2229
        %v2270 = vunpack.c.l.b16 %v2230
        %v2271 = vunpack.c.l.b16 %v2231
        %v2272 = vunpack.c.l.b16 %v2232
        %v2273 = vunpack.c.l.b16 %v2233
        %v2274 = vunpack.c.l.b16 %v2234
        %v2275 = vunpack.c.l.b16 %v2235
        %v2276 = vunpack.c.l.b16 %v2236
        %v2277 = vunpack.c.l.b16 %v2237
        %v2278 = vunpack.c.l.b16 %v2238
        %v2279 = vunpack.c.l.b16 %v2239
        %v2280 = vpack.c.b16 %v2265, %v2264
        %v2281 = vpack.c.b16 %v2267, %v2266
        %v2282 = vpack.c.b16 %v2269, %v2268
        %v2283 = vpack.c.b16 %v2271, %v2270
        %v2284 = vpack.c.b16 %v2273, %v2272
        %v2285 = vpack.c.b16 %v2275, %v2274
        %v2286 = vpack.c.b16 %v2277, %v2276
        %v2287 = vpack.c.b16 %v2279, %v2278
        %2296 = vmatprep.subr.bf16.mxu0 0
        %2297 = vmatpush1.bf16.msra.mxu0 %v2280
        %2298 = vmatprep.subr.bf16.mxu0 0
        %2299 = vmatpush1.bf16.msra.mxu0 %v2281
        %2300 = vmatprep.subr.bf16.mxu0 0
        %2301 = vmatpush1.bf16.msra.mxu0 %v2282
        %2302 = vmatprep.subr.bf16.mxu0 0
        %2303 = vmatpush1.bf16.msra.mxu0 %v2283
        %2304 = vmatprep.subr.bf16.mxu0 0
        %2305 = vmatpush1.bf16.msra.mxu0 %v2284
        %2306 = vmatprep.subr.bf16.mxu0 0
        %2307 = vmatpush1.bf16.msra.mxu0 %v2285
        %2308 = vmatprep.subr.bf16.mxu0 0
        %2309 = vmatpush1.bf16.msra.mxu0 %v2286
        %2310 = vmatprep.subr.bf16.mxu0 0
        %2311 = vmatpush1.bf16.msra.mxu0 %v2287
        %2312 = vmatprep.subr.bf16.mxu0 0
        %2313 = vmatpush1.bf16.msra.mxu0 0
        %2314 = vmatprep.subr.bf16.mxu0 0
        %2315 = vmatpush1.bf16.msra.mxu0 0
        %2316 = vmatprep.subr.bf16.mxu0 0
        %2317 = vmatpush1.bf16.msra.mxu0 0
        %2318 = vmatprep.subr.bf16.mxu0 0
        %2319 = vmatpush1.bf16.msra.mxu0 0
        %2320 = vmatprep.subr.bf16.mxu0 0
        %2321 = vmatpush1.bf16.msra.mxu0 0
        %2322 = vmatprep.subr.bf16.mxu0 0
        %2323 = vmatpush1.bf16.msra.mxu0 0
        %2324 = vmatprep.subr.bf16.mxu0 0
        %2325 = vmatpush1.bf16.msra.mxu0 0
        %2326 = vmatprep.subr.bf16.mxu0 0
        %2327 = vmatpush1.bf16.msra.mxu0 0
        %2328 = vmatprep.mubr.bf16.mxu0 0
        %2329 = vmatmul.mubr.bf16.gmra.mrb[0].mxu0 %v2215
        %v2330 = vpop.f32.mrb[0].mxu0
        %v2331 = vadd.f32 %v2246, %v2330
        %v2332 = vpop.f32.mrb[0].mxu0
        %v2333 = vpop.f32.mrb[0].mxu0
        %v2334 = vadd.f32 %v2246, %v2333
        %v2335 = vpop.f32.mrb[0].mxu0
        %2336 = vmatprep.mubr.bf16.mxu0 0
        %2337 = vmatmul.mubr.bf16.gmra.mrb[0].mxu0 %v2216
        %v2338 = vpop.f32.mrb[0].mxu0
        %v2339 = vadd.f32 %v2246, %v2338
        %v2340 = vpop.f32.mrb[0].mxu0
        %v2341 = vpop.f32.mrb[0].mxu0
        %v2342 = vadd.f32 %v2246, %v2341
        %v2343 = vpop.f32.mrb[0].mxu0
        %2344 = vmatprep.mubr.bf16.mxu0 0
        %2345 = vmatmul.mubr.bf16.gmra.mrb[0].mxu0 %v2217
        %v2346 = vpop.f32.mrb[0].mxu0
        %v2347 = vadd.f32 %v2246, %v2346
        %v2348 = vpop.f32.mrb[0].mxu0
        %v2349 = vpop.f32.mrb[0].mxu0
        %v2350 = vadd.f32 %v2246, %v2349
        %v2351 = vpop.f32.mrb[0].mxu0
        %2352 = vmatprep.mubr.bf16.mxu0 0
        %2353 = vmatmul.mubr.bf16.gmra.mrb[0].mxu0 %v2218
        %v2354 = vpop.f32.mrb[0].mxu0
        %v2355 = vadd.f32 %v2246, %v2354
        %v2356 = vpop.f32.mrb[0].mxu0
        %v2357 = vpop.f32.mrb[0].mxu0
        %v2358 = vadd.f32 %v2246, %v2357
        %v2359 = vpop.f32.mrb[0].mxu0
        %2360 = vmatprep.mubr.bf16.mxu0 0
        %2361 = vmatmul.mubr.bf16.gmra.mrb[0].mxu0 %v2219
        %v2362 = vpop.f32.mrb[0].mxu0
        %v2363 = vadd.f32 %v2246, %v2362
        %v2364 = vpop.f32.mrb[0].mxu0
        %v2365 = vpop.f32.mrb[0].mxu0
        %v2366 = vadd.f32 %v2246, %v2365
        %v2367 = vpop.f32.mrb[0].mxu0
        %2368 = vmatprep.mubr.bf16.mxu0 0
        %2369 = vmatmul.mubr.bf16.gmra.mrb[0].mxu0 %v2220
        %v2370 = vpop.f32.mrb[0].mxu0
        %v2371 = vadd.f32 %v2246, %v2370
        %v2372 = vpop.f32.mrb[0].mxu0
        %v2373 = vpop.f32.mrb[0].mxu0
        %v2374 = vadd.f32 %v2246, %v2373
        %v2375 = vpop.f32.mrb[0].mxu0
        %2376 = vmatprep.mubr.bf16.mxu0 0
        %2377 = vmatmul.mubr.bf16.gmra.mrb[0].mxu0 %v2221
        %v2378 = vpop.f32.mrb[0].mxu0
        %v2379 = vadd.f32 %v2246, %v2378
        %v2380 = vpop.f32.mrb[0].mxu0
        %v2381 = vpop.f32.mrb[0].mxu0
        %v2382 = vadd.f32 %v2246, %v2381
        %v2383 = vpop.f32.mrb[0].mxu0
        %2384 = vmatprep.mubr.bf16.mxu0 0
        %2385 = vmatmul.mubr.bf16.gmra.mrb[0].mxu0 %v2222
        %v2386 = vpop.f32.mrb[0].mxu0
        %v2387 = vadd.f32 %v2246, %v2386
        %v2388 = vpop.f32.mrb[0].mxu0
        %v2389 = vpop.f32.mrb[0].mxu0
        %v2390 = vadd.f32 %v2246, %v2389
        %v2391 = vpop.f32.mrb[0].mxu0
        %2392 = vdwg.mxu0
        %v2393 = vadd.f32 %v1863, %v2331
        %v2394 = vadd.f32 %v1864, %v2334
        %v2395 = vadd.f32 %v1865, %v2339
        %v2396 = vadd.f32 %v1866, %v2342
        %v2397 = vadd.f32 %v1867, %v2347
        %v2398 = vadd.f32 %v1868, %v2350
        %v2399 = vadd.f32 %v1869, %v2355
        %v2400 = vadd.f32 %v1870, %v2358
        %v2401 = vadd.f32 %v1871, %v2363
        %v2402 = vadd.f32 %v1872, %v2366
        %v2403 = vadd.f32 %v1873, %v2371
        %v2404 = vadd.f32 %v1874, %v2374
        %v2405 = vadd.f32 %v1875, %v2379
        %v2406 = vadd.f32 %v1876, %v2382
        %v2407 = vadd.f32 %v1877, %v2387
        %v2408 = vadd.f32 %v1878, %v2390
        %s2409 = scalar_lea.vmem %s1, 4
        %v2410 = vld [vmem:[%s2409] sm:$0x1]
        %s2411 = scalar_lea.vmem [#allocation5], 4
        %v2412 = vld [vmem:[%s2411] sm:$0x1]
        %2413 = vadd.xlane.f32.xlu0 %v2393
        %v2414 = vpop.xlane.xlu0 %2413
        %2415 = vadd.xlane.f32.xlu0 %v2394
        %v2416 = vpop.xlane.xlu0 %2415
        %2417 = vadd.xlane.f32.xlu0 %v2395
        %v2418 = vpop.xlane.xlu0 %2417
        %2419 = vadd.xlane.f32.xlu0 %v2396
        %v2420 = vpop.xlane.xlu0 %2419
        %2421 = vadd.xlane.f32.xlu0 %v2397
        %v2422 = vpop.xlane.xlu0 %2421
        %2423 = vadd.xlane.f32.xlu0 %v2398
        %v2424 = vpop.xlane.xlu0 %2423
        %2425 = vadd.xlane.f32.xlu0 %v2399
        %v2426 = vpop.xlane.xlu0 %2425
        %2427 = vadd.xlane.f32.xlu0 %v2400
        %v2428 = vpop.xlane.xlu0 %2427
        %2429 = vadd.xlane.f32.xlu0 %v2401
        %v2430 = vpop.xlane.xlu0 %2429
        %2431 = vadd.xlane.f32.xlu0 %v2402
        %v2432 = vpop.xlane.xlu0 %2431
        %2433 = vadd.xlane.f32.xlu0 %v2403
        %v2434 = vpop.xlane.xlu0 %2433
        %2435 = vadd.xlane.f32.xlu0 %v2404
        %v2436 = vpop.xlane.xlu0 %2435
        %2437 = vadd.xlane.f32.xlu0 %v2405
        %v2438 = vpop.xlane.xlu0 %2437
        %2439 = vadd.xlane.f32.xlu0 %v2406
        %v2440 = vpop.xlane.xlu0 %2439
        %2441 = vadd.xlane.f32.xlu0 %v2407
        %v2442 = vpop.xlane.xlu0 %2441
        %2443 = vadd.xlane.f32.xlu0 %v2408
        %v2444 = vpop.xlane.xlu0 %2443
        %v2445 = vmul.f32 %v2414, %v325
        %v2446 = vmul.f32 %v2416, %v325
        %v2447 = vmul.f32 %v2418, %v325
        %v2448 = vmul.f32 %v2420, %v325
        %v2449 = vmul.f32 %v2422, %v325
        %v2450 = vmul.f32 %v2424, %v325
        %v2451 = vmul.f32 %v2426, %v325
        %v2452 = vmul.f32 %v2428, %v325
        %v2453 = vmul.f32 %v2430, %v325
        %v2454 = vmul.f32 %v2432, %v325
        %v2455 = vmul.f32 %v2434, %v325
        %v2456 = vmul.f32 %v2436, %v325
        %v2457 = vmul.f32 %v2438, %v325
        %v2458 = vmul.f32 %v2440, %v325
        %v2459 = vmul.f32 %v2442, %v325
        %v2460 = vmul.f32 %v2444, %v325
        %v2461 = vsub.f32 %v2393, %v2445
        %v2462 = vsub.f32 %v2394, %v2446
        %v2463 = vsub.f32 %v2395, %v2447
        %v2464 = vsub.f32 %v2396, %v2448
        %v2465 = vsub.f32 %v2397, %v2449
        %v2466 = vsub.f32 %v2398, %v2450
        %v2467 = vsub.f32 %v2399, %v2451
        %v2468 = vsub.f32 %v2400, %v2452
        %v2469 = vsub.f32 %v2401, %v2453
        %v2470 = vsub.f32 %v2402, %v2454
        %v2471 = vsub.f32 %v2403, %v2455
        %v2472 = vsub.f32 %v2404, %v2456
        %v2473 = vsub.f32 %v2405, %v2457
        %v2474 = vsub.f32 %v2406, %v2458
        %v2475 = vsub.f32 %v2407, %v2459
        %v2476 = vsub.f32 %v2408, %v2460
        %v2477 = vmul.f32 %v2461, %v2461
        %v2478 = vmul.f32 %v2462, %v2462
        %v2479 = vmul.f32 %v2463, %v2463
        %v2480 = vmul.f32 %v2464, %v2464
        %v2481 = vmul.f32 %v2465, %v2465
        %v2482 = vmul.f32 %v2466, %v2466
        %v2483 = vmul.f32 %v2467, %v2467
        %v2484 = vmul.f32 %v2468, %v2468
        %v2485 = vmul.f32 %v2469, %v2469
        %v2486 = vmul.f32 %v2470, %v2470
        %v2487 = vmul.f32 %v2471, %v2471
        %v2488 = vmul.f32 %v2472, %v2472
        %v2489 = vmul.f32 %v2473, %v2473
        %v2490 = vmul.f32 %v2474, %v2474
        %v2491 = vmul.f32 %v2475, %v2475
        %v2492 = vmul.f32 %v2476, %v2476
        %2493 = vadd.xlane.f32.xlu0 %v2477
        %v2494 = vpop.xlane.xlu0 %2493
        %2495 = vadd.xlane.f32.xlu0 %v2478
        %v2496 = vpop.xlane.xlu0 %2495
        %2497 = vadd.xlane.f32.xlu0 %v2479
        %v2498 = vpop.xlane.xlu0 %2497
        %2499 = vadd.xlane.f32.xlu0 %v2480
        %v2500 = vpop.xlane.xlu0 %2499
        %2501 = vadd.xlane.f32.xlu0 %v2481
        %v2502 = vpop.xlane.xlu0 %2501
        %2503 = vadd.xlane.f32.xlu0 %v2482
        %v2504 = vpop.xlane.xlu0 %2503
        %2505 = vadd.xlane.f32.xlu0 %v2483
        %v2506 = vpop.xlane.xlu0 %2505
        %2507 = vadd.xlane.f32.xlu0 %v2484
        %v2508 = vpop.xlane.xlu0 %2507
        %2509 = vadd.xlane.f32.xlu0 %v2485
        %v2510 = vpop.xlane.xlu0 %2509
        %2511 = vadd.xlane.f32.xlu0 %v2486
        %v2512 = vpop.xlane.xlu0 %2511
        %2513 = vadd.xlane.f32.xlu0 %v2487
        %v2514 = vpop.xlane.xlu0 %2513
        %2515 = vadd.xlane.f32.xlu0 %v2488
        %v2516 = vpop.xlane.xlu0 %2515
        %2517 = vadd.xlane.f32.xlu0 %v2489
        %v2518 = vpop.xlane.xlu0 %2517
        %2519 = vadd.xlane.f32.xlu0 %v2490
        %v2520 = vpop.xlane.xlu0 %2519
        %2521 = vadd.xlane.f32.xlu0 %v2491
        %v2522 = vpop.xlane.xlu0 %2521
        %2523 = vadd.xlane.f32.xlu0 %v2492
        %v2524 = vpop.xlane.xlu0 %2523
        %v2525 = vmul.f32 %v2494, %v406
        %v2526 = vmul.f32 %v2496, %v406
        %v2527 = vmul.f32 %v2498, %v406
        %v2528 = vmul.f32 %v2500, %v406
        %v2529 = vmul.f32 %v2502, %v406
        %v2530 = vmul.f32 %v2504, %v406
        %v2531 = vmul.f32 %v2506, %v406
        %v2532 = vmul.f32 %v2508, %v406
        %v2533 = vmul.f32 %v2510, %v406
        %v2534 = vmul.f32 %v2512, %v406
        %v2535 = vmul.f32 %v2514, %v406
        %v2536 = vmul.f32 %v2516, %v406
        %v2537 = vmul.f32 %v2518, %v406
        %v2538 = vmul.f32 %v2520, %v406
        %v2539 = vmul.f32 %v2522, %v406
        %v2540 = vmul.f32 %v2524, %v406
        %v2541 = vrsqrt.pop %v2525
        %v2542 = vmul.f32 %v2525, %v2541
        %vm2543 = vcmp.eq.f32.partialorder %v2525, inf
        %v2544 = vsel %vm2543, %v2525, %v2542
        %vm2545 = vcmp.eq.f32.partialorder %v2525, 0.0
        %v2546 = vand.u32 %v2525, 2147483648
        %v2547 = vsel %vm2545, %v2546, %v2544
        %v2548 = vrsqrt.pop %v2526
        %v2549 = vmul.f32 %v2526, %v2548
        %vm2550 = vcmp.eq.f32.partialorder %v2526, inf
        %v2551 = vsel %vm2550, %v2526, %v2549
        %vm2552 = vcmp.eq.f32.partialorder %v2526, 0.0
        %v2553 = vand.u32 %v2526, 2147483648
        %v2554 = vsel %vm2552, %v2553, %v2551
        %v2555 = vrsqrt.pop %v2527
        %v2556 = vmul.f32 %v2527, %v2555
        %vm2557 = vcmp.eq.f32.partialorder %v2527, inf
        %v2558 = vsel %vm2557, %v2527, %v2556
        %vm2559 = vcmp.eq.f32.partialorder %v2527, 0.0
        %v2560 = vand.u32 %v2527, 2147483648
        %v2561 = vsel %vm2559, %v2560, %v2558
        %v2562 = vrsqrt.pop %v2528
        %v2563 = vmul.f32 %v2528, %v2562
        %vm2564 = vcmp.eq.f32.partialorder %v2528, inf
        %v2565 = vsel %vm2564, %v2528, %v2563
        %vm2566 = vcmp.eq.f32.partialorder %v2528, 0.0
        %v2567 = vand.u32 %v2528, 2147483648
        %v2568 = vsel %vm2566, %v2567, %v2565
        %v2569 = vrsqrt.pop %v2529
        %v2570 = vmul.f32 %v2529, %v2569
        %vm2571 = vcmp.eq.f32.partialorder %v2529, inf
        %v2572 = vsel %vm2571, %v2529, %v2570
        %vm2573 = vcmp.eq.f32.partialorder %v2529, 0.0
        %v2574 = vand.u32 %v2529, 2147483648
        %v2575 = vsel %vm2573, %v2574, %v2572
        %v2576 = vrsqrt.pop %v2530
        %v2577 = vmul.f32 %v2530, %v2576
        %vm2578 = vcmp.eq.f32.partialorder %v2530, inf
        %v2579 = vsel %vm2578, %v2530, %v2577
        %vm2580 = vcmp.eq.f32.partialorder %v2530, 0.0
        %v2581 = vand.u32 %v2530, 2147483648
        %v2582 = vsel %vm2580, %v2581, %v2579
        %v2583 = vrsqrt.pop %v2531
        %v2584 = vmul.f32 %v2531, %v2583
        %vm2585 = vcmp.eq.f32.partialorder %v2531, inf
        %v2586 = vsel %vm2585, %v2531, %v2584
        %vm2587 = vcmp.eq.f32.partialorder %v2531, 0.0
        %v2588 = vand.u32 %v2531, 2147483648
        %v2589 = vsel %vm2587, %v2588, %v2586
        %v2590 = vrsqrt.pop %v2532
        %v2591 = vmul.f32 %v2532, %v2590
        %vm2592 = vcmp.eq.f32.partialorder %v2532, inf
        %v2593 = vsel %vm2592, %v2532, %v2591
        %vm2594 = vcmp.eq.f32.partialorder %v2532, 0.0
        %v2595 = vand.u32 %v2532, 2147483648
        %v2596 = vsel %vm2594, %v2595, %v2593
        %v2597 = vrsqrt.pop %v2533
        %v2598 = vmul.f32 %v2533, %v2597
        %vm2599 = vcmp.eq.f32.partialorder %v2533, inf
        %v2600 = vsel %vm2599, %v2533, %v2598
        %vm2601 = vcmp.eq.f32.partialorder %v2533, 0.0
        %v2602 = vand.u32 %v2533, 2147483648
        %v2603 = vsel %vm2601, %v2602, %v2600
        %v2604 = vrsqrt.pop %v2534
        %v2605 = vmul.f32 %v2534, %v2604
        %vm2606 = vcmp.eq.f32.partialorder %v2534, inf
        %v2607 = vsel %vm2606, %v2534, %v2605
        %vm2608 = vcmp.eq.f32.partialorder %v2534, 0.0
        %v2609 = vand.u32 %v2534, 2147483648
        %v2610 = vsel %vm2608, %v2609, %v2607
        %v2611 = vrsqrt.pop %v2535
        %v2612 = vmul.f32 %v2535, %v2611
        %vm2613 = vcmp.eq.f32.partialorder %v2535, inf
        %v2614 = vsel %vm2613, %v2535, %v2612
        %vm2615 = vcmp.eq.f32.partialorder %v2535, 0.0
        %v2616 = vand.u32 %v2535, 2147483648
        %v2617 = vsel %vm2615, %v2616, %v2614
        %v2618 = vrsqrt.pop %v2536
        %v2619 = vmul.f32 %v2536, %v2618
        %vm2620 = vcmp.eq.f32.partialorder %v2536, inf
        %v2621 = vsel %vm2620, %v2536, %v2619
        %vm2622 = vcmp.eq.f32.partialorder %v2536, 0.0
        %v2623 = vand.u32 %v2536, 2147483648
        %v2624 = vsel %vm2622, %v2623, %v2621
        %v2625 = vrsqrt.pop %v2537
        %v2626 = vmul.f32 %v2537, %v2625
        %vm2627 = vcmp.eq.f32.partialorder %v2537, inf
        %v2628 = vsel %vm2627, %v2537, %v2626
        %vm2629 = vcmp.eq.f32.partialorder %v2537, 0.0
        %v2630 = vand.u32 %v2537, 2147483648
        %v2631 = vsel %vm2629, %v2630, %v2628
        %v2632 = vrsqrt.pop %v2538
        %v2633 = vmul.f32 %v2538, %v2632
        %vm2634 = vcmp.eq.f32.partialorder %v2538, inf
        %v2635 = vsel %vm2634, %v2538, %v2633
        %vm2636 = vcmp.eq.f32.partialorder %v2538, 0.0
        %v2637 = vand.u32 %v2538, 2147483648
        %v2638 = vsel %vm2636, %v2637, %v2635
        %v2639 = vrsqrt.pop %v2539
        %v2640 = vmul.f32 %v2539, %v2639
        %vm2641 = vcmp.eq.f32.partialorder %v2539, inf
        %v2642 = vsel %vm2641, %v2539, %v2640
        %vm2643 = vcmp.eq.f32.partialorder %v2539, 0.0
        %v2644 = vand.u32 %v2539, 2147483648
        %v2645 = vsel %vm2643, %v2644, %v2642
        %v2646 = vrsqrt.pop %v2540
        %v2647 = vmul.f32 %v2540, %v2646
        %vm2648 = vcmp.eq.f32.partialorder %v2540, inf
        %v2649 = vsel %vm2648, %v2540, %v2647
        %vm2650 = vcmp.eq.f32.partialorder %v2540, 0.0
        %v2651 = vand.u32 %v2540, 2147483648
        %v2652 = vsel %vm2650, %v2651, %v2649
        %v2654 = vlaneseq
        %v2655 = vshrl.u32 %v2654, 7
        %v2656 = vsub.s32 0, %v2655
        %v2657 = vrot.slane %v2410, %v2656
        %v2659 = vmul.f32 %v2657, %v2461
        %v2660 = vmul.f32 %v2657, %v2462
        %v2661 = vmul.f32 %v2657, %v2463
        %v2662 = vmul.f32 %v2657, %v2464
        %v2663 = vmul.f32 %v2657, %v2465
        %v2664 = vmul.f32 %v2657, %v2466
        %v2665 = vmul.f32 %v2657, %v2467
        %v2666 = vmul.f32 %v2657, %v2468
        %v2667 = vmul.f32 %v2657, %v2469
        %v2668 = vmul.f32 %v2657, %v2470
        %v2669 = vmul.f32 %v2657, %v2471
        %v2670 = vmul.f32 %v2657, %v2472
        %v2671 = vmul.f32 %v2657, %v2473
        %v2672 = vmul.f32 %v2657, %v2474
        %v2673 = vmul.f32 %v2657, %v2475
        %v2674 = vmul.f32 %v2657, %v2476
        %v2675 = vadd.f32 %v2547, 1e-06
        %v2676 = vadd.f32 %v2554, 1e-06
        %v2677 = vadd.f32 %v2561, 1e-06
        %v2678 = vadd.f32 %v2568, 1e-06
        %v2679 = vadd.f32 %v2575, 1e-06
        %v2680 = vadd.f32 %v2582, 1e-06
        %v2681 = vadd.f32 %v2589, 1e-06
        %v2682 = vadd.f32 %v2596, 1e-06
        %v2683 = vadd.f32 %v2603, 1e-06
        %v2684 = vadd.f32 %v2610, 1e-06
        %v2685 = vadd.f32 %v2617, 1e-06
        %v2686 = vadd.f32 %v2624, 1e-06
        %v2687 = vadd.f32 %v2631, 1e-06
        %v2688 = vadd.f32 %v2638, 1e-06
        %v2689 = vadd.f32 %v2645, 1e-06
        %v2690 = vadd.f32 %v2652, 1e-06
        %v2691 = vrcp.pop %v2675
        %v2692 = vmul.f32 %v2659, %v2691
        %v2693 = vrcp.pop %v2676
        %v2694 = vmul.f32 %v2660, %v2693
        %v2695 = vrcp.pop %v2677
        %v2696 = vmul.f32 %v2661, %v2695
        %v2697 = vrcp.pop %v2678
        %v2698 = vmul.f32 %v2662, %v2697
        %v2699 = vrcp.pop %v2679
        %v2700 = vmul.f32 %v2663, %v2699
        %v2701 = vrcp.pop %v2680
        %v2702 = vmul.f32 %v2664, %v2701
        %v2703 = vrcp.pop %v2681
        %v2704 = vmul.f32 %v2665, %v2703
        %v2705 = vrcp.pop %v2682
        %v2706 = vmul.f32 %v2666, %v2705
        %v2707 = vrcp.pop %v2683
        %v2708 = vmul.f32 %v2667, %v2707
        %v2709 = vrcp.pop %v2684
        %v2710 = vmul.f32 %v2668, %v2709
        %v2711 = vrcp.pop %v2685
        %v2712 = vmul.f32 %v2669, %v2711
        %v2713 = vrcp.pop %v2686
        %v2714 = vmul.f32 %v2670, %v2713
        %v2715 = vrcp.pop %v2687
        %v2716 = vmul.f32 %v2671, %v2715
        %v2717 = vrcp.pop %v2688
        %v2718 = vmul.f32 %v2672, %v2717
        %v2719 = vrcp.pop %v2689
        %v2720 = vmul.f32 %v2673, %v2719
        %v2721 = vrcp.pop %v2690
        %v2722 = vmul.f32 %v2674, %v2721
        %v2724 = vlaneseq
        %v2725 = vshrl.u32 %v2724, 7
        %v2726 = vsub.s32 0, %v2725
        %v2727 = vrot.slane %v2412, %v2726
        %v2729 = vadd.f32 %v2692, %v2727
        %v2730 = vadd.f32 %v2694, %v2727
        %v2731 = vadd.f32 %v2696, %v2727
        %v2732 = vadd.f32 %v2698, %v2727
        %v2733 = vadd.f32 %v2700, %v2727
        %v2734 = vadd.f32 %v2702, %v2727
        %v2735 = vadd.f32 %v2704, %v2727
        %v2736 = vadd.f32 %v2706, %v2727
        %v2737 = vadd.f32 %v2708, %v2727
        %v2738 = vadd.f32 %v2710, %v2727
        %v2739 = vadd.f32 %v2712, %v2727
        %v2740 = vadd.f32 %v2714, %v2727
        %v2741 = vadd.f32 %v2716, %v2727
        %v2742 = vadd.f32 %v2718, %v2727
        %v2743 = vadd.f32 %v2720, %v2727
        %v2744 = vadd.f32 %v2722, %v2727
        %v2745 = vpack.c.bf16 %v2730, %v2729
        %v2746 = vpack.c.bf16 %v2732, %v2731
        %v2747 = vpack.c.bf16 %v2734, %v2733
        %v2748 = vpack.c.bf16 %v2736, %v2735
        %v2749 = vpack.c.bf16 %v2738, %v2737
        %v2750 = vpack.c.bf16 %v2740, %v2739
        %v2751 = vpack.c.bf16 %v2742, %v2741
        %v2752 = vpack.c.bf16 %v2744, %v2743
        %s2753 = scalar_lea.vmem [#allocation7], 256
        %v2754 = vld [vmem:[%s2753] sm:$0xf]
        %v2755 = vld [vmem:[%s2753 + $0x4] sm:$0xf]
        %v2756 = vld [vmem:[%s2753 + $0x8] sm:$0xf]
        %v2757 = vld [vmem:[%s2753 + $0xc] sm:$0xf]
        %v2758 = vld [vmem:[%s2753 + $0x10] sm:$0xf]
        %v2759 = vld [vmem:[%s2753 + $0x14] sm:$0xf]
        %v2760 = vld [vmem:[%s2753 + $0x18] sm:$0xf]
        %v2761 = vld [vmem:[%s2753 + $0x1c] sm:$0xf]
        %v2762 = vld [vmem:[%s2753 + $0x20] sm:$0xf]
        %v2763 = vld [vmem:[%s2753 + $0x24] sm:$0xf]
        %v2764 = vld [vmem:[%s2753 + $0x28] sm:$0xf]
        %v2765 = vld [vmem:[%s2753 + $0x2c] sm:$0xf]
        %v2766 = vld [vmem:[%s2753 + $0x30] sm:$0xf]
        %v2767 = vld [vmem:[%s2753 + $0x34] sm:$0xf]
        %v2768 = vld [vmem:[%s2753 + $0x38] sm:$0xf]
        %v2769 = vld [vmem:[%s2753 + $0x3c] sm:$0xf]
        %s2770 = scalar_lea.vmem %s4, 4
        %v2771 = vld [vmem:[%s2770] sm:$0x1]
        %v2773 = vlaneseq
        %v2774 = vshrl.u32 %v2773, 7
        %v2775 = vsub.s32 0, %v2774
        %v2776 = vrot.slane %v2771, %v2775
        %v2794 = vunpack.c.l.b16 %v2754
        %v2795 = vunpack.c.l.b16 %v2755
        %v2796 = vunpack.c.l.b16 %v2756
        %v2797 = vunpack.c.l.b16 %v2757
        %v2798 = vunpack.c.l.b16 %v2758
        %v2799 = vunpack.c.l.b16 %v2759
        %v2800 = vunpack.c.l.b16 %v2760
        %v2801 = vunpack.c.l.b16 %v2761
        %v2802 = vunpack.c.l.b16 %v2762
        %v2803 = vunpack.c.l.b16 %v2763
        %v2804 = vunpack.c.l.b16 %v2764
        %v2805 = vunpack.c.l.b16 %v2765
        %v2806 = vunpack.c.l.b16 %v2766
        %v2807 = vunpack.c.l.b16 %v2767
        %v2808 = vunpack.c.l.b16 %v2768
        %v2809 = vunpack.c.l.b16 %v2769
        %v2810 = vpack.c.b16 %v2795, %v2794
        %v2811 = vpack.c.b16 %v2797, %v2796
        %v2812 = vpack.c.b16 %v2799, %v2798
        %v2813 = vpack.c.b16 %v2801, %v2800
        %v2814 = vpack.c.b16 %v2803, %v2802
        %v2815 = vpack.c.b16 %v2805, %v2804
        %v2816 = vpack.c.b16 %v2807, %v2806
        %v2817 = vpack.c.b16 %v2809, %v2808
        %2826 = vmatprep.subr.bf16.mxu0 0
        %2827 = vmatpush1.bf16.msra.mxu0 %v2810
        %2828 = vmatprep.subr.bf16.mxu0 0
        %2829 = vmatpush1.bf16.msra.mxu0 %v2811
        %2830 = vmatprep.subr.bf16.mxu0 0
        %2831 = vmatpush1.bf16.msra.mxu0 %v2812
        %2832 = vmatprep.subr.bf16.mxu0 0
        %2833 = vmatpush1.bf16.msra.mxu0 %v2813
        %2834 = vmatprep.subr.bf16.mxu0 0
        %2835 = vmatpush1.bf16.msra.mxu0 %v2814
        %2836 = vmatprep.subr.bf16.mxu0 0
        %2837 = vmatpush1.bf16.msra.mxu0 %v2815
        %2838 = vmatprep.subr.bf16.mxu0 0
        %2839 = vmatpush1.bf16.msra.mxu0 %v2816
        %2840 = vmatprep.subr.bf16.mxu0 0
        %2841 = vmatpush1.bf16.msra.mxu0 %v2817
        %2842 = vmatprep.subr.bf16.mxu0 0
        %2843 = vmatpush1.bf16.msra.mxu0 0
        %2844 = vmatprep.subr.bf16.mxu0 0
        %2845 = vmatpush1.bf16.msra.mxu0 0
        %2846 = vmatprep.subr.bf16.mxu0 0
        %2847 = vmatpush1.bf16.msra.mxu0 0
        %2848 = vmatprep.subr.bf16.mxu0 0
        %2849 = vmatpush1.bf16.msra.mxu0 0
        %2850 = vmatprep.subr.bf16.mxu0 0
        %2851 = vmatpush1.bf16.msra.mxu0 0
        %2852 = vmatprep.subr.bf16.mxu0 0
        %2853 = vmatpush1.bf16.msra.mxu0 0
        %2854 = vmatprep.subr.bf16.mxu0 0
        %2855 = vmatpush1.bf16.msra.mxu0 0
        %2856 = vmatprep.subr.bf16.mxu0 0
        %2857 = vmatpush1.bf16.msra.mxu0 0
        %2858 = vmatprep.mubr.bf16.mxu0 0
        %2859 = vmatmul.mubr.bf16.gmra.mrb[0].mxu0 %v2745
        %v2860 = vpop.f32.mrb[0].mxu0
        %v2861 = vadd.f32 %v2776, %v2860
        %v2862 = vpop.f32.mrb[0].mxu0
        %v2863 = vpop.f32.mrb[0].mxu0
        %v2864 = vadd.f32 %v2776, %v2863
        %v2865 = vpop.f32.mrb[0].mxu0
        %2866 = vmatprep.mubr.bf16.mxu0 0
        %2867 = vmatmul.mubr.bf16.gmra.mrb[0].mxu0 %v2746
        %v2868 = vpop.f32.mrb[0].mxu0
        %v2869 = vadd.f32 %v2776, %v2868
        %v2870 = vpop.f32.mrb[0].mxu0
        %v2871 = vpop.f32.mrb[0].mxu0
        %v2872 = vadd.f32 %v2776, %v2871
        %v2873 = vpop.f32.mrb[0].mxu0
        %2874 = vmatprep.mubr.bf16.mxu0 0
        %2875 = vmatmul.mubr.bf16.gmra.mrb[0].mxu0 %v2747
        %v2876 = vpop.f32.mrb[0].mxu0
        %v2877 = vadd.f32 %v2776, %v2876
        %v2878 = vpop.f32.mrb[0].mxu0
        %v2879 = vpop.f32.mrb[0].mxu0
        %v2880 = vadd.f32 %v2776, %v2879
        %v2881 = vpop.f32.mrb[0].mxu0
        %2882 = vmatprep.mubr.bf16.mxu0 0
        %2883 = vmatmul.mubr.bf16.gmra.mrb[0].mxu0 %v2748
        %v2884 = vpop.f32.mrb[0].mxu0
        %v2885 = vadd.f32 %v2776, %v2884
        %v2886 = vpop.f32.mrb[0].mxu0
        %v2887 = vpop.f32.mrb[0].mxu0
        %v2888 = vadd.f32 %v2776, %v2887
        %v2889 = vpop.f32.mrb[0].mxu0
        %2890 = vmatprep.mubr.bf16.mxu0 0
        %2891 = vmatmul.mubr.bf16.gmra.mrb[0].mxu0 %v2749
        %v2892 = vpop.f32.mrb[0].mxu0
        %v2893 = vadd.f32 %v2776, %v2892
        %v2894 = vpop.f32.mrb[0].mxu0
        %v2895 = vpop.f32.mrb[0].mxu0
        %v2896 = vadd.f32 %v2776, %v2895
        %v2897 = vpop.f32.mrb[0].mxu0
        %2898 = vmatprep.mubr.bf16.mxu0 0
        %2899 = vmatmul.mubr.bf16.gmra.mrb[0].mxu0 %v2750
        %v2900 = vpop.f32.mrb[0].mxu0
        %v2901 = vadd.f32 %v2776, %v2900
        %v2902 = vpop.f32.mrb[0].mxu0
        %v2903 = vpop.f32.mrb[0].mxu0
        %v2904 = vadd.f32 %v2776, %v2903
        %v2905 = vpop.f32.mrb[0].mxu0
        %2906 = vmatprep.mubr.bf16.mxu0 0
        %2907 = vmatmul.mubr.bf16.gmra.mrb[0].mxu0 %v2751
        %v2908 = vpop.f32.mrb[0].mxu0
        %v2909 = vadd.f32 %v2776, %v2908
        %v2910 = vpop.f32.mrb[0].mxu0
        %v2911 = vpop.f32.mrb[0].mxu0
        %v2912 = vadd.f32 %v2776, %v2911
        %v2913 = vpop.f32.mrb[0].mxu0
        %2914 = vmatprep.mubr.bf16.mxu0 0
        %2915 = vmatmul.mubr.bf16.gmra.mrb[0].mxu0 %v2752
        %v2916 = vpop.f32.mrb[0].mxu0
        %v2917 = vadd.f32 %v2776, %v2916
        %v2918 = vpop.f32.mrb[0].mxu0
        %v2919 = vpop.f32.mrb[0].mxu0
        %v2920 = vadd.f32 %v2776, %v2919
        %v2921 = vpop.f32.mrb[0].mxu0
        %2922 = vdwg.mxu0
        %v2923 = vadd.f32 %v2393, %v2861
        %v2924 = vadd.f32 %v2394, %v2864
        %v2925 = vadd.f32 %v2395, %v2869
        %v2926 = vadd.f32 %v2396, %v2872
        %v2927 = vadd.f32 %v2397, %v2877
        %v2928 = vadd.f32 %v2398, %v2880
        %v2929 = vadd.f32 %v2399, %v2885
        %v2930 = vadd.f32 %v2400, %v2888
        %v2931 = vadd.f32 %v2401, %v2893
        %v2932 = vadd.f32 %v2402, %v2896
        %v2933 = vadd.f32 %v2403, %v2901
        %v2934 = vadd.f32 %v2404, %v2904
        %v2935 = vadd.f32 %v2405, %v2909
        %v2936 = vadd.f32 %v2406, %v2912
        %v2937 = vadd.f32 %v2407, %v2917
        %v2938 = vadd.f32 %v2408, %v2920
        %s2939 = scalar_lea.vmem %s1, 5
        %v2940 = vld [vmem:[%s2939] sm:$0x1]
        %s2941 = scalar_lea.vmem [#allocation5], 5
        %v2942 = vld [vmem:[%s2941] sm:$0x1]
        %2943 = vadd.xlane.f32.xlu0 %v2923
        %v2944 = vpop.xlane.xlu0 %2943
        %2945 = vadd.xlane.f32.xlu0 %v2924
        %v2946 = vpop.xlane.xlu0 %2945
        %2947 = vadd.xlane.f32.xlu0 %v2925
        %v2948 = vpop.xlane.xlu0 %2947
        %2949 = vadd.xlane.f32.xlu0 %v2926
        %v2950 = vpop.xlane.xlu0 %2949
        %2951 = vadd.xlane.f32.xlu0 %v2927
        %v2952 = vpop.xlane.xlu0 %2951
        %2953 = vadd.xlane.f32.xlu0 %v2928
        %v2954 = vpop.xlane.xlu0 %2953
        %2955 = vadd.xlane.f32.xlu0 %v2929
        %v2956 = vpop.xlane.xlu0 %2955
        %2957 = vadd.xlane.f32.xlu0 %v2930
        %v2958 = vpop.xlane.xlu0 %2957
        %2959 = vadd.xlane.f32.xlu0 %v2931
        %v2960 = vpop.xlane.xlu0 %2959
        %2961 = vadd.xlane.f32.xlu0 %v2932
        %v2962 = vpop.xlane.xlu0 %2961
        %2963 = vadd.xlane.f32.xlu0 %v2933
        %v2964 = vpop.xlane.xlu0 %2963
        %2965 = vadd.xlane.f32.xlu0 %v2934
        %v2966 = vpop.xlane.xlu0 %2965
        %2967 = vadd.xlane.f32.xlu0 %v2935
        %v2968 = vpop.xlane.xlu0 %2967
        %2969 = vadd.xlane.f32.xlu0 %v2936
        %v2970 = vpop.xlane.xlu0 %2969
        %2971 = vadd.xlane.f32.xlu0 %v2937
        %v2972 = vpop.xlane.xlu0 %2971
        %2973 = vadd.xlane.f32.xlu0 %v2938
        %v2974 = vpop.xlane.xlu0 %2973
        %v2975 = vmul.f32 %v2944, %v325
        %v2976 = vmul.f32 %v2946, %v325
        %v2977 = vmul.f32 %v2948, %v325
        %v2978 = vmul.f32 %v2950, %v325
        %v2979 = vmul.f32 %v2952, %v325
        %v2980 = vmul.f32 %v2954, %v325
        %v2981 = vmul.f32 %v2956, %v325
        %v2982 = vmul.f32 %v2958, %v325
        %v2983 = vmul.f32 %v2960, %v325
        %v2984 = vmul.f32 %v2962, %v325
        %v2985 = vmul.f32 %v2964, %v325
        %v2986 = vmul.f32 %v2966, %v325
        %v2987 = vmul.f32 %v2968, %v325
        %v2988 = vmul.f32 %v2970, %v325
        %v2989 = vmul.f32 %v2972, %v325
        %v2990 = vmul.f32 %v2974, %v325
        %v2991 = vsub.f32 %v2923, %v2975
        %v2992 = vsub.f32 %v2924, %v2976
        %v2993 = vsub.f32 %v2925, %v2977
        %v2994 = vsub.f32 %v2926, %v2978
        %v2995 = vsub.f32 %v2927, %v2979
        %v2996 = vsub.f32 %v2928, %v2980
        %v2997 = vsub.f32 %v2929, %v2981
        %v2998 = vsub.f32 %v2930, %v2982
        %v2999 = vsub.f32 %v2931, %v2983
        %v3000 = vsub.f32 %v2932, %v2984
        %v3001 = vsub.f32 %v2933, %v2985
        %v3002 = vsub.f32 %v2934, %v2986
        %v3003 = vsub.f32 %v2935, %v2987
        %v3004 = vsub.f32 %v2936, %v2988
        %v3005 = vsub.f32 %v2937, %v2989
        %v3006 = vsub.f32 %v2938, %v2990
        %v3007 = vmul.f32 %v2991, %v2991
        %v3008 = vmul.f32 %v2992, %v2992
        %v3009 = vmul.f32 %v2993, %v2993
        %v3010 = vmul.f32 %v2994, %v2994
        %v3011 = vmul.f32 %v2995, %v2995
        %v3012 = vmul.f32 %v2996, %v2996
        %v3013 = vmul.f32 %v2997, %v2997
        %v3014 = vmul.f32 %v2998, %v2998
        %v3015 = vmul.f32 %v2999, %v2999
        %v3016 = vmul.f32 %v3000, %v3000
        %v3017 = vmul.f32 %v3001, %v3001
        %v3018 = vmul.f32 %v3002, %v3002
        %v3019 = vmul.f32 %v3003, %v3003
        %v3020 = vmul.f32 %v3004, %v3004
        %v3021 = vmul.f32 %v3005, %v3005
        %v3022 = vmul.f32 %v3006, %v3006
        %3023 = vadd.xlane.f32.xlu0 %v3007
        %v3024 = vpop.xlane.xlu0 %3023
        %3025 = vadd.xlane.f32.xlu0 %v3008
        %v3026 = vpop.xlane.xlu0 %3025
        %3027 = vadd.xlane.f32.xlu0 %v3009
        %v3028 = vpop.xlane.xlu0 %3027
        %3029 = vadd.xlane.f32.xlu0 %v3010
        %v3030 = vpop.xlane.xlu0 %3029
        %3031 = vadd.xlane.f32.xlu0 %v3011
        %v3032 = vpop.xlane.xlu0 %3031
        %3033 = vadd.xlane.f32.xlu0 %v3012
        %v3034 = vpop.xlane.xlu0 %3033
        %3035 = vadd.xlane.f32.xlu0 %v3013
        %v3036 = vpop.xlane.xlu0 %3035
        %3037 = vadd.xlane.f32.xlu0 %v3014
        %v3038 = vpop.xlane.xlu0 %3037
        %3039 = vadd.xlane.f32.xlu0 %v3015
        %v3040 = vpop.xlane.xlu0 %3039
        %3041 = vadd.xlane.f32.xlu0 %v3016
        %v3042 = vpop.xlane.xlu0 %3041
        %3043 = vadd.xlane.f32.xlu0 %v3017
        %v3044 = vpop.xlane.xlu0 %3043
        %3045 = vadd.xlane.f32.xlu0 %v3018
        %v3046 = vpop.xlane.xlu0 %3045
        %3047 = vadd.xlane.f32.xlu0 %v3019
        %v3048 = vpop.xlane.xlu0 %3047
        %3049 = vadd.xlane.f32.xlu0 %v3020
        %v3050 = vpop.xlane.xlu0 %3049
        %3051 = vadd.xlane.f32.xlu0 %v3021
        %v3052 = vpop.xlane.xlu0 %3051
        %3053 = vadd.xlane.f32.xlu0 %v3022
        %v3054 = vpop.xlane.xlu0 %3053
        %v3055 = vmul.f32 %v3024, %v406
        %v3056 = vmul.f32 %v3026, %v406
        %v3057 = vmul.f32 %v3028, %v406
        %v3058 = vmul.f32 %v3030, %v406
        %v3059 = vmul.f32 %v3032, %v406
        %v3060 = vmul.f32 %v3034, %v406
        %v3061 = vmul.f32 %v3036, %v406
        %v3062 = vmul.f32 %v3038, %v406
        %v3063 = vmul.f32 %v3040, %v406
        %v3064 = vmul.f32 %v3042, %v406
        %v3065 = vmul.f32 %v3044, %v406
        %v3066 = vmul.f32 %v3046, %v406
        %v3067 = vmul.f32 %v3048, %v406
        %v3068 = vmul.f32 %v3050, %v406
        %v3069 = vmul.f32 %v3052, %v406
        %v3070 = vmul.f32 %v3054, %v406
        %v3071 = vrsqrt.pop %v3055
        %v3072 = vmul.f32 %v3055, %v3071
        %vm3073 = vcmp.eq.f32.partialorder %v3055, inf
        %v3074 = vsel %vm3073, %v3055, %v3072
        %vm3075 = vcmp.eq.f32.partialorder %v3055, 0.0
        %v3076 = vand.u32 %v3055, 2147483648
        %v3077 = vsel %vm3075, %v3076, %v3074
        %v3078 = vrsqrt.pop %v3056
        %v3079 = vmul.f32 %v3056, %v3078
        %vm3080 = vcmp.eq.f32.partialorder %v3056, inf
        %v3081 = vsel %vm3080, %v3056, %v3079
        %vm3082 = vcmp.eq.f32.partialorder %v3056, 0.0
        %v3083 = vand.u32 %v3056, 2147483648
        %v3084 = vsel %vm3082, %v3083, %v3081
        %v3085 = vrsqrt.pop %v3057
        %v3086 = vmul.f32 %v3057, %v3085
        %vm3087 = vcmp.eq.f32.partialorder %v3057, inf
        %v3088 = vsel %vm3087, %v3057, %v3086
        %vm3089 = vcmp.eq.f32.partialorder %v3057, 0.0
        %v3090 = vand.u32 %v3057, 2147483648
        %v3091 = vsel %vm3089, %v3090, %v3088
        %v3092 = vrsqrt.pop %v3058
        %v3093 = vmul.f32 %v3058, %v3092
        %vm3094 = vcmp.eq.f32.partialorder %v3058, inf
        %v3095 = vsel %vm3094, %v3058, %v3093
        %vm3096 = vcmp.eq.f32.partialorder %v3058, 0.0
        %v3097 = vand.u32 %v3058, 2147483648
        %v3098 = vsel %vm3096, %v3097, %v3095
        %v3099 = vrsqrt.pop %v3059
        %v3100 = vmul.f32 %v3059, %v3099
        %vm3101 = vcmp.eq.f32.partialorder %v3059, inf
        %v3102 = vsel %vm3101, %v3059, %v3100
        %vm3103 = vcmp.eq.f32.partialorder %v3059, 0.0
        %v3104 = vand.u32 %v3059, 2147483648
        %v3105 = vsel %vm3103, %v3104, %v3102
        %v3106 = vrsqrt.pop %v3060
        %v3107 = vmul.f32 %v3060, %v3106
        %vm3108 = vcmp.eq.f32.partialorder %v3060, inf
        %v3109 = vsel %vm3108, %v3060, %v3107
        %vm3110 = vcmp.eq.f32.partialorder %v3060, 0.0
        %v3111 = vand.u32 %v3060, 2147483648
        %v3112 = vsel %vm3110, %v3111, %v3109
        %v3113 = vrsqrt.pop %v3061
        %v3114 = vmul.f32 %v3061, %v3113
        %vm3115 = vcmp.eq.f32.partialorder %v3061, inf
        %v3116 = vsel %vm3115, %v3061, %v3114
        %vm3117 = vcmp.eq.f32.partialorder %v3061, 0.0
        %v3118 = vand.u32 %v3061, 2147483648
        %v3119 = vsel %vm3117, %v3118, %v3116
        %v3120 = vrsqrt.pop %v3062
        %v3121 = vmul.f32 %v3062, %v3120
        %vm3122 = vcmp.eq.f32.partialorder %v3062, inf
        %v3123 = vsel %vm3122, %v3062, %v3121
        %vm3124 = vcmp.eq.f32.partialorder %v3062, 0.0
        %v3125 = vand.u32 %v3062, 2147483648
        %v3126 = vsel %vm3124, %v3125, %v3123
        %v3127 = vrsqrt.pop %v3063
        %v3128 = vmul.f32 %v3063, %v3127
        %vm3129 = vcmp.eq.f32.partialorder %v3063, inf
        %v3130 = vsel %vm3129, %v3063, %v3128
        %vm3131 = vcmp.eq.f32.partialorder %v3063, 0.0
        %v3132 = vand.u32 %v3063, 2147483648
        %v3133 = vsel %vm3131, %v3132, %v3130
        %v3134 = vrsqrt.pop %v3064
        %v3135 = vmul.f32 %v3064, %v3134
        %vm3136 = vcmp.eq.f32.partialorder %v3064, inf
        %v3137 = vsel %vm3136, %v3064, %v3135
        %vm3138 = vcmp.eq.f32.partialorder %v3064, 0.0
        %v3139 = vand.u32 %v3064, 2147483648
        %v3140 = vsel %vm3138, %v3139, %v3137
        %v3141 = vrsqrt.pop %v3065
        %v3142 = vmul.f32 %v3065, %v3141
        %vm3143 = vcmp.eq.f32.partialorder %v3065, inf
        %v3144 = vsel %vm3143, %v3065, %v3142
        %vm3145 = vcmp.eq.f32.partialorder %v3065, 0.0
        %v3146 = vand.u32 %v3065, 2147483648
        %v3147 = vsel %vm3145, %v3146, %v3144
        %v3148 = vrsqrt.pop %v3066
        %v3149 = vmul.f32 %v3066, %v3148
        %vm3150 = vcmp.eq.f32.partialorder %v3066, inf
        %v3151 = vsel %vm3150, %v3066, %v3149
        %vm3152 = vcmp.eq.f32.partialorder %v3066, 0.0
        %v3153 = vand.u32 %v3066, 2147483648
        %v3154 = vsel %vm3152, %v3153, %v3151
        %v3155 = vrsqrt.pop %v3067
        %v3156 = vmul.f32 %v3067, %v3155
        %vm3157 = vcmp.eq.f32.partialorder %v3067, inf
        %v3158 = vsel %vm3157, %v3067, %v3156
        %vm3159 = vcmp.eq.f32.partialorder %v3067, 0.0
        %v3160 = vand.u32 %v3067, 2147483648
        %v3161 = vsel %vm3159, %v3160, %v3158
        %v3162 = vrsqrt.pop %v3068
        %v3163 = vmul.f32 %v3068, %v3162
        %vm3164 = vcmp.eq.f32.partialorder %v3068, inf
        %v3165 = vsel %vm3164, %v3068, %v3163
        %vm3166 = vcmp.eq.f32.partialorder %v3068, 0.0
        %v3167 = vand.u32 %v3068, 2147483648
        %v3168 = vsel %vm3166, %v3167, %v3165
        %v3169 = vrsqrt.pop %v3069
        %v3170 = vmul.f32 %v3069, %v3169
        %vm3171 = vcmp.eq.f32.partialorder %v3069, inf
        %v3172 = vsel %vm3171, %v3069, %v3170
        %vm3173 = vcmp.eq.f32.partialorder %v3069, 0.0
        %v3174 = vand.u32 %v3069, 2147483648
        %v3175 = vsel %vm3173, %v3174, %v3172
        %v3176 = vrsqrt.pop %v3070
        %v3177 = vmul.f32 %v3070, %v3176
        %vm3178 = vcmp.eq.f32.partialorder %v3070, inf
        %v3179 = vsel %vm3178, %v3070, %v3177
        %vm3180 = vcmp.eq.f32.partialorder %v3070, 0.0
        %v3181 = vand.u32 %v3070, 2147483648
        %v3182 = vsel %vm3180, %v3181, %v3179
        %v3184 = vlaneseq
        %v3185 = vshrl.u32 %v3184, 7
        %v3186 = vsub.s32 0, %v3185
        %v3187 = vrot.slane %v2940, %v3186
        %v3189 = vmul.f32 %v3187, %v2991
        %v3190 = vmul.f32 %v3187, %v2992
        %v3191 = vmul.f32 %v3187, %v2993
        %v3192 = vmul.f32 %v3187, %v2994
        %v3193 = vmul.f32 %v3187, %v2995
        %v3194 = vmul.f32 %v3187, %v2996
        %v3195 = vmul.f32 %v3187, %v2997
        %v3196 = vmul.f32 %v3187, %v2998
        %v3197 = vmul.f32 %v3187, %v2999
        %v3198 = vmul.f32 %v3187, %v3000
        %v3199 = vmul.f32 %v3187, %v3001
        %v3200 = vmul.f32 %v3187, %v3002
        %v3201 = vmul.f32 %v3187, %v3003
        %v3202 = vmul.f32 %v3187, %v3004
        %v3203 = vmul.f32 %v3187, %v3005
        %v3204 = vmul.f32 %v3187, %v3006
        %v3205 = vadd.f32 %v3077, 1e-06
        %v3206 = vadd.f32 %v3084, 1e-06
        %v3207 = vadd.f32 %v3091, 1e-06
        %v3208 = vadd.f32 %v3098, 1e-06
        %v3209 = vadd.f32 %v3105, 1e-06
        %v3210 = vadd.f32 %v3112, 1e-06
        %v3211 = vadd.f32 %v3119, 1e-06
        %v3212 = vadd.f32 %v3126, 1e-06
        %v3213 = vadd.f32 %v3133, 1e-06
        %v3214 = vadd.f32 %v3140, 1e-06
        %v3215 = vadd.f32 %v3147, 1e-06
        %v3216 = vadd.f32 %v3154, 1e-06
        %v3217 = vadd.f32 %v3161, 1e-06
        %v3218 = vadd.f32 %v3168, 1e-06
        %v3219 = vadd.f32 %v3175, 1e-06
        %v3220 = vadd.f32 %v3182, 1e-06
        %v3221 = vrcp.pop %v3205
        %v3222 = vmul.f32 %v3189, %v3221
        %v3223 = vrcp.pop %v3206
        %v3224 = vmul.f32 %v3190, %v3223
        %v3225 = vrcp.pop %v3207
        %v3226 = vmul.f32 %v3191, %v3225
        %v3227 = vrcp.pop %v3208
        %v3228 = vmul.f32 %v3192, %v3227
        %v3229 = vrcp.pop %v3209
        %v3230 = vmul.f32 %v3193, %v3229
        %v3231 = vrcp.pop %v3210
        %v3232 = vmul.f32 %v3194, %v3231
        %v3233 = vrcp.pop %v3211
        %v3234 = vmul.f32 %v3195, %v3233
        %v3235 = vrcp.pop %v3212
        %v3236 = vmul.f32 %v3196, %v3235
        %v3237 = vrcp.pop %v3213
        %v3238 = vmul.f32 %v3197, %v3237
        %v3239 = vrcp.pop %v3214
        %v3240 = vmul.f32 %v3198, %v3239
        %v3241 = vrcp.pop %v3215
        %v3242 = vmul.f32 %v3199, %v3241
        %v3243 = vrcp.pop %v3216
        %v3244 = vmul.f32 %v3200, %v3243
        %v3245 = vrcp.pop %v3217
        %v3246 = vmul.f32 %v3201, %v3245
        %v3247 = vrcp.pop %v3218
        %v3248 = vmul.f32 %v3202, %v3247
        %v3249 = vrcp.pop %v3219
        %v3250 = vmul.f32 %v3203, %v3249
        %v3251 = vrcp.pop %v3220
        %v3252 = vmul.f32 %v3204, %v3251
        %v3254 = vlaneseq
        %v3255 = vshrl.u32 %v3254, 7
        %v3256 = vsub.s32 0, %v3255
        %v3257 = vrot.slane %v2942, %v3256
        %v3259 = vadd.f32 %v3222, %v3257
        %v3260 = vadd.f32 %v3224, %v3257
        %v3261 = vadd.f32 %v3226, %v3257
        %v3262 = vadd.f32 %v3228, %v3257
        %v3263 = vadd.f32 %v3230, %v3257
        %v3264 = vadd.f32 %v3232, %v3257
        %v3265 = vadd.f32 %v3234, %v3257
        %v3266 = vadd.f32 %v3236, %v3257
        %v3267 = vadd.f32 %v3238, %v3257
        %v3268 = vadd.f32 %v3240, %v3257
        %v3269 = vadd.f32 %v3242, %v3257
        %v3270 = vadd.f32 %v3244, %v3257
        %v3271 = vadd.f32 %v3246, %v3257
        %v3272 = vadd.f32 %v3248, %v3257
        %v3273 = vadd.f32 %v3250, %v3257
        %v3274 = vadd.f32 %v3252, %v3257
        %v3275 = vpack.c.bf16 %v3260, %v3259
        %v3276 = vpack.c.bf16 %v3262, %v3261
        %v3277 = vpack.c.bf16 %v3264, %v3263
        %v3278 = vpack.c.bf16 %v3266, %v3265
        %v3279 = vpack.c.bf16 %v3268, %v3267
        %v3280 = vpack.c.bf16 %v3270, %v3269
        %v3281 = vpack.c.bf16 %v3272, %v3271
        %v3282 = vpack.c.bf16 %v3274, %v3273
        %s3283 = scalar_lea.vmem [#allocation7], 320
        %v3284 = vld [vmem:[%s3283] sm:$0xf]
        %v3285 = vld [vmem:[%s3283 + $0x4] sm:$0xf]
        %v3286 = vld [vmem:[%s3283 + $0x8] sm:$0xf]
        %v3287 = vld [vmem:[%s3283 + $0xc] sm:$0xf]
        %v3288 = vld [vmem:[%s3283 + $0x10] sm:$0xf]
        %v3289 = vld [vmem:[%s3283 + $0x14] sm:$0xf]
        %v3290 = vld [vmem:[%s3283 + $0x18] sm:$0xf]
        %v3291 = vld [vmem:[%s3283 + $0x1c] sm:$0xf]
        %v3292 = vld [vmem:[%s3283 + $0x20] sm:$0xf]
        %v3293 = vld [vmem:[%s3283 + $0x24] sm:$0xf]
        %v3294 = vld [vmem:[%s3283 + $0x28] sm:$0xf]
        %v3295 = vld [vmem:[%s3283 + $0x2c] sm:$0xf]
        %v3296 = vld [vmem:[%s3283 + $0x30] sm:$0xf]
        %v3297 = vld [vmem:[%s3283 + $0x34] sm:$0xf]
        %v3298 = vld [vmem:[%s3283 + $0x38] sm:$0xf]
        %v3299 = vld [vmem:[%s3283 + $0x3c] sm:$0xf]
        %s3300 = scalar_lea.vmem %s4, 5
        %v3301 = vld [vmem:[%s3300] sm:$0x1]
        %v3303 = vlaneseq
        %v3304 = vshrl.u32 %v3303, 7
        %v3305 = vsub.s32 0, %v3304
        %v3306 = vrot.slane %v3301, %v3305
        %v3324 = vunpack.c.l.b16 %v3284
        %v3325 = vunpack.c.l.b16 %v3285
        %v3326 = vunpack.c.l.b16 %v3286
        %v3327 = vunpack.c.l.b16 %v3287
        %v3328 = vunpack.c.l.b16 %v3288
        %v3329 = vunpack.c.l.b16 %v3289
        %v3330 = vunpack.c.l.b16 %v3290
        %v3331 = vunpack.c.l.b16 %v3291
        %v3332 = vunpack.c.l.b16 %v3292
        %v3333 = vunpack.c.l.b16 %v3293
        %v3334 = vunpack.c.l.b16 %v3294
        %v3335 = vunpack.c.l.b16 %v3295
        %v3336 = vunpack.c.l.b16 %v3296
        %v3337 = vunpack.c.l.b16 %v3297
        %v3338 = vunpack.c.l.b16 %v3298
        %v3339 = vunpack.c.l.b16 %v3299
        %v3340 = vpack.c.b16 %v3325, %v3324
        %v3341 = vpack.c.b16 %v3327, %v3326
        %v3342 = vpack.c.b16 %v3329, %v3328
        %v3343 = vpack.c.b16 %v3331, %v3330
        %v3344 = vpack.c.b16 %v3333, %v3332
        %v3345 = vpack.c.b16 %v3335, %v3334
        %v3346 = vpack.c.b16 %v3337, %v3336
        %v3347 = vpack.c.b16 %v3339, %v3338
        %3356 = vmatprep.subr.bf16.mxu0 0
        %3357 = vmatpush1.bf16.msra.mxu0 %v3340
        %3358 = vmatprep.subr.bf16.mxu0 0
        %3359 = vmatpush1.bf16.msra.mxu0 %v3341
        %3360 = vmatprep.subr.bf16.mxu0 0
        %3361 = vmatpush1.bf16.msra.mxu0 %v3342
        %3362 = vmatprep.subr.bf16.mxu0 0
        %3363 = vmatpush1.bf16.msra.mxu0 %v3343
        %3364 = vmatprep.subr.bf16.mxu0 0
        %3365 = vmatpush1.bf16.msra.mxu0 %v3344
        %3366 = vmatprep.subr.bf16.mxu0 0
        %3367 = vmatpush1.bf16.msra.mxu0 %v3345
        %3368 = vmatprep.subr.bf16.mxu0 0
        %3369 = vmatpush1.bf16.msra.mxu0 %v3346
        %3370 = vmatprep.subr.bf16.mxu0 0
        %3371 = vmatpush1.bf16.msra.mxu0 %v3347
        %3372 = vmatprep.subr.bf16.mxu0 0
        %3373 = vmatpush1.bf16.msra.mxu0 0
        %3374 = vmatprep.subr.bf16.mxu0 0
        %3375 = vmatpush1.bf16.msra.mxu0 0
        %3376 = vmatprep.subr.bf16.mxu0 0
        %3377 = vmatpush1.bf16.msra.mxu0 0
        %3378 = vmatprep.subr.bf16.mxu0 0
        %3379 = vmatpush1.bf16.msra.mxu0 0
        %3380 = vmatprep.subr.bf16.mxu0 0
        %3381 = vmatpush1.bf16.msra.mxu0 0
        %3382 = vmatprep.subr.bf16.mxu0 0
        %3383 = vmatpush1.bf16.msra.mxu0 0
        %3384 = vmatprep.subr.bf16.mxu0 0
        %3385 = vmatpush1.bf16.msra.mxu0 0
        %3386 = vmatprep.subr.bf16.mxu0 0
        %3387 = vmatpush1.bf16.msra.mxu0 0
        %3388 = vmatprep.mubr.bf16.mxu0 0
        %3389 = vmatmul.mubr.bf16.gmra.mrb[0].mxu0 %v3275
        %v3390 = vpop.f32.mrb[0].mxu0
        %v3391 = vadd.f32 %v3306, %v3390
        %v3392 = vpop.f32.mrb[0].mxu0
        %v3393 = vpop.f32.mrb[0].mxu0
        %v3394 = vadd.f32 %v3306, %v3393
        %v3395 = vpop.f32.mrb[0].mxu0
        %3396 = vmatprep.mubr.bf16.mxu0 0
        %3397 = vmatmul.mubr.bf16.gmra.mrb[0].mxu0 %v3276
        %v3398 = vpop.f32.mrb[0].mxu0
        %v3399 = vadd.f32 %v3306, %v3398
        %v3400 = vpop.f32.mrb[0].mxu0
        %v3401 = vpop.f32.mrb[0].mxu0
        %v3402 = vadd.f32 %v3306, %v3401
        %v3403 = vpop.f32.mrb[0].mxu0
        %3404 = vmatprep.mubr.bf16.mxu0 0
        %3405 = vmatmul.mubr.bf16.gmra.mrb[0].mxu0 %v3277
        %v3406 = vpop.f32.mrb[0].mxu0
        %v3407 = vadd.f32 %v3306, %v3406
        %v3408 = vpop.f32.mrb[0].mxu0
        %v3409 = vpop.f32.mrb[0].mxu0
        %v3410 = vadd.f32 %v3306, %v3409
        %v3411 = vpop.f32.mrb[0].mxu0
        %3412 = vmatprep.mubr.bf16.mxu0 0
        %3413 = vmatmul.mubr.bf16.gmra.mrb[0].mxu0 %v3278
        %v3414 = vpop.f32.mrb[0].mxu0
        %v3415 = vadd.f32 %v3306, %v3414
        %v3416 = vpop.f32.mrb[0].mxu0
        %v3417 = vpop.f32.mrb[0].mxu0
        %v3418 = vadd.f32 %v3306, %v3417
        %v3419 = vpop.f32.mrb[0].mxu0
        %3420 = vmatprep.mubr.bf16.mxu0 0
        %3421 = vmatmul.mubr.bf16.gmra.mrb[0].mxu0 %v3279
        %v3422 = vpop.f32.mrb[0].mxu0
        %v3423 = vadd.f32 %v3306, %v3422
        %v3424 = vpop.f32.mrb[0].mxu0
        %v3425 = vpop.f32.mrb[0].mxu0
        %v3426 = vadd.f32 %v3306, %v3425
        %v3427 = vpop.f32.mrb[0].mxu0
        %3428 = vmatprep.mubr.bf16.mxu0 0
        %3429 = vmatmul.mubr.bf16.gmra.mrb[0].mxu0 %v3280
        %v3430 = vpop.f32.mrb[0].mxu0
        %v3431 = vadd.f32 %v3306, %v3430
        %v3432 = vpop.f32.mrb[0].mxu0
        %v3433 = vpop.f32.mrb[0].mxu0
        %v3434 = vadd.f32 %v3306, %v3433
        %v3435 = vpop.f32.mrb[0].mxu0
        %3436 = vmatprep.mubr.bf16.mxu0 0
        %3437 = vmatmul.mubr.bf16.gmra.mrb[0].mxu0 %v3281
        %v3438 = vpop.f32.mrb[0].mxu0
        %v3439 = vadd.f32 %v3306, %v3438
        %v3440 = vpop.f32.mrb[0].mxu0
        %v3441 = vpop.f32.mrb[0].mxu0
        %v3442 = vadd.f32 %v3306, %v3441
        %v3443 = vpop.f32.mrb[0].mxu0
        %3444 = vmatprep.mubr.bf16.mxu0 0
        %3445 = vmatmul.mubr.bf16.gmra.mrb[0].mxu0 %v3282
        %v3446 = vpop.f32.mrb[0].mxu0
        %v3447 = vadd.f32 %v3306, %v3446
        %v3448 = vpop.f32.mrb[0].mxu0
        %v3449 = vpop.f32.mrb[0].mxu0
        %v3450 = vadd.f32 %v3306, %v3449
        %v3451 = vpop.f32.mrb[0].mxu0
        %3452 = vdwg.mxu0
        %v3453 = vadd.f32 %v2923, %v3391
        %v3454 = vadd.f32 %v2924, %v3394
        %v3455 = vadd.f32 %v2925, %v3399
        %v3456 = vadd.f32 %v2926, %v3402
        %v3457 = vadd.f32 %v2927, %v3407
        %v3458 = vadd.f32 %v2928, %v3410
        %v3459 = vadd.f32 %v2929, %v3415
        %v3460 = vadd.f32 %v2930, %v3418
        %v3461 = vadd.f32 %v2931, %v3423
        %v3462 = vadd.f32 %v2932, %v3426
        %v3463 = vadd.f32 %v2933, %v3431
        %v3464 = vadd.f32 %v2934, %v3434
        %v3465 = vadd.f32 %v2935, %v3439
        %v3466 = vadd.f32 %v2936, %v3442
        %v3467 = vadd.f32 %v2937, %v3447
        %v3468 = vadd.f32 %v2938, %v3450
        %s3469 = scalar_lea.vmem %s1, 6
        %v3470 = vld [vmem:[%s3469] sm:$0x1]
        %s3471 = scalar_lea.vmem [#allocation5], 6
        %v3472 = vld [vmem:[%s3471] sm:$0x1]
        %3473 = vadd.xlane.f32.xlu0 %v3453
        %v3474 = vpop.xlane.xlu0 %3473
        %3475 = vadd.xlane.f32.xlu0 %v3454
        %v3476 = vpop.xlane.xlu0 %3475
        %3477 = vadd.xlane.f32.xlu0 %v3455
        %v3478 = vpop.xlane.xlu0 %3477
        %3479 = vadd.xlane.f32.xlu0 %v3456
        %v3480 = vpop.xlane.xlu0 %3479
        %3481 = vadd.xlane.f32.xlu0 %v3457
        %v3482 = vpop.xlane.xlu0 %3481
        %3483 = vadd.xlane.f32.xlu0 %v3458
        %v3484 = vpop.xlane.xlu0 %3483
        %3485 = vadd.xlane.f32.xlu0 %v3459
        %v3486 = vpop.xlane.xlu0 %3485
        %3487 = vadd.xlane.f32.xlu0 %v3460
        %v3488 = vpop.xlane.xlu0 %3487
        %3489 = vadd.xlane.f32.xlu0 %v3461
        %v3490 = vpop.xlane.xlu0 %3489
        %3491 = vadd.xlane.f32.xlu0 %v3462
        %v3492 = vpop.xlane.xlu0 %3491
        %3493 = vadd.xlane.f32.xlu0 %v3463
        %v3494 = vpop.xlane.xlu0 %3493
        %3495 = vadd.xlane.f32.xlu0 %v3464
        %v3496 = vpop.xlane.xlu0 %3495
        %3497 = vadd.xlane.f32.xlu0 %v3465
        %v3498 = vpop.xlane.xlu0 %3497
        %3499 = vadd.xlane.f32.xlu0 %v3466
        %v3500 = vpop.xlane.xlu0 %3499
        %3501 = vadd.xlane.f32.xlu0 %v3467
        %v3502 = vpop.xlane.xlu0 %3501
        %3503 = vadd.xlane.f32.xlu0 %v3468
        %v3504 = vpop.xlane.xlu0 %3503
        %v3505 = vmul.f32 %v3474, %v325
        %v3506 = vmul.f32 %v3476, %v325
        %v3507 = vmul.f32 %v3478, %v325
        %v3508 = vmul.f32 %v3480, %v325
        %v3509 = vmul.f32 %v3482, %v325
        %v3510 = vmul.f32 %v3484, %v325
        %v3511 = vmul.f32 %v3486, %v325
        %v3512 = vmul.f32 %v3488, %v325
        %v3513 = vmul.f32 %v3490, %v325
        %v3514 = vmul.f32 %v3492, %v325
        %v3515 = vmul.f32 %v3494, %v325
        %v3516 = vmul.f32 %v3496, %v325
        %v3517 = vmul.f32 %v3498, %v325
        %v3518 = vmul.f32 %v3500, %v325
        %v3519 = vmul.f32 %v3502, %v325
        %v3520 = vmul.f32 %v3504, %v325
        %v3521 = vsub.f32 %v3453, %v3505
        %v3522 = vsub.f32 %v3454, %v3506
        %v3523 = vsub.f32 %v3455, %v3507
        %v3524 = vsub.f32 %v3456, %v3508
        %v3525 = vsub.f32 %v3457, %v3509
        %v3526 = vsub.f32 %v3458, %v3510
        %v3527 = vsub.f32 %v3459, %v3511
        %v3528 = vsub.f32 %v3460, %v3512
        %v3529 = vsub.f32 %v3461, %v3513
        %v3530 = vsub.f32 %v3462, %v3514
        %v3531 = vsub.f32 %v3463, %v3515
        %v3532 = vsub.f32 %v3464, %v3516
        %v3533 = vsub.f32 %v3465, %v3517
        %v3534 = vsub.f32 %v3466, %v3518
        %v3535 = vsub.f32 %v3467, %v3519
        %v3536 = vsub.f32 %v3468, %v3520
        %v3537 = vmul.f32 %v3521, %v3521
        %v3538 = vmul.f32 %v3522, %v3522
        %v3539 = vmul.f32 %v3523, %v3523
        %v3540 = vmul.f32 %v3524, %v3524
        %v3541 = vmul.f32 %v3525, %v3525
        %v3542 = vmul.f32 %v3526, %v3526
        %v3543 = vmul.f32 %v3527, %v3527
        %v3544 = vmul.f32 %v3528, %v3528
        %v3545 = vmul.f32 %v3529, %v3529
        %v3546 = vmul.f32 %v3530, %v3530
        %v3547 = vmul.f32 %v3531, %v3531
        %v3548 = vmul.f32 %v3532, %v3532
        %v3549 = vmul.f32 %v3533, %v3533
        %v3550 = vmul.f32 %v3534, %v3534
        %v3551 = vmul.f32 %v3535, %v3535
        %v3552 = vmul.f32 %v3536, %v3536
        %3553 = vadd.xlane.f32.xlu0 %v3537
        %v3554 = vpop.xlane.xlu0 %3553
        %3555 = vadd.xlane.f32.xlu0 %v3538
        %v3556 = vpop.xlane.xlu0 %3555
        %3557 = vadd.xlane.f32.xlu0 %v3539
        %v3558 = vpop.xlane.xlu0 %3557
        %3559 = vadd.xlane.f32.xlu0 %v3540
        %v3560 = vpop.xlane.xlu0 %3559
        %3561 = vadd.xlane.f32.xlu0 %v3541
        %v3562 = vpop.xlane.xlu0 %3561
        %3563 = vadd.xlane.f32.xlu0 %v3542
        %v3564 = vpop.xlane.xlu0 %3563
        %3565 = vadd.xlane.f32.xlu0 %v3543
        %v3566 = vpop.xlane.xlu0 %3565
        %3567 = vadd.xlane.f32.xlu0 %v3544
        %v3568 = vpop.xlane.xlu0 %3567
        %3569 = vadd.xlane.f32.xlu0 %v3545
        %v3570 = vpop.xlane.xlu0 %3569
        %3571 = vadd.xlane.f32.xlu0 %v3546
        %v3572 = vpop.xlane.xlu0 %3571
        %3573 = vadd.xlane.f32.xlu0 %v3547
        %v3574 = vpop.xlane.xlu0 %3573
        %3575 = vadd.xlane.f32.xlu0 %v3548
        %v3576 = vpop.xlane.xlu0 %3575
        %3577 = vadd.xlane.f32.xlu0 %v3549
        %v3578 = vpop.xlane.xlu0 %3577
        %3579 = vadd.xlane.f32.xlu0 %v3550
        %v3580 = vpop.xlane.xlu0 %3579
        %3581 = vadd.xlane.f32.xlu0 %v3551
        %v3582 = vpop.xlane.xlu0 %3581
        %3583 = vadd.xlane.f32.xlu0 %v3552
        %v3584 = vpop.xlane.xlu0 %3583
        %v3585 = vmul.f32 %v3554, %v406
        %v3586 = vmul.f32 %v3556, %v406
        %v3587 = vmul.f32 %v3558, %v406
        %v3588 = vmul.f32 %v3560, %v406
        %v3589 = vmul.f32 %v3562, %v406
        %v3590 = vmul.f32 %v3564, %v406
        %v3591 = vmul.f32 %v3566, %v406
        %v3592 = vmul.f32 %v3568, %v406
        %v3593 = vmul.f32 %v3570, %v406
        %v3594 = vmul.f32 %v3572, %v406
        %v3595 = vmul.f32 %v3574, %v406
        %v3596 = vmul.f32 %v3576, %v406
        %v3597 = vmul.f32 %v3578, %v406
        %v3598 = vmul.f32 %v3580, %v406
        %v3599 = vmul.f32 %v3582, %v406
        %v3600 = vmul.f32 %v3584, %v406
        %v3601 = vrsqrt.pop %v3585
        %v3602 = vmul.f32 %v3585, %v3601
        %vm3603 = vcmp.eq.f32.partialorder %v3585, inf
        %v3604 = vsel %vm3603, %v3585, %v3602
        %vm3605 = vcmp.eq.f32.partialorder %v3585, 0.0
        %v3606 = vand.u32 %v3585, 2147483648
        %v3607 = vsel %vm3605, %v3606, %v3604
        %v3608 = vrsqrt.pop %v3586
        %v3609 = vmul.f32 %v3586, %v3608
        %vm3610 = vcmp.eq.f32.partialorder %v3586, inf
        %v3611 = vsel %vm3610, %v3586, %v3609
        %vm3612 = vcmp.eq.f32.partialorder %v3586, 0.0
        %v3613 = vand.u32 %v3586, 2147483648
        %v3614 = vsel %vm3612, %v3613, %v3611
        %v3615 = vrsqrt.pop %v3587
        %v3616 = vmul.f32 %v3587, %v3615
        %vm3617 = vcmp.eq.f32.partialorder %v3587, inf
        %v3618 = vsel %vm3617, %v3587, %v3616
        %vm3619 = vcmp.eq.f32.partialorder %v3587, 0.0
        %v3620 = vand.u32 %v3587, 2147483648
        %v3621 = vsel %vm3619, %v3620, %v3618
        %v3622 = vrsqrt.pop %v3588
        %v3623 = vmul.f32 %v3588, %v3622
        %vm3624 = vcmp.eq.f32.partialorder %v3588, inf
        %v3625 = vsel %vm3624, %v3588, %v3623
        %vm3626 = vcmp.eq.f32.partialorder %v3588, 0.0
        %v3627 = vand.u32 %v3588, 2147483648
        %v3628 = vsel %vm3626, %v3627, %v3625
        %v3629 = vrsqrt.pop %v3589
        %v3630 = vmul.f32 %v3589, %v3629
        %vm3631 = vcmp.eq.f32.partialorder %v3589, inf
        %v3632 = vsel %vm3631, %v3589, %v3630
        %vm3633 = vcmp.eq.f32.partialorder %v3589, 0.0
        %v3634 = vand.u32 %v3589, 2147483648
        %v3635 = vsel %vm3633, %v3634, %v3632
        %v3636 = vrsqrt.pop %v3590
        %v3637 = vmul.f32 %v3590, %v3636
        %vm3638 = vcmp.eq.f32.partialorder %v3590, inf
        %v3639 = vsel %vm3638, %v3590, %v3637
        %vm3640 = vcmp.eq.f32.partialorder %v3590, 0.0
        %v3641 = vand.u32 %v3590, 2147483648
        %v3642 = vsel %vm3640, %v3641, %v3639
        %v3643 = vrsqrt.pop %v3591
        %v3644 = vmul.f32 %v3591, %v3643
        %vm3645 = vcmp.eq.f32.partialorder %v3591, inf
        %v3646 = vsel %vm3645, %v3591, %v3644
        %vm3647 = vcmp.eq.f32.partialorder %v3591, 0.0
        %v3648 = vand.u32 %v3591, 2147483648
        %v3649 = vsel %vm3647, %v3648, %v3646
        %v3650 = vrsqrt.pop %v3592
        %v3651 = vmul.f32 %v3592, %v3650
        %vm3652 = vcmp.eq.f32.partialorder %v3592, inf
        %v3653 = vsel %vm3652, %v3592, %v3651
        %vm3654 = vcmp.eq.f32.partialorder %v3592, 0.0
        %v3655 = vand.u32 %v3592, 2147483648
        %v3656 = vsel %vm3654, %v3655, %v3653
        %v3657 = vrsqrt.pop %v3593
        %v3658 = vmul.f32 %v3593, %v3657
        %vm3659 = vcmp.eq.f32.partialorder %v3593, inf
        %v3660 = vsel %vm3659, %v3593, %v3658
        %vm3661 = vcmp.eq.f32.partialorder %v3593, 0.0
        %v3662 = vand.u32 %v3593, 2147483648
        %v3663 = vsel %vm3661, %v3662, %v3660
        %v3664 = vrsqrt.pop %v3594
        %v3665 = vmul.f32 %v3594, %v3664
        %vm3666 = vcmp.eq.f32.partialorder %v3594, inf
        %v3667 = vsel %vm3666, %v3594, %v3665
        %vm3668 = vcmp.eq.f32.partialorder %v3594, 0.0
        %v3669 = vand.u32 %v3594, 2147483648
        %v3670 = vsel %vm3668, %v3669, %v3667
        %v3671 = vrsqrt.pop %v3595
        %v3672 = vmul.f32 %v3595, %v3671
        %vm3673 = vcmp.eq.f32.partialorder %v3595, inf
        %v3674 = vsel %vm3673, %v3595, %v3672
        %vm3675 = vcmp.eq.f32.partialorder %v3595, 0.0
        %v3676 = vand.u32 %v3595, 2147483648
        %v3677 = vsel %vm3675, %v3676, %v3674
        %v3678 = vrsqrt.pop %v3596
        %v3679 = vmul.f32 %v3596, %v3678
        %vm3680 = vcmp.eq.f32.partialorder %v3596, inf
        %v3681 = vsel %vm3680, %v3596, %v3679
        %vm3682 = vcmp.eq.f32.partialorder %v3596, 0.0
        %v3683 = vand.u32 %v3596, 2147483648
        %v3684 = vsel %vm3682, %v3683, %v3681
        %v3685 = vrsqrt.pop %v3597
        %v3686 = vmul.f32 %v3597, %v3685
        %vm3687 = vcmp.eq.f32.partialorder %v3597, inf
        %v3688 = vsel %vm3687, %v3597, %v3686
        %vm3689 = vcmp.eq.f32.partialorder %v3597, 0.0
        %v3690 = vand.u32 %v3597, 2147483648
        %v3691 = vsel %vm3689, %v3690, %v3688
        %v3692 = vrsqrt.pop %v3598
        %v3693 = vmul.f32 %v3598, %v3692
        %vm3694 = vcmp.eq.f32.partialorder %v3598, inf
        %v3695 = vsel %vm3694, %v3598, %v3693
        %vm3696 = vcmp.eq.f32.partialorder %v3598, 0.0
        %v3697 = vand.u32 %v3598, 2147483648
        %v3698 = vsel %vm3696, %v3697, %v3695
        %v3699 = vrsqrt.pop %v3599
        %v3700 = vmul.f32 %v3599, %v3699
        %vm3701 = vcmp.eq.f32.partialorder %v3599, inf
        %v3702 = vsel %vm3701, %v3599, %v3700
        %vm3703 = vcmp.eq.f32.partialorder %v3599, 0.0
        %v3704 = vand.u32 %v3599, 2147483648
        %v3705 = vsel %vm3703, %v3704, %v3702
        %v3706 = vrsqrt.pop %v3600
        %v3707 = vmul.f32 %v3600, %v3706
        %vm3708 = vcmp.eq.f32.partialorder %v3600, inf
        %v3709 = vsel %vm3708, %v3600, %v3707
        %vm3710 = vcmp.eq.f32.partialorder %v3600, 0.0
        %v3711 = vand.u32 %v3600, 2147483648
        %v3712 = vsel %vm3710, %v3711, %v3709
        %v3714 = vlaneseq
        %v3715 = vshrl.u32 %v3714, 7
        %v3716 = vsub.s32 0, %v3715
        %v3717 = vrot.slane %v3470, %v3716
        %v3719 = vmul.f32 %v3717, %v3521
        %v3720 = vmul.f32 %v3717, %v3522
        %v3721 = vmul.f32 %v3717, %v3523
        %v3722 = vmul.f32 %v3717, %v3524
        %v3723 = vmul.f32 %v3717, %v3525
        %v3724 = vmul.f32 %v3717, %v3526
        %v3725 = vmul.f32 %v3717, %v3527
        %v3726 = vmul.f32 %v3717, %v3528
        %v3727 = vmul.f32 %v3717, %v3529
        %v3728 = vmul.f32 %v3717, %v3530
        %v3729 = vmul.f32 %v3717, %v3531
        %v3730 = vmul.f32 %v3717, %v3532
        %v3731 = vmul.f32 %v3717, %v3533
        %v3732 = vmul.f32 %v3717, %v3534
        %v3733 = vmul.f32 %v3717, %v3535
        %v3734 = vmul.f32 %v3717, %v3536
        %v3735 = vadd.f32 %v3607, 1e-06
        %v3736 = vadd.f32 %v3614, 1e-06
        %v3737 = vadd.f32 %v3621, 1e-06
        %v3738 = vadd.f32 %v3628, 1e-06
        %v3739 = vadd.f32 %v3635, 1e-06
        %v3740 = vadd.f32 %v3642, 1e-06
        %v3741 = vadd.f32 %v3649, 1e-06
        %v3742 = vadd.f32 %v3656, 1e-06
        %v3743 = vadd.f32 %v3663, 1e-06
        %v3744 = vadd.f32 %v3670, 1e-06
        %v3745 = vadd.f32 %v3677, 1e-06
        %v3746 = vadd.f32 %v3684, 1e-06
        %v3747 = vadd.f32 %v3691, 1e-06
        %v3748 = vadd.f32 %v3698, 1e-06
        %v3749 = vadd.f32 %v3705, 1e-06
        %v3750 = vadd.f32 %v3712, 1e-06
        %v3751 = vrcp.pop %v3735
        %v3752 = vmul.f32 %v3719, %v3751
        %v3753 = vrcp.pop %v3736
        %v3754 = vmul.f32 %v3720, %v3753
        %v3755 = vrcp.pop %v3737
        %v3756 = vmul.f32 %v3721, %v3755
        %v3757 = vrcp.pop %v3738
        %v3758 = vmul.f32 %v3722, %v3757
        %v3759 = vrcp.pop %v3739
        %v3760 = vmul.f32 %v3723, %v3759
        %v3761 = vrcp.pop %v3740
        %v3762 = vmul.f32 %v3724, %v3761
        %v3763 = vrcp.pop %v3741
        %v3764 = vmul.f32 %v3725, %v3763
        %v3765 = vrcp.pop %v3742
        %v3766 = vmul.f32 %v3726, %v3765
        %v3767 = vrcp.pop %v3743
        %v3768 = vmul.f32 %v3727, %v3767
        %v3769 = vrcp.pop %v3744
        %v3770 = vmul.f32 %v3728, %v3769
        %v3771 = vrcp.pop %v3745
        %v3772 = vmul.f32 %v3729, %v3771
        %v3773 = vrcp.pop %v3746
        %v3774 = vmul.f32 %v3730, %v3773
        %v3775 = vrcp.pop %v3747
        %v3776 = vmul.f32 %v3731, %v3775
        %v3777 = vrcp.pop %v3748
        %v3778 = vmul.f32 %v3732, %v3777
        %v3779 = vrcp.pop %v3749
        %v3780 = vmul.f32 %v3733, %v3779
        %v3781 = vrcp.pop %v3750
        %v3782 = vmul.f32 %v3734, %v3781
        %v3784 = vlaneseq
        %v3785 = vshrl.u32 %v3784, 7
        %v3786 = vsub.s32 0, %v3785
        %v3787 = vrot.slane %v3472, %v3786
        %v3789 = vadd.f32 %v3752, %v3787
        %v3790 = vadd.f32 %v3754, %v3787
        %v3791 = vadd.f32 %v3756, %v3787
        %v3792 = vadd.f32 %v3758, %v3787
        %v3793 = vadd.f32 %v3760, %v3787
        %v3794 = vadd.f32 %v3762, %v3787
        %v3795 = vadd.f32 %v3764, %v3787
        %v3796 = vadd.f32 %v3766, %v3787
        %v3797 = vadd.f32 %v3768, %v3787
        %v3798 = vadd.f32 %v3770, %v3787
        %v3799 = vadd.f32 %v3772, %v3787
        %v3800 = vadd.f32 %v3774, %v3787
        %v3801 = vadd.f32 %v3776, %v3787
        %v3802 = vadd.f32 %v3778, %v3787
        %v3803 = vadd.f32 %v3780, %v3787
        %v3804 = vadd.f32 %v3782, %v3787
        %3805 = vst [vmem:[%s271] sm:$0xff] %v3789
        %3806 = vst [vmem:[%s271 + $0x8] sm:$0xff] %v3790
        %3807 = vst [vmem:[%s271 + $0x10] sm:$0xff] %v3791
        %3808 = vst [vmem:[%s271 + $0x18] sm:$0xff] %v3792
        %3809 = vst [vmem:[%s271 + $0x20] sm:$0xff] %v3793
        %3810 = vst [vmem:[%s271 + $0x28] sm:$0xff] %v3794
        %3811 = vst [vmem:[%s271 + $0x30] sm:$0xff] %v3795
        %3812 = vst [vmem:[%s271 + $0x38] sm:$0xff] %v3796
        %3813 = vst [vmem:[%s271 + $0x40] sm:$0xff] %v3797
        %3814 = vst [vmem:[%s271 + $0x48] sm:$0xff] %v3798
        %3815 = vst [vmem:[%s271 + $0x50] sm:$0xff] %v3799
        %3816 = vst [vmem:[%s271 + $0x58] sm:$0xff] %v3800
        %3817 = vst [vmem:[%s271 + $0x60] sm:$0xff] %v3801
        %3818 = vst [vmem:[%s271 + $0x68] sm:$0xff] %v3802
        %3819 = vst [vmem:[%s271 + $0x70] sm:$0xff] %v3803
        %3820 = vst [vmem:[%s271 + $0x78] sm:$0xff] %v3804
        %s3821 = sand.u32 %s141, 1
        %s3822 = scalar_lea.sflag [#allocation4], %s3821
        %s3823 = sand.u32 %s141, 1
        %s3824 = smul.addr %s3823, 128
        %s3825 = scalar_lea.vmem [#allocation8], %s3824
        // Predicated region
        $region53: #{encoder_forward.1} parent=39 // pred_check
          %p3826 = pneg %p151
        $region54: #{encoder_forward.1} parent=39 // pred_check_branch
          %3828 = sbr.rel (%p3826) target = $region56
        $region55: #{encoder_forward.1} parent=39 // pred_region
          %s3829 = smul.u32 16, %s23
          %s3831 = ssub.s32 2048, 2048
          %3832 = vsyncadd %s3822, %s3831
          %s3833 = smul.addr %s3829, 128
          %s3834 = scalar_lea.hbm %s5, %s3833
          %s3835 = sshll.u32 %s3825, 4
          %s3836 = int_to_ptr.vmem [resolvable:$true] %s3835
          %3841 = dma.vmem_to_hbm [thread:$0]  %s3836, 2048, %s3834, %s3822, 128, 128, 8
        $region56: #{encoder_forward.1} parent=39 // pred_fallthru
          _
      $region40: #{encoder_forward.1} parent=5 // pred_fallthru
        _
      %p3842 = scmp.le.s32.totalorder 2, %s18
      // Predicated region
      $region57: #{encoder_forward.1} parent=5 // pred_check
        %p3843 = pneg %p3842
      $region58: #{encoder_forward.1} parent=5 // pred_check_branch
        %3845 = sbr.rel (%p3843) target = $region60
      $region59: #{encoder_forward.1} parent=5 // pred_region
        %s3846 = ssub.s32 %s18, 2
        // Predicated region
        $region61: #{encoder_forward.1} parent=59 // pred_check
          %p3847 = pneg %p157
        $region62: #{encoder_forward.1} parent=59 // pred_check_branch
          %3849 = sbr.rel (%p3847) target = $region64
        $region63: #{encoder_forward.1} parent=59 // pred_region
          %s3850 = sand.u32 %s142, 1
          %s3851 = scalar_lea.sflag [#allocation4], %s3850
          %s3852 = sand.u32 %s142, 1
          %s3853 = smul.addr %s3852, 128
          %s3854 = scalar_lea.vmem [#allocation8], %s3853
          %3855 = dma.done %s3851, 2048
        $region64: #{encoder_forward.1} parent=59 // pred_fallthru
          _
      $region60: #{encoder_forward.1} parent=5 // pred_fallthru
        _
    $region6: #{encoder_forward.1} parent=1 // loop_footer
      %s22 = sadd.s32 1, %s18
    $region7: #{encoder_forward.1} parent=1 // loop_footer_branch
      %17 = sbr.rel target = $region3
    $region8: #{encoder_forward.1} parent=1 // loop_exit
      _
    %3856 = vsyncpa [#allocation3], 1
    %s3857 = scalar_lea.sflag [#allocation3], 1
    %3858 = vsyncpa %s3857, 1
    %3859 = vsyncpa [#allocation6], 1
    %3860 = vsyncpa [#allocation4], 1
    %s3861 = scalar_lea.sflag [#allocation4], 1
    %3862 = vsyncpa %s3861, 1

</llo_original>
